<compile_context>
chip_gen: v5e
topology: v5e:2x2
jax: 0.10.0
libtpu: 0.0.40
codegen_flags: <defaults>
</compile_context>

<pallas_src>
import functools
import math

import jax
import jax.numpy as jnp
from jax.experimental import pallas as pl
from jax.experimental.pallas import tpu as pltpu


# ----------------------------------------------------------------------------
# In-kernel helpers
# ----------------------------------------------------------------------------
def _layer_norm(x, gamma, beta, eps):
    mu = jnp.mean(x, axis=-1, keepdims=True)
    xc = x - mu
    var = jnp.mean(xc * xc, axis=-1, keepdims=True)
    return xc * jax.lax.rsqrt(var + eps) * gamma + beta


# ----------------------------------------------------------------------------
# Fused kernel: both attention directions + residuals + LayerNorms
# ----------------------------------------------------------------------------
def _bidir_xattn_kernel(q_ref, k_ref, v_ref, w_ref, vec_ref,
                        q_out_ref, k_out_ref, *, num_heads, eps, scale):
    L, B, E = q_ref.shape            # block: (L, b_tile, E), seq-first layout
    S = k_ref.shape[0]
    H = num_heads
    dh = E // H

    vec = vec_ref[...]               # (12, E) f32: 8 biases + 4 LayerNorm rows

    def mha_one(xq, xk, xv, w_off, b_off):
        """Multi-head attention for one batch element; xq:(lq,E) xk/xv:(lk,E)."""
        wq, wk, wv, wo = (w_ref[w_off + i] for i in range(4))          # bf16 (E,E)
        bq, bk, bv, bo = (vec[b_off + i:b_off + i + 1] for i in range(4))

        # In-projections: bf16 x bf16 -> f32 accumulate (single MXU pass).
        q = jnp.dot(xq.astype(jnp.bfloat16), wq,
                    preferred_element_type=jnp.float32) + bq           # (lq, E)
        k = jnp.dot(xk.astype(jnp.bfloat16), wk,
                    preferred_element_type=jnp.float32) + bk           # (lk, E)
        v = jnp.dot(xv.astype(jnp.bfloat16), wv,
                    preferred_element_type=jnp.float32) + bv           # (lk, E)
        q = q * scale                                                  # PyTorch scales q (incl. bias)

        # Head-batched operands (H, seq, dh): stack along a new leading axis,
        # no lane-axis concatenate anywhere.
        qh = jnp.stack([q[:, h * dh:(h + 1) * dh] for h in range(H)], axis=0)
        kh = jnp.stack([k[:, h * dh:(h + 1) * dh] for h in range(H)], axis=0)
        vh = jnp.stack([v[:, h * dh:(h + 1) * dh] for h in range(H)], axis=0)

        # TODO(synk): for long sequences, tile the key axis with an online
        # (flash-style) softmax instead of materializing the (H, lq, lk) tile.
        s = jnp.einsum('hld,hsd->hls', qh.astype(jnp.bfloat16),
                       kh.astype(jnp.bfloat16),
                       preferred_element_type=jnp.float32)             # (H, lq, lk)
        s = s - jnp.max(s, axis=-1, keepdims=True)
        p = jnp.exp(s)
        denom = jnp.sum(p, axis=-1, keepdims=True)                     # (H, lq, 1)
        # NOTE: attention-weight dropout (MultiheadAttention) is identity in eval.
        o = jnp.einsum('hls,hsd->hld', p.astype(jnp.bfloat16),
                       vh.astype(jnp.bfloat16),
                       preferred_element_type=jnp.float32)             # (H, lq, dh)
        # Normalize after PV: lq*dh multiplies + EUP reciprocal instead of
        # dividing the full lq*lk probability tile.
        o = o * pl.reciprocal(denom, approx=True)

        # Out-projection: accumulate per-head partial matmuls (no concat).
        out = bo                                                       # (1, E) -> broadcasts
        for h in range(H):
            out = out + jnp.dot(o[h].astype(jnp.bfloat16),
                                wo[h * dh:(h + 1) * dh, :],
                                preferred_element_type=jnp.float32)
        return out                                                     # (lq, E) f32

    # Static unroll over the batch columns of this block.
    for b in range(B):
        xq = q_ref[:, b, :].astype(jnp.float32)                        # (L, E)
        xk = k_ref[:, b, :].astype(jnp.float32)                        # (S, E)
        xv = v_ref[:, b, :]                                            # (S, E)

        # Direction 1: Q <- query, K <- key, V <- value.  dropout = identity.
        attn1 = mha_one(xq, xk, xv, 0, 0)
        q_new = _layer_norm(xq + attn1, vec[8:9], vec[9:10], eps)

        # Direction 2: Q <- key, K/V <- updated query.
        attn2 = mha_one(xk, q_new, q_new, 4, 4)
        k_new = _layer_norm(xk + attn2, vec[10:11], vec[11:12], eps)

        q_out_ref[:, b, :] = q_new.astype(q_out_ref.dtype)
        k_out_ref[:, b, :] = k_new.astype(k_out_ref.dtype)


# ----------------------------------------------------------------------------
# Wrapper: one pallas_call, grid over batch tiles, seq-first layout throughout
# ----------------------------------------------------------------------------
@functools.partial(jax.jit, static_argnames=("num_heads", "eps"))
def bidirectional_cross_attention_forward(query, key, value, w_stack, vec_stack,
                                          *, num_heads, eps=1e-5):
    """query: [L, N, E]; key/value: [S, N, E] (PyTorch seq-first layout).

    w_stack:   [8, E, E] bf16 = (Wq1, Wk1, Wv1, Wo1, Wq2, Wk2, Wv2, Wo2),
               stored for x @ W (transpose of PyTorch's [out, in] layout).
    vec_stack: [12, E] f32 = (bq1, bk1, bv1, bo1, bq2, bk2, bv2, bo2,
               ln1_gamma, ln1_beta, ln2_gamma, ln2_beta).
    """
    L, N, E = query.shape
    S = key.shape[0]
    assert E % num_heads == 0
    scale = 1.0 / math.sqrt(E // num_heads)

    # Several batch elements per grid step (amortizes per-step overhead, fills
    # sublanes when E < 128) while keeping the (8,128) block rule satisfied.
    b_tile = 8 if N % 8 == 0 else N
    grid = (N // b_tile,)

    kernel = functools.partial(_bidir_xattn_kernel, num_heads=num_heads,
                               eps=eps, scale=scale)

    q_out, k_out = pl.pallas_call(
        kernel,
        out_shape=(jax.ShapeDtypeStruct((L, N, E), query.dtype),
                   jax.ShapeDtypeStruct((S, N, E), key.dtype)),
        grid_spec=pltpu.PrefetchScalarGridSpec(
            num_scalar_prefetch=0,
            grid=grid,
            in_specs=[
                pl.BlockSpec((L, b_tile, E), lambda i: (0, i, 0)),   # query
                pl.BlockSpec((S, b_tile, E), lambda i: (0, i, 0)),   # key
                pl.BlockSpec((S, b_tile, E), lambda i: (0, i, 0)),   # value
                pl.BlockSpec((8, E, E), lambda i: (0, 0, 0)),        # weight stack (grid-invariant)
                pl.BlockSpec((12, E), lambda i: (0, 0)),             # bias / LN stack
            ],
            out_specs=(pl.BlockSpec((L, b_tile, E), lambda i: (0, i, 0)),
                       pl.BlockSpec((S, b_tile, E), lambda i: (0, i, 0))),
        ),
        compiler_params=pltpu.CompilerParams(
            dimension_semantics=("parallel",),
            vmem_limit_bytes=64 * 1024 * 1024),
    )(query, key, value, w_stack, vec_stack)
    return q_out, k_out


class BidirectionalCrossAttentionBlockPallas:
    """JAX/Pallas port of BidirectionalCrossAttentionBlock.forward (eval mode)."""

    def __init__(self, embed_dim, num_heads, dropout=0.1, eps=1e-5, *, key):
        assert embed_dim % num_heads == 0
        self.embed_dim = embed_dim
        self.num_heads = num_heads
        self.dropout = dropout    # identity in eval mode
        self.eps = eps

        k_w, k_b = jax.random.split(key, 2)
        s = 1.0 / math.sqrt(embed_dim)
        # NOTE: stored as x @ W ([in, out]); PyTorch in_proj_weight /
        # out_proj.weight are [out, in] and must be transposed when porting.
        w = jax.random.uniform(k_w, (8, embed_dim, embed_dim), jnp.float32, -s, s)
        self.w_stack = w.astype(jnp.bfloat16)               # bf16 weights
        b = jax.random.uniform(k_b, (8, embed_dim), jnp.float32, -s, s)
        ln = jnp.concatenate(
            [jnp.ones((1, embed_dim), jnp.float32),
             jnp.zeros((1, embed_dim), jnp.float32),
             jnp.ones((1, embed_dim), jnp.float32),
             jnp.zeros((1, embed_dim), jnp.float32)], axis=0)
        self.vec_stack = jnp.concatenate([b, ln], axis=0)    # (12, E) f32

    def __call__(self, query, key, value, attn_mask=None, key_padding_mask=None):
        # TODO(synk): attn_mask / key_padding_mask and training-mode dropout
        # (nn.Dropout + MHA attention-weight dropout) are not implemented;
        # this matches eval-mode forward with masks=None.
        assert attn_mask is None and key_padding_mask is None
        return bidirectional_cross_attention_forward(
            query, key, value, self.w_stack, self.vec_stack,
            num_heads=self.num_heads, eps=self.eps)


# ----------------------------------------------------------------------------
# Pure-JAX reference (f32, HIGHEST precision) for correctness checking
# ----------------------------------------------------------------------------
def _ref_forward(query, key, value, w_stack, vec_stack, num_heads, eps):
    hp = jax.lax.Precision.HIGHEST
    w = w_stack.astype(jnp.float32)
    vec = vec_stack.astype(jnp.float32)
    E = query.shape[-1]
    dh = E // num_heads
    scale = 1.0 / math.sqrt(dh)

    def mha(xq, xk, xv, w_off, b_off):
        q = (jnp.einsum('lne,ef->lnf', xq, w[w_off + 0], precision=hp)
             + vec[b_off + 0]) * scale
        k = jnp.einsum('sne,ef->snf', xk, w[w_off + 1], precision=hp) + vec[b_off + 1]
        v = jnp.einsum('sne,ef->snf', xv, w[w_off + 2], precision=hp) + vec[b_off + 2]
        Lq, Nn = q.shape[:2]
        Sk = k.shape[0]
        qh = q.reshape(Lq, Nn, num_heads, dh)
        kh = k.reshape(Sk, Nn, num_heads, dh)
        vh = v.reshape(Sk, Nn, num_heads, dh)
        s = jnp.einsum('lnhd,snhd->nhls', qh, kh, precision=hp)
        p = jax.nn.softmax(s, axis=-1)
        o = jnp.einsum('nhls,snhd->lnhd', p, vh, precision=hp).reshape(Lq, Nn, E)
        return jnp.einsum('lne,ef->lnf', o, w[w_off + 3], precision=hp) + vec[b_off + 3]

    def ln(x, g, b):
        mu = jnp.mean(x, -1, keepdims=True)
        xc = x - mu
        var = jnp.mean(xc * xc, -1, keepdims=True)
        return xc / jnp.sqrt(var + eps) * g + b

    xq = query.astype(jnp.float32)
    xk = key.astype(jnp.float32)
    xv = value.astype(jnp.float32)
    a1 = mha(xq, xk, xv, 0, 0)
    q_new = ln(xq + a1, vec[8], vec[9])
    a2 = mha(xk, q_new, q_new, 4, 4)
    k_new = ln(xk + a2, vec[10], vec[11])
    return q_new, k_new


# ----------------------------------------------------------------------------
# Demo / correctness check
# ----------------------------------------------------------------------------
if __name__ == "__main__":
    root = jax.random.PRNGKey(0)
    k_param, k_q, k_k, k_v = jax.random.split(root, 4)

    embed_dim, num_heads = 32, 4
    L, S, N = 8, 16, 2   # query length, key/value length, batch

    block = BidirectionalCrossAttentionBlockPallas(
        embed_dim, num_heads, dropout=0.1, key=k_param)

    # PyTorch nn.MultiheadAttention default layout: (seq, batch, embed)
    query = jax.random.normal(k_q, (L, N, embed_dim), jnp.float32)
    key_in = jax.random.normal(k_k, (S, N, embed_dim), jnp.float32)
    value = jax.random.normal(k_v, (S, N, embed_dim), jnp.float32)

    q_out, k_out = block(query, key_in, value)
    q_out = jax.block_until_ready(q_out)
    k_out = jax.block_until_ready(k_out)

    q_ref, k_ref = _ref_forward(query, key_in, value, block.w_stack,
                                block.vec_stack, num_heads, block.eps)

    assert q_out.shape == (L, N, embed_dim)
    assert k_out.shape == (S, N, embed_dim)
    # Kernel uses single-pass bf16 MXU matmuls (f32 accumulate) + approx
    # reciprocal; reference is full-f32 HIGHEST, so allow bf16-level error.
    err_q = float(jnp.max(jnp.abs(q_out - q_ref)))
    err_k = float(jnp.max(jnp.abs(k_out - k_ref)))
    assert err_q < 3e-2, f"query mismatch: max abs err {err_q}"
    assert err_k < 3e-2, f"key mismatch: max abs err {err_k}"

    print("KERNEL_OK")
</pallas_src>

<mosaic_0001>
module attributes {stable_mosaic.version = 11 : i64} {
  func.func @_bidir_xattn_kernel(%arg0: i32, %arg1: memref<8x2x32xf32, #tpu.memory_space<vmem>>, %arg2: memref<16x2x32xf32, #tpu.memory_space<vmem>>, %arg3: memref<16x2x32xf32, #tpu.memory_space<vmem>>, %arg4: memref<8x32x32xbf16, #tpu.memory_space<vmem>>, %arg5: memref<12x32xf32, #tpu.memory_space<vmem>>, %arg6: memref<8x2x32xf32, #tpu.memory_space<vmem>>, %arg7: memref<16x2x32xf32, #tpu.memory_space<vmem>>) attributes {dimension_semantics = [#tpu.dimension_semantics<parallel>], iteration_bounds = array<i64: 1>, scalar_prefetch = 0 : i64, scratch_operands = 0 : i64, tpu.core_type = #tpu.core_type<tc>, window_params = [{transform_indices = @transform_0, window_bounds = array<i64: 8, 2, 32>}, {transform_indices = @transform_1, window_bounds = array<i64: 16, 2, 32>}, {transform_indices = @transform_2, window_bounds = array<i64: 16, 2, 32>}, {pipeline_mode = #tpu.pipeline_mode<synchronous>, transform_indices = @transform_3, window_bounds = array<i64: 8, 32, 32>}, {pipeline_mode = #tpu.pipeline_mode<synchronous>, transform_indices = @transform_4, window_bounds = array<i64: 12, 32>}, {transform_indices = @transform_5, window_bounds = array<i64: 8, 2, 32>}, {transform_indices = @transform_6, window_bounds = array<i64: 16, 2, 32>}]} {
    %c0 = arith.constant 0 : index
    %c0_0 = arith.constant 0 : index
    %0 = vector.load %arg5[%c0, %c0_0] : memref<12x32xf32, #tpu.memory_space<vmem>>, vector<12x32xf32>
    %c0_1 = arith.constant 0 : index
    %c0_2 = arith.constant 0 : index
    %c0_3 = arith.constant 0 : index
    %1 = vector.load %arg1[%c0_1, %c0_2, %c0_3] : memref<8x2x32xf32, #tpu.memory_space<vmem>>, vector<8x1x32xf32>
    %2 = vector.shape_cast %1 : vector<8x1x32xf32> to vector<8x32xf32>
    %c0_4 = arith.constant 0 : index
    %c0_5 = arith.constant 0 : index
    %c0_6 = arith.constant 0 : index
    %3 = vector.load %arg2[%c0_4, %c0_5, %c0_6] : memref<16x2x32xf32, #tpu.memory_space<vmem>>, vector<16x1x32xf32>
    %4 = vector.shape_cast %3 : vector<16x1x32xf32> to vector<16x32xf32>
    %c0_7 = arith.constant 0 : index
    %c0_8 = arith.constant 0 : index
    %c0_9 = arith.constant 0 : index
    %5 = vector.load %arg3[%c0_7, %c0_8, %c0_9] : memref<16x2x32xf32, #tpu.memory_space<vmem>>, vector<16x1x32xf32>
    %6 = vector.shape_cast %5 : vector<16x1x32xf32> to vector<16x32xf32>
    %c0_10 = arith.constant 0 : index
    %c0_11 = arith.constant 0 : index
    %c0_12 = arith.constant 0 : index
    %7 = vector.load %arg4[%c0_10, %c0_11, %c0_12] : memref<8x32x32xbf16, #tpu.memory_space<vmem>>, vector<1x32x32xbf16>
    %8 = vector.shape_cast %7 : vector<1x32x32xbf16> to vector<32x32xbf16>
    %c1 = arith.constant 1 : index
    %c0_13 = arith.constant 0 : index
    %c0_14 = arith.constant 0 : index
    %9 = vector.load %arg4[%c1, %c0_13, %c0_14] : memref<8x32x32xbf16, #tpu.memory_space<vmem>>, vector<1x32x32xbf16>
    %10 = vector.shape_cast %9 : vector<1x32x32xbf16> to vector<32x32xbf16>
    %c2 = arith.constant 2 : index
    %c0_15 = arith.constant 0 : index
    %c0_16 = arith.constant 0 : index
    %11 = vector.load %arg4[%c2, %c0_15, %c0_16] : memref<8x32x32xbf16, #tpu.memory_space<vmem>>, vector<1x32x32xbf16>
    %12 = vector.shape_cast %11 : vector<1x32x32xbf16> to vector<32x32xbf16>
    %c3 = arith.constant 3 : index
    %c0_17 = arith.constant 0 : index
    %c0_18 = arith.constant 0 : index
    %13 = vector.load %arg4[%c3, %c0_17, %c0_18] : memref<8x32x32xbf16, #tpu.memory_space<vmem>>, vector<1x32x32xbf16>
    %14 = vector.shape_cast %13 : vector<1x32x32xbf16> to vector<32x32xbf16>
    %15 = vector.extract_strided_slice %0 {offsets = [0, 0], sizes = [1, 32], strides = [1, 1]} : vector<12x32xf32> to vector<1x32xf32>
    %16 = vector.extract_strided_slice %0 {offsets = [1, 0], sizes = [1, 32], strides = [1, 1]} : vector<12x32xf32> to vector<1x32xf32>
    %17 = vector.extract_strided_slice %0 {offsets = [2, 0], sizes = [1, 32], strides = [1, 1]} : vector<12x32xf32> to vector<1x32xf32>
    %18 = vector.extract_strided_slice %0 {offsets = [3, 0], sizes = [1, 32], strides = [1, 1]} : vector<12x32xf32> to vector<1x32xf32>
    %19 = arith.truncf %2 : vector<8x32xf32> to vector<8x32xbf16>
    %cst = arith.constant dense<0.000000e+00> : vector<8x32xf32>
    %20 = tpu.matmul %19, %8, %cst {dimension_numbers = #tpu.dot_dimension_numbers<[1], [0], [0], [1], [0, 0, 1, 1], [], []>} : vector<8x32xbf16>, vector<32x32xbf16>, vector<8x32xf32> -> vector<8x32xf32>
    %21 = vector.broadcast %15 : vector<1x32xf32> to vector<8x32xf32>
    %22 = arith.addf %20, %21 : vector<8x32xf32>
    %23 = arith.truncf %4 : vector<16x32xf32> to vector<16x32xbf16>
    %cst_19 = arith.constant dense<0.000000e+00> : vector<16x32xf32>
    %24 = tpu.matmul %23, %10, %cst_19 {dimension_numbers = #tpu.dot_dimension_numbers<[1], [0], [0], [1], [0, 0, 1, 1], [], []>} : vector<16x32xbf16>, vector<32x32xbf16>, vector<16x32xf32> -> vector<16x32xf32>
    %25 = vector.broadcast %16 : vector<1x32xf32> to vector<16x32xf32>
    %26 = arith.addf %24, %25 : vector<16x32xf32>
    %27 = arith.truncf %6 : vector<16x32xf32> to vector<16x32xbf16>
    %cst_20 = arith.constant dense<0.000000e+00> : vector<16x32xf32>
    %28 = tpu.matmul %27, %12, %cst_20 {dimension_numbers = #tpu.dot_dimension_numbers<[1], [0], [0], [1], [0, 0, 1, 1], [], []>} : vector<16x32xbf16>, vector<32x32xbf16>, vector<16x32xf32> -> vector<16x32xf32>
    %29 = vector.broadcast %17 : vector<1x32xf32> to vector<16x32xf32>
    %30 = arith.addf %28, %29 : vector<16x32xf32>
    %cst_21 = arith.constant 0.353553385 : f32
    %31 = vector.broadcast %cst_21 : f32 to vector<8x32xf32>
    %32 = arith.mulf %22, %31 : vector<8x32xf32>
    %33 = vector.extract_strided_slice %32 {offsets = [0, 0], sizes = [8, 8], strides = [1, 1]} : vector<8x32xf32> to vector<8x8xf32>
    %34 = vector.extract_strided_slice %32 {offsets = [0, 8], sizes = [8, 8], strides = [1, 1]} : vector<8x32xf32> to vector<8x8xf32>
    %35 = vector.extract_strided_slice %32 {offsets = [0, 16], sizes = [8, 8], strides = [1, 1]} : vector<8x32xf32> to vector<8x8xf32>
    %36 = vector.extract_strided_slice %32 {offsets = [0, 24], sizes = [8, 8], strides = [1, 1]} : vector<8x32xf32> to vector<8x8xf32>
    %37 = vector.shape_cast %33 : vector<8x8xf32> to vector<1x8x8xf32>
    %38 = vector.shape_cast %34 : vector<8x8xf32> to vector<1x8x8xf32>
    %39 = vector.shape_cast %35 : vector<8x8xf32> to vector<1x8x8xf32>
    %40 = vector.shape_cast %36 : vector<8x8xf32> to vector<1x8x8xf32>
    %41 = tpu.concatenate %37, %38, %39, %40 in 0 : vector<1x8x8xf32>, vector<1x8x8xf32>, vector<1x8x8xf32>, vector<1x8x8xf32> -> vector<4x8x8xf32>
    %42 = vector.extract_strided_slice %26 {offsets = [0, 0], sizes = [16, 8], strides = [1, 1]} : vector<16x32xf32> to vector<16x8xf32>
    %43 = vector.extract_strided_slice %26 {offsets = [0, 8], sizes = [16, 8], strides = [1, 1]} : vector<16x32xf32> to vector<16x8xf32>
    %44 = vector.extract_strided_slice %26 {offsets = [0, 16], sizes = [16, 8], strides = [1, 1]} : vector<16x32xf32> to vector<16x8xf32>
    %45 = vector.extract_strided_slice %26 {offsets = [0, 24], sizes = [16, 8], strides = [1, 1]} : vector<16x32xf32> to vector<16x8xf32>
    %46 = vector.shape_cast %42 : vector<16x8xf32> to vector<1x16x8xf32>
    %47 = vector.shape_cast %43 : vector<16x8xf32> to vector<1x16x8xf32>
    %48 = vector.shape_cast %44 : vector<16x8xf32> to vector<1x16x8xf32>
    %49 = vector.shape_cast %45 : vector<16x8xf32> to vector<1x16x8xf32>
    %50 = tpu.concatenate %46, %47, %48, %49 in 0 : vector<1x16x8xf32>, vector<1x16x8xf32>, vector<1x16x8xf32>, vector<1x16x8xf32> -> vector<4x16x8xf32>
    %51 = vector.extract_strided_slice %30 {offsets = [0, 0], sizes = [16, 8], strides = [1, 1]} : vector<16x32xf32> to vector<16x8xf32>
    %52 = vector.extract_strided_slice %30 {offsets = [0, 8], sizes = [16, 8], strides = [1, 1]} : vector<16x32xf32> to vector<16x8xf32>
    %53 = vector.extract_strided_slice %30 {offsets = [0, 16], sizes = [16, 8], strides = [1, 1]} : vector<16x32xf32> to vector<16x8xf32>
    %54 = vector.extract_strided_slice %30 {offsets = [0, 24], sizes = [16, 8], strides = [1, 1]} : vector<16x32xf32> to vector<16x8xf32>
    %55 = vector.shape_cast %51 : vector<16x8xf32> to vector<1x16x8xf32>
    %56 = vector.shape_cast %52 : vector<16x8xf32> to vector<1x16x8xf32>
    %57 = vector.shape_cast %53 : vector<16x8xf32> to vector<1x16x8xf32>
    %58 = vector.shape_cast %54 : vector<16x8xf32> to vector<1x16x8xf32>
    %59 = tpu.concatenate %55, %56, %57, %58 in 0 : vector<1x16x8xf32>, vector<1x16x8xf32>, vector<1x16x8xf32>, vector<1x16x8xf32> -> vector<4x16x8xf32>
    %60 = arith.truncf %41 : vector<4x8x8xf32> to vector<4x8x8xbf16>
    %61 = arith.truncf %50 : vector<4x16x8xf32> to vector<4x16x8xbf16>
    "tpu.trace_start"() <{level = 10 : i32, message = "hld,hsd->hls"}> : () -> ()
    %cst_22 = arith.constant dense<0.000000e+00> : vector<4x8x16xf32>
    %62 = tpu.matmul %60, %61, %cst_22 {dimension_numbers = #tpu.dot_dimension_numbers<[2], [2], [1], [1], [0, 0, 0, 1, 1, 1], [0], [0]>} : vector<4x8x8xbf16>, vector<4x16x8xbf16>, vector<4x8x16xf32> -> vector<4x8x16xf32>
    "tpu.trace_stop"() : () -> ()
    %cst_23 = arith.constant dense<0xFF800000> : vector<4x8xf32>
    %63 = vector.multi_reduction <maximumf>, %62, %cst_23 [2] : vector<4x8x16xf32> to vector<4x8xf32>
    %64 = vector.shape_cast %63 : vector<4x8xf32> to vector<4x8x1xf32>
    %65 = vector.broadcast %64 : vector<4x8x1xf32> to vector<4x8x16xf32>
    %66 = arith.subf %62, %65 : vector<4x8x16xf32>
    %67 = math.exp %66 : vector<4x8x16xf32>
    %cst_24 = arith.constant dense<0.000000e+00> : vector<4x8xf32>
    %68 = vector.multi_reduction <add>, %67, %cst_24 [2] : vector<4x8x16xf32> to vector<4x8xf32>
    %69 = vector.shape_cast %68 : vector<4x8xf32> to vector<4x8x1xf32>
    %70 = arith.truncf %67 : vector<4x8x16xf32> to vector<4x8x16xbf16>
    %71 = arith.truncf %59 : vector<4x16x8xf32> to vector<4x16x8xbf16>
    "tpu.trace_start"() <{level = 10 : i32, message = "hls,hsd->hld"}> : () -> ()
    %cst_25 = arith.constant dense<0.000000e+00> : vector<4x8x8xf32>
    %72 = tpu.matmul %70, %71, %cst_25 {dimension_numbers = #tpu.dot_dimension_numbers<[2], [1], [1], [2], [0, 0, 0, 1, 1, 2], [0], [0]>} : vector<4x8x16xbf16>, vector<4x16x8xbf16>, vector<4x8x8xf32> -> vector<4x8x8xf32>
    "tpu.trace_stop"() : () -> ()
    %73 = tpu.reciprocal %69 {approx = true} : vector<4x8x1xf32> -> vector<4x8x1xf32>
    %74 = vector.broadcast %73 : vector<4x8x1xf32> to vector<4x8x8xf32>
    %75 = arith.mulf %72, %74 : vector<4x8x8xf32>
    %76 = vector.extract_strided_slice %75 {offsets = [0, 0, 0], sizes = [1, 8, 8], strides = [1, 1, 1]} : vector<4x8x8xf32> to vector<1x8x8xf32>
    %77 = vector.shape_cast %76 : vector<1x8x8xf32> to vector<8x8xf32>
    %78 = arith.truncf %77 : vector<8x8xf32> to vector<8x8xbf16>
    %79 = vector.extract_strided_slice %14 {offsets = [0, 0], sizes = [8, 32], strides = [1, 1]} : vector<32x32xbf16> to vector<8x32xbf16>
    %cst_26 = arith.constant dense<0.000000e+00> : vector<8x32xf32>
    %80 = tpu.matmul %78, %79, %cst_26 {dimension_numbers = #tpu.dot_dimension_numbers<[1], [0], [0], [1], [0, 0, 1, 1], [], []>} : vector<8x8xbf16>, vector<8x32xbf16>, vector<8x32xf32> -> vector<8x32xf32>
    %81 = vector.broadcast %18 : vector<1x32xf32> to vector<8x32xf32>
    %82 = arith.addf %81, %80 : vector<8x32xf32>
    %83 = vector.extract_strided_slice %75 {offsets = [1, 0, 0], sizes = [1, 8, 8], strides = [1, 1, 1]} : vector<4x8x8xf32> to vector<1x8x8xf32>
    %84 = vector.shape_cast %83 : vector<1x8x8xf32> to vector<8x8xf32>
    %85 = arith.truncf %84 : vector<8x8xf32> to vector<8x8xbf16>
    %86 = vector.extract_strided_slice %14 {offsets = [8, 0], sizes = [8, 32], strides = [1, 1]} : vector<32x32xbf16> to vector<8x32xbf16>
    %cst_27 = arith.constant dense<0.000000e+00> : vector<8x32xf32>
    %87 = tpu.matmul %85, %86, %cst_27 {dimension_numbers = #tpu.dot_dimension_numbers<[1], [0], [0], [1], [0, 0, 1, 1], [], []>} : vector<8x8xbf16>, vector<8x32xbf16>, vector<8x32xf32> -> vector<8x32xf32>
    %88 = arith.addf %82, %87 : vector<8x32xf32>
    %89 = vector.extract_strided_slice %75 {offsets = [2, 0, 0], sizes = [1, 8, 8], strides = [1, 1, 1]} : vector<4x8x8xf32> to vector<1x8x8xf32>
    %90 = vector.shape_cast %89 : vector<1x8x8xf32> to vector<8x8xf32>
    %91 = arith.truncf %90 : vector<8x8xf32> to vector<8x8xbf16>
    %92 = vector.extract_strided_slice %14 {offsets = [16, 0], sizes = [8, 32], strides = [1, 1]} : vector<32x32xbf16> to vector<8x32xbf16>
    %cst_28 = arith.constant dense<0.000000e+00> : vector<8x32xf32>
    %93 = tpu.matmul %91, %92, %cst_28 {dimension_numbers = #tpu.dot_dimension_numbers<[1], [0], [0], [1], [0, 0, 1, 1], [], []>} : vector<8x8xbf16>, vector<8x32xbf16>, vector<8x32xf32> -> vector<8x32xf32>
    %94 = arith.addf %88, %93 : vector<8x32xf32>
    %95 = vector.extract_strided_slice %75 {offsets = [3, 0, 0], sizes = [1, 8, 8], strides = [1, 1, 1]} : vector<4x8x8xf32> to vector<1x8x8xf32>
    %96 = vector.shape_cast %95 : vector<1x8x8xf32> to vector<8x8xf32>
    %97 = arith.truncf %96 : vector<8x8xf32> to vector<8x8xbf16>
    %98 = vector.extract_strided_slice %14 {offsets = [24, 0], sizes = [8, 32], strides = [1, 1]} : vector<32x32xbf16> to vector<8x32xbf16>
    %cst_29 = arith.constant dense<0.000000e+00> : vector<8x32xf32>
    %99 = tpu.matmul %97, %98, %cst_29 {dimension_numbers = #tpu.dot_dimension_numbers<[1], [0], [0], [1], [0, 0, 1, 1], [], []>} : vector<8x8xbf16>, vector<8x32xbf16>, vector<8x32xf32> -> vector<8x32xf32>
    %100 = arith.addf %94, %99 : vector<8x32xf32>
    %101 = arith.addf %2, %100 : vector<8x32xf32>
    %102 = vector.extract_strided_slice %0 {offsets = [8, 0], sizes = [1, 32], strides = [1, 1]} : vector<12x32xf32> to vector<1x32xf32>
    %103 = vector.extract_strided_slice %0 {offsets = [9, 0], sizes = [1, 32], strides = [1, 1]} : vector<12x32xf32> to vector<1x32xf32>
    %cst_30 = arith.constant dense<0.000000e+00> : vector<8xf32>
    %104 = vector.multi_reduction <add>, %101, %cst_30 [1] : vector<8x32xf32> to vector<8xf32>
    %105 = vector.shape_cast %104 : vector<8xf32> to vector<8x1xf32>
    %cst_31 = arith.constant 3.200000e+01 : f32
    %106 = vector.broadcast %cst_31 : f32 to vector<8x1xf32>
    %107 = arith.divf %105, %106 : vector<8x1xf32>
    %108 = vector.broadcast %107 : vector<8x1xf32> to vector<8x32xf32>
    %109 = arith.subf %101, %108 : vector<8x32xf32>
    %110 = arith.mulf %109, %109 : vector<8x32xf32>
    %cst_32 = arith.constant dense<0.000000e+00> : vector<8xf32>
    %111 = vector.multi_reduction <add>, %110, %cst_32 [1] : vector<8x32xf32> to vector<8xf32>
    %112 = vector.shape_cast %111 : vector<8xf32> to vector<8x1xf32>
    %cst_33 = arith.constant 3.200000e+01 : f32
    %113 = vector.broadcast %cst_33 : f32 to vector<8x1xf32>
    %114 = arith.divf %112, %113 : vector<8x1xf32>
    %cst_34 = arith.constant 9.99999974E-6 : f32
    %115 = vector.broadcast %cst_34 : f32 to vector<8x1xf32>
    %116 = arith.addf %114, %115 : vector<8x1xf32>
    %117 = math.rsqrt %116 : vector<8x1xf32>
    %118 = vector.broadcast %117 : vector<8x1xf32> to vector<8x32xf32>
    %119 = arith.mulf %109, %118 : vector<8x32xf32>
    %120 = vector.broadcast %102 : vector<1x32xf32> to vector<8x32xf32>
    %121 = arith.mulf %119, %120 : vector<8x32xf32>
    %122 = vector.broadcast %103 : vector<1x32xf32> to vector<8x32xf32>
    %123 = arith.addf %121, %122 : vector<8x32xf32>
    %c4 = arith.constant 4 : index
    %c0_35 = arith.constant 0 : index
    %c0_36 = arith.constant 0 : index
    %124 = vector.load %arg4[%c4, %c0_35, %c0_36] : memref<8x32x32xbf16, #tpu.memory_space<vmem>>, vector<1x32x32xbf16>
    %125 = vector.shape_cast %124 : vector<1x32x32xbf16> to vector<32x32xbf16>
    %c5 = arith.constant 5 : index
    %c0_37 = arith.constant 0 : index
    %c0_38 = arith.constant 0 : index
    %126 = vector.load %arg4[%c5, %c0_37, %c0_38] : memref<8x32x32xbf16, #tpu.memory_space<vmem>>, vector<1x32x32xbf16>
    %127 = vector.shape_cast %126 : vector<1x32x32xbf16> to vector<32x32xbf16>
    %c6 = arith.constant 6 : index
    %c0_39 = arith.constant 0 : index
    %c0_40 = arith.constant 0 : index
    %128 = vector.load %arg4[%c6, %c0_39, %c0_40] : memref<8x32x32xbf16, #tpu.memory_space<vmem>>, vector<1x32x32xbf16>
    %129 = vector.shape_cast %128 : vector<1x32x32xbf16> to vector<32x32xbf16>
    %c7 = arith.constant 7 : index
    %c0_41 = arith.constant 0 : index
    %c0_42 = arith.constant 0 : index
    %130 = vector.load %arg4[%c7, %c0_41, %c0_42] : memref<8x32x32xbf16, #tpu.memory_space<vmem>>, vector<1x32x32xbf16>
    %131 = vector.shape_cast %130 : vector<1x32x32xbf16> to vector<32x32xbf16>
    %132 = vector.extract_strided_slice %0 {offsets = [4, 0], sizes = [1, 32], strides = [1, 1]} : vector<12x32xf32> to vector<1x32xf32>
    %133 = vector.extract_strided_slice %0 {offsets = [5, 0], sizes = [1, 32], strides = [1, 1]} : vector<12x32xf32> to vector<1x32xf32>
    %134 = vector.extract_strided_slice %0 {offsets = [6, 0], sizes = [1, 32], strides = [1, 1]} : vector<12x32xf32> to vector<1x32xf32>
    %135 = vector.extract_strided_slice %0 {offsets = [7, 0], sizes = [1, 32], strides = [1, 1]} : vector<12x32xf32> to vector<1x32xf32>
    %136 = arith.truncf %4 : vector<16x32xf32> to vector<16x32xbf16>
    %cst_43 = arith.constant dense<0.000000e+00> : vector<16x32xf32>
    %137 = tpu.matmul %136, %125, %cst_43 {dimension_numbers = #tpu.dot_dimension_numbers<[1], [0], [0], [1], [0, 0, 1, 1], [], []>} : vector<16x32xbf16>, vector<32x32xbf16>, vector<16x32xf32> -> vector<16x32xf32>
    %138 = vector.broadcast %132 : vector<1x32xf32> to vector<16x32xf32>
    %139 = arith.addf %137, %138 : vector<16x32xf32>
    %140 = arith.truncf %123 : vector<8x32xf32> to vector<8x32xbf16>
    %cst_44 = arith.constant dense<0.000000e+00> : vector<8x32xf32>
    %141 = tpu.matmul %140, %127, %cst_44 {dimension_numbers = #tpu.dot_dimension_numbers<[1], [0], [0], [1], [0, 0, 1, 1], [], []>} : vector<8x32xbf16>, vector<32x32xbf16>, vector<8x32xf32> -> vector<8x32xf32>
    %142 = vector.broadcast %133 : vector<1x32xf32> to vector<8x32xf32>
    %143 = arith.addf %141, %142 : vector<8x32xf32>
    %144 = arith.truncf %123 : vector<8x32xf32> to vector<8x32xbf16>
    %cst_45 = arith.constant dense<0.000000e+00> : vector<8x32xf32>
    %145 = tpu.matmul %144, %129, %cst_45 {dimension_numbers = #tpu.dot_dimension_numbers<[1], [0], [0], [1], [0, 0, 1, 1], [], []>} : vector<8x32xbf16>, vector<32x32xbf16>, vector<8x32xf32> -> vector<8x32xf32>
    %146 = vector.broadcast %134 : vector<1x32xf32> to vector<8x32xf32>
    %147 = arith.addf %145, %146 : vector<8x32xf32>
    %cst_46 = arith.constant 0.353553385 : f32
    %148 = vector.broadcast %cst_46 : f32 to vector<16x32xf32>
    %149 = arith.mulf %139, %148 : vector<16x32xf32>
    %150 = vector.extract_strided_slice %149 {offsets = [0, 0], sizes = [16, 8], strides = [1, 1]} : vector<16x32xf32> to vector<16x8xf32>
    %151 = vector.extract_strided_slice %149 {offsets = [0, 8], sizes = [16, 8], strides = [1, 1]} : vector<16x32xf32> to vector<16x8xf32>
    %152 = vector.extract_strided_slice %149 {offsets = [0, 16], sizes = [16, 8], strides = [1, 1]} : vector<16x32xf32> to vector<16x8xf32>
    %153 = vector.extract_strided_slice %149 {offsets = [0, 24], sizes = [16, 8], strides = [1, 1]} : vector<16x32xf32> to vector<16x8xf32>
    %154 = vector.shape_cast %150 : vector<16x8xf32> to vector<1x16x8xf32>
    %155 = vector.shape_cast %151 : vector<16x8xf32> to vector<1x16x8xf32>
    %156 = vector.shape_cast %152 : vector<16x8xf32> to vector<1x16x8xf32>
    %157 = vector.shape_cast %153 : vector<16x8xf32> to vector<1x16x8xf32>
    %158 = tpu.concatenate %154, %155, %156, %157 in 0 : vector<1x16x8xf32>, vector<1x16x8xf32>, vector<1x16x8xf32>, vector<1x16x8xf32> -> vector<4x16x8xf32>
    %159 = vector.extract_strided_slice %143 {offsets = [0, 0], sizes = [8, 8], strides = [1, 1]} : vector<8x32xf32> to vector<8x8xf32>
    %160 = vector.extract_strided_slice %143 {offsets = [0, 8], sizes = [8, 8], strides = [1, 1]} : vector<8x32xf32> to vector<8x8xf32>
    %161 = vector.extract_strided_slice %143 {offsets = [0, 16], sizes = [8, 8], strides = [1, 1]} : vector<8x32xf32> to vector<8x8xf32>
    %162 = vector.extract_strided_slice %143 {offsets = [0, 24], sizes = [8, 8], strides = [1, 1]} : vector<8x32xf32> to vector<8x8xf32>
    %163 = vector.shape_cast %159 : vector<8x8xf32> to vector<1x8x8xf32>
    %164 = vector.shape_cast %160 : vector<8x8xf32> to vector<1x8x8xf32>
    %165 = vector.shape_cast %161 : vector<8x8xf32> to vector<1x8x8xf32>
    %166 = vector.shape_cast %162 : vector<8x8xf32> to vector<1x8x8xf32>
    %167 = tpu.concatenate %163, %164, %165, %166 in 0 : vector<1x8x8xf32>, vector<1x8x8xf32>, vector<1x8x8xf32>, vector<1x8x8xf32> -> vector<4x8x8xf32>
    %168 = vector.extract_strided_slice %147 {offsets = [0, 0], sizes = [8, 8], strides = [1, 1]} : vector<8x32xf32> to vector<8x8xf32>
    %169 = vector.extract_strided_slice %147 {offsets = [0, 8], sizes = [8, 8], strides = [1, 1]} : vector<8x32xf32> to vector<8x8xf32>
    %170 = vector.extract_strided_slice %147 {offsets = [0, 16], sizes = [8, 8], strides = [1, 1]} : vector<8x32xf32> to vector<8x8xf32>
    %171 = vector.extract_strided_slice %147 {offsets = [0, 24], sizes = [8, 8], strides = [1, 1]} : vector<8x32xf32> to vector<8x8xf32>
    %172 = vector.shape_cast %168 : vector<8x8xf32> to vector<1x8x8xf32>
    %173 = vector.shape_cast %169 : vector<8x8xf32> to vector<1x8x8xf32>
    %174 = vector.shape_cast %170 : vector<8x8xf32> to vector<1x8x8xf32>
    %175 = vector.shape_cast %171 : vector<8x8xf32> to vector<1x8x8xf32>
    %176 = tpu.concatenate %172, %173, %174, %175 in 0 : vector<1x8x8xf32>, vector<1x8x8xf32>, vector<1x8x8xf32>, vector<1x8x8xf32> -> vector<4x8x8xf32>
    %177 = arith.truncf %158 : vector<4x16x8xf32> to vector<4x16x8xbf16>
    %178 = arith.truncf %167 : vector<4x8x8xf32> to vector<4x8x8xbf16>
    "tpu.trace_start"() <{level = 10 : i32, message = "hld,hsd->hls"}> : () -> ()
    %cst_47 = arith.constant dense<0.000000e+00> : vector<4x16x8xf32>
    %179 = tpu.matmul %177, %178, %cst_47 {dimension_numbers = #tpu.dot_dimension_numbers<[2], [2], [1], [1], [0, 0, 0, 1, 1, 1], [0], [0]>} : vector<4x16x8xbf16>, vector<4x8x8xbf16>, vector<4x16x8xf32> -> vector<4x16x8xf32>
    "tpu.trace_stop"() : () -> ()
    %cst_48 = arith.constant dense<0xFF800000> : vector<4x16xf32>
    %180 = vector.multi_reduction <maximumf>, %179, %cst_48 [2] : vector<4x16x8xf32> to vector<4x16xf32>
    %181 = vector.shape_cast %180 : vector<4x16xf32> to vector<4x16x1xf32>
    %182 = vector.broadcast %181 : vector<4x16x1xf32> to vector<4x16x8xf32>
    %183 = arith.subf %179, %182 : vector<4x16x8xf32>
    %184 = math.exp %183 : vector<4x16x8xf32>
    %cst_49 = arith.constant dense<0.000000e+00> : vector<4x16xf32>
    %185 = vector.multi_reduction <add>, %184, %cst_49 [2] : vector<4x16x8xf32> to vector<4x16xf32>
    %186 = vector.shape_cast %185 : vector<4x16xf32> to vector<4x16x1xf32>
    %187 = arith.truncf %184 : vector<4x16x8xf32> to vector<4x16x8xbf16>
    %188 = arith.truncf %176 : vector<4x8x8xf32> to vector<4x8x8xbf16>
    "tpu.trace_start"() <{level = 10 : i32, message = "hls,hsd->hld"}> : () -> ()
    %cst_50 = arith.constant dense<0.000000e+00> : vector<4x16x8xf32>
    %189 = tpu.matmul %187, %188, %cst_50 {dimension_numbers = #tpu.dot_dimension_numbers<[2], [1], [1], [2], [0, 0, 0, 1, 1, 2], [0], [0]>} : vector<4x16x8xbf16>, vector<4x8x8xbf16>, vector<4x16x8xf32> -> vector<4x16x8xf32>
    "tpu.trace_stop"() : () -> ()
    %190 = tpu.reciprocal %186 {approx = true} : vector<4x16x1xf32> -> vector<4x16x1xf32>
    %191 = vector.broadcast %190 : vector<4x16x1xf32> to vector<4x16x8xf32>
    %192 = arith.mulf %189, %191 : vector<4x16x8xf32>
    %193 = vector.extract_strided_slice %192 {offsets = [0, 0, 0], sizes = [1, 16, 8], strides = [1, 1, 1]} : vector<4x16x8xf32> to vector<1x16x8xf32>
    %194 = vector.shape_cast %193 : vector<1x16x8xf32> to vector<16x8xf32>
    %195 = arith.truncf %194 : vector<16x8xf32> to vector<16x8xbf16>
    %196 = vector.extract_strided_slice %131 {offsets = [0, 0], sizes = [8, 32], strides = [1, 1]} : vector<32x32xbf16> to vector<8x32xbf16>
    %cst_51 = arith.constant dense<0.000000e+00> : vector<16x32xf32>
    %197 = tpu.matmul %195, %196, %cst_51 {dimension_numbers = #tpu.dot_dimension_numbers<[1], [0], [0], [1], [0, 0, 1, 1], [], []>} : vector<16x8xbf16>, vector<8x32xbf16>, vector<16x32xf32> -> vector<16x32xf32>
    %198 = vector.broadcast %135 : vector<1x32xf32> to vector<16x32xf32>
    %199 = arith.addf %198, %197 : vector<16x32xf32>
    %200 = vector.extract_strided_slice %192 {offsets = [1, 0, 0], sizes = [1, 16, 8], strides = [1, 1, 1]} : vector<4x16x8xf32> to vector<1x16x8xf32>
    %201 = vector.shape_cast %200 : vector<1x16x8xf32> to vector<16x8xf32>
    %202 = arith.truncf %201 : vector<16x8xf32> to vector<16x8xbf16>
    %203 = vector.extract_strided_slice %131 {offsets = [8, 0], sizes = [8, 32], strides = [1, 1]} : vector<32x32xbf16> to vector<8x32xbf16>
    %cst_52 = arith.constant dense<0.000000e+00> : vector<16x32xf32>
    %204 = tpu.matmul %202, %203, %cst_52 {dimension_numbers = #tpu.dot_dimension_numbers<[1], [0], [0], [1], [0, 0, 1, 1], [], []>} : vector<16x8xbf16>, vector<8x32xbf16>, vector<16x32xf32> -> vector<16x32xf32>
    %205 = arith.addf %199, %204 : vector<16x32xf32>
    %206 = vector.extract_strided_slice %192 {offsets = [2, 0, 0], sizes = [1, 16, 8], strides = [1, 1, 1]} : vector<4x16x8xf32> to vector<1x16x8xf32>
    %207 = vector.shape_cast %206 : vector<1x16x8xf32> to vector<16x8xf32>
    %208 = arith.truncf %207 : vector<16x8xf32> to vector<16x8xbf16>
    %209 = vector.extract_strided_slice %131 {offsets = [16, 0], sizes = [8, 32], strides = [1, 1]} : vector<32x32xbf16> to vector<8x32xbf16>
    %cst_53 = arith.constant dense<0.000000e+00> : vector<16x32xf32>
    %210 = tpu.matmul %208, %209, %cst_53 {dimension_numbers = #tpu.dot_dimension_numbers<[1], [0], [0], [1], [0, 0, 1, 1], [], []>} : vector<16x8xbf16>, vector<8x32xbf16>, vector<16x32xf32> -> vector<16x32xf32>
    %211 = arith.addf %205, %210 : vector<16x32xf32>
    %212 = vector.extract_strided_slice %192 {offsets = [3, 0, 0], sizes = [1, 16, 8], strides = [1, 1, 1]} : vector<4x16x8xf32> to vector<1x16x8xf32>
    %213 = vector.shape_cast %212 : vector<1x16x8xf32> to vector<16x8xf32>
    %214 = arith.truncf %213 : vector<16x8xf32> to vector<16x8xbf16>
    %215 = vector.extract_strided_slice %131 {offsets = [24, 0], sizes = [8, 32], strides = [1, 1]} : vector<32x32xbf16> to vector<8x32xbf16>
    %cst_54 = arith.constant dense<0.000000e+00> : vector<16x32xf32>
    %216 = tpu.matmul %214, %215, %cst_54 {dimension_numbers = #tpu.dot_dimension_numbers<[1], [0], [0], [1], [0, 0, 1, 1], [], []>} : vector<16x8xbf16>, vector<8x32xbf16>, vector<16x32xf32> -> vector<16x32xf32>
    %217 = arith.addf %211, %216 : vector<16x32xf32>
    %218 = arith.addf %4, %217 : vector<16x32xf32>
    %219 = vector.extract_strided_slice %0 {offsets = [10, 0], sizes = [1, 32], strides = [1, 1]} : vector<12x32xf32> to vector<1x32xf32>
    %220 = vector.extract_strided_slice %0 {offsets = [11, 0], sizes = [1, 32], strides = [1, 1]} : vector<12x32xf32> to vector<1x32xf32>
    %cst_55 = arith.constant dense<0.000000e+00> : vector<16xf32>
    %221 = vector.multi_reduction <add>, %218, %cst_55 [1] : vector<16x32xf32> to vector<16xf32>
    %222 = vector.shape_cast %221 : vector<16xf32> to vector<16x1xf32>
    %cst_56 = arith.constant 3.200000e+01 : f32
    %223 = vector.broadcast %cst_56 : f32 to vector<16x1xf32>
    %224 = arith.divf %222, %223 : vector<16x1xf32>
    %225 = vector.broadcast %224 : vector<16x1xf32> to vector<16x32xf32>
    %226 = arith.subf %218, %225 : vector<16x32xf32>
    %227 = arith.mulf %226, %226 : vector<16x32xf32>
    %cst_57 = arith.constant dense<0.000000e+00> : vector<16xf32>
    %228 = vector.multi_reduction <add>, %227, %cst_57 [1] : vector<16x32xf32> to vector<16xf32>
    %229 = vector.shape_cast %228 : vector<16xf32> to vector<16x1xf32>
    %cst_58 = arith.constant 3.200000e+01 : f32
    %230 = vector.broadcast %cst_58 : f32 to vector<16x1xf32>
    %231 = arith.divf %229, %230 : vector<16x1xf32>
    %cst_59 = arith.constant 9.99999974E-6 : f32
    %232 = vector.broadcast %cst_59 : f32 to vector<16x1xf32>
    %233 = arith.addf %231, %232 : vector<16x1xf32>
    %234 = math.rsqrt %233 : vector<16x1xf32>
    %235 = vector.broadcast %234 : vector<16x1xf32> to vector<16x32xf32>
    %236 = arith.mulf %226, %235 : vector<16x32xf32>
    %237 = vector.broadcast %219 : vector<1x32xf32> to vector<16x32xf32>
    %238 = arith.mulf %236, %237 : vector<16x32xf32>
    %239 = vector.broadcast %220 : vector<1x32xf32> to vector<16x32xf32>
    %240 = arith.addf %238, %239 : vector<16x32xf32>
    %c0_60 = arith.constant 0 : index
    %c0_61 = arith.constant 0 : index
    %c0_62 = arith.constant 0 : index
    %241 = vector.load %arg6[%c0_60, %c0_61, %c0_62] : memref<8x2x32xf32, #tpu.memory_space<vmem>>, vector<8x1x32xf32>
    %242 = vector.shape_cast %241 : vector<8x1x32xf32> to vector<8x32xf32>
    %243 = vector.shape_cast %123 : vector<8x32xf32> to vector<8x1x32xf32>
    tpu.vector_store %arg6[%c0_60, %c0_61, %c0_62], %243 {strides = array<i32>} : memref<8x2x32xf32, #tpu.memory_space<vmem>>, vector<8x1x32xf32>,
    %c0_63 = arith.constant 0 : index
    %c0_64 = arith.constant 0 : index
    %c0_65 = arith.constant 0 : index
    %244 = vector.load %arg7[%c0_63, %c0_64, %c0_65] : memref<16x2x32xf32, #tpu.memory_space<vmem>>, vector<16x1x32xf32>
    %245 = vector.shape_cast %244 : vector<16x1x32xf32> to vector<16x32xf32>
    %246 = vector.shape_cast %240 : vector<16x32xf32> to vector<16x1x32xf32>
    tpu.vector_store %arg7[%c0_63, %c0_64, %c0_65], %246 {strides = array<i32>} : memref<16x2x32xf32, #tpu.memory_space<vmem>>, vector<16x1x32xf32>,
    %c0_66 = arith.constant 0 : index
    %c1_67 = arith.constant 1 : index
    %c0_68 = arith.constant 0 : index
    %247 = vector.load %arg1[%c0_66, %c1_67, %c0_68] : memref<8x2x32xf32, #tpu.memory_space<vmem>>, vector<8x1x32xf32>
    %248 = vector.shape_cast %247 : vector<8x1x32xf32> to vector<8x32xf32>
    %c0_69 = arith.constant 0 : index
    %c1_70 = arith.constant 1 : index
    %c0_71 = arith.constant 0 : index
    %249 = vector.load %arg2[%c0_69, %c1_70, %c0_71] : memref<16x2x32xf32, #tpu.memory_space<vmem>>, vector<16x1x32xf32>
    %250 = vector.shape_cast %249 : vector<16x1x32xf32> to vector<16x32xf32>
    %c0_72 = arith.constant 0 : index
    %c1_73 = arith.constant 1 : index
    %c0_74 = arith.constant 0 : index
    %251 = vector.load %arg3[%c0_72, %c1_73, %c0_74] : memref<16x2x32xf32, #tpu.memory_space<vmem>>, vector<16x1x32xf32>
    %252 = vector.shape_cast %251 : vector<16x1x32xf32> to vector<16x32xf32>
    %c0_75 = arith.constant 0 : index
    %c0_76 = arith.constant 0 : index
    %c0_77 = arith.constant 0 : index
    %253 = vector.load %arg4[%c0_75, %c0_76, %c0_77] : memref<8x32x32xbf16, #tpu.memory_space<vmem>>, vector<1x32x32xbf16>
    %254 = vector.shape_cast %253 : vector<1x32x32xbf16> to vector<32x32xbf16>
    %c1_78 = arith.constant 1 : index
    %c0_79 = arith.constant 0 : index
    %c0_80 = arith.constant 0 : index
    %255 = vector.load %arg4[%c1_78, %c0_79, %c0_80] : memref<8x32x32xbf16, #tpu.memory_space<vmem>>, vector<1x32x32xbf16>
    %256 = vector.shape_cast %255 : vector<1x32x32xbf16> to vector<32x32xbf16>
    %c2_81 = arith.constant 2 : index
    %c0_82 = arith.constant 0 : index
    %c0_83 = arith.constant 0 : index
    %257 = vector.load %arg4[%c2_81, %c0_82, %c0_83] : memref<8x32x32xbf16, #tpu.memory_space<vmem>>, vector<1x32x32xbf16>
    %258 = vector.shape_cast %257 : vector<1x32x32xbf16> to vector<32x32xbf16>
    %c3_84 = arith.constant 3 : index
    %c0_85 = arith.constant 0 : index
    %c0_86 = arith.constant 0 : index
    %259 = vector.load %arg4[%c3_84, %c0_85, %c0_86] : memref<8x32x32xbf16, #tpu.memory_space<vmem>>, vector<1x32x32xbf16>
    %260 = vector.shape_cast %259 : vector<1x32x32xbf16> to vector<32x32xbf16>
    %261 = vector.extract_strided_slice %0 {offsets = [0, 0], sizes = [1, 32], strides = [1, 1]} : vector<12x32xf32> to vector<1x32xf32>
    %262 = vector.extract_strided_slice %0 {offsets = [1, 0], sizes = [1, 32], strides = [1, 1]} : vector<12x32xf32> to vector<1x32xf32>
    %263 = vector.extract_strided_slice %0 {offsets = [2, 0], sizes = [1, 32], strides = [1, 1]} : vector<12x32xf32> to vector<1x32xf32>
    %264 = vector.extract_strided_slice %0 {offsets = [3, 0], sizes = [1, 32], strides = [1, 1]} : vector<12x32xf32> to vector<1x32xf32>
    %265 = arith.truncf %248 : vector<8x32xf32> to vector<8x32xbf16>
    %cst_87 = arith.constant dense<0.000000e+00> : vector<8x32xf32>
    %266 = tpu.matmul %265, %254, %cst_87 {dimension_numbers = #tpu.dot_dimension_numbers<[1], [0], [0], [1], [0, 0, 1, 1], [], []>} : vector<8x32xbf16>, vector<32x32xbf16>, vector<8x32xf32> -> vector<8x32xf32>
    %267 = vector.broadcast %261 : vector<1x32xf32> to vector<8x32xf32>
    %268 = arith.addf %266, %267 : vector<8x32xf32>
    %269 = arith.truncf %250 : vector<16x32xf32> to vector<16x32xbf16>
    %cst_88 = arith.constant dense<0.000000e+00> : vector<16x32xf32>
    %270 = tpu.matmul %269, %256, %cst_88 {dimension_numbers = #tpu.dot_dimension_numbers<[1], [0], [0], [1], [0, 0, 1, 1], [], []>} : vector<16x32xbf16>, vector<32x32xbf16>, vector<16x32xf32> -> vector<16x32xf32>
    %271 = vector.broadcast %262 : vector<1x32xf32> to vector<16x32xf32>
    %272 = arith.addf %270, %271 : vector<16x32xf32>
    %273 = arith.truncf %252 : vector<16x32xf32> to vector<16x32xbf16>
    %cst_89 = arith.constant dense<0.000000e+00> : vector<16x32xf32>
    %274 = tpu.matmul %273, %258, %cst_89 {dimension_numbers = #tpu.dot_dimension_numbers<[1], [0], [0], [1], [0, 0, 1, 1], [], []>} : vector<16x32xbf16>, vector<32x32xbf16>, vector<16x32xf32> -> vector<16x32xf32>
    %275 = vector.broadcast %263 : vector<1x32xf32> to vector<16x32xf32>
    %276 = arith.addf %274, %275 : vector<16x32xf32>
    %cst_90 = arith.constant 0.353553385 : f32
    %277 = vector.broadcast %cst_90 : f32 to vector<8x32xf32>
    %278 = arith.mulf %268, %277 : vector<8x32xf32>
    %279 = vector.extract_strided_slice %278 {offsets = [0, 0], sizes = [8, 8], strides = [1, 1]} : vector<8x32xf32> to vector<8x8xf32>
    %280 = vector.extract_strided_slice %278 {offsets = [0, 8], sizes = [8, 8], strides = [1, 1]} : vector<8x32xf32> to vector<8x8xf32>
    %281 = vector.extract_strided_slice %278 {offsets = [0, 16], sizes = [8, 8], strides = [1, 1]} : vector<8x32xf32> to vector<8x8xf32>
    %282 = vector.extract_strided_slice %278 {offsets = [0, 24], sizes = [8, 8], strides = [1, 1]} : vector<8x32xf32> to vector<8x8xf32>
    %283 = vector.shape_cast %279 : vector<8x8xf32> to vector<1x8x8xf32>
    %284 = vector.shape_cast %280 : vector<8x8xf32> to vector<1x8x8xf32>
    %285 = vector.shape_cast %281 : vector<8x8xf32> to vector<1x8x8xf32>
    %286 = vector.shape_cast %282 : vector<8x8xf32> to vector<1x8x8xf32>
    %287 = tpu.concatenate %283, %284, %285, %286 in 0 : vector<1x8x8xf32>, vector<1x8x8xf32>, vector<1x8x8xf32>, vector<1x8x8xf32> -> vector<4x8x8xf32>
    %288 = vector.extract_strided_slice %272 {offsets = [0, 0], sizes = [16, 8], strides = [1, 1]} : vector<16x32xf32> to vector<16x8xf32>
    %289 = vector.extract_strided_slice %272 {offsets = [0, 8], sizes = [16, 8], strides = [1, 1]} : vector<16x32xf32> to vector<16x8xf32>
    %290 = vector.extract_strided_slice %272 {offsets = [0, 16], sizes = [16, 8], strides = [1, 1]} : vector<16x32xf32> to vector<16x8xf32>
    %291 = vector.extract_strided_slice %272 {offsets = [0, 24], sizes = [16, 8], strides = [1, 1]} : vector<16x32xf32> to vector<16x8xf32>
    %292 = vector.shape_cast %288 : vector<16x8xf32> to vector<1x16x8xf32>
    %293 = vector.shape_cast %289 : vector<16x8xf32> to vector<1x16x8xf32>
    %294 = vector.shape_cast %290 : vector<16x8xf32> to vector<1x16x8xf32>
    %295 = vector.shape_cast %291 : vector<16x8xf32> to vector<1x16x8xf32>
    %296 = tpu.concatenate %292, %293, %294, %295 in 0 : vector<1x16x8xf32>, vector<1x16x8xf32>, vector<1x16x8xf32>, vector<1x16x8xf32> -> vector<4x16x8xf32>
    %297 = vector.extract_strided_slice %276 {offsets = [0, 0], sizes = [16, 8], strides = [1, 1]} : vector<16x32xf32> to vector<16x8xf32>
    %298 = vector.extract_strided_slice %276 {offsets = [0, 8], sizes = [16, 8], strides = [1, 1]} : vector<16x32xf32> to vector<16x8xf32>
    %299 = vector.extract_strided_slice %276 {offsets = [0, 16], sizes = [16, 8], strides = [1, 1]} : vector<16x32xf32> to vector<16x8xf32>
    %300 = vector.extract_strided_slice %276 {offsets = [0, 24], sizes = [16, 8], strides = [1, 1]} : vector<16x32xf32> to vector<16x8xf32>
    %301 = vector.shape_cast %297 : vector<16x8xf32> to vector<1x16x8xf32>
    %302 = vector.shape_cast %298 : vector<16x8xf32> to vector<1x16x8xf32>
    %303 = vector.shape_cast %299 : vector<16x8xf32> to vector<1x16x8xf32>
    %304 = vector.shape_cast %300 : vector<16x8xf32> to vector<1x16x8xf32>
    %305 = tpu.concatenate %301, %302, %303, %304 in 0 : vector<1x16x8xf32>, vector<1x16x8xf32>, vector<1x16x8xf32>, vector<1x16x8xf32> -> vector<4x16x8xf32>
    %306 = arith.truncf %287 : vector<4x8x8xf32> to vector<4x8x8xbf16>
    %307 = arith.truncf %296 : vector<4x16x8xf32> to vector<4x16x8xbf16>
    "tpu.trace_start"() <{level = 10 : i32, message = "hld,hsd->hls"}> : () -> ()
    %cst_91 = arith.constant dense<0.000000e+00> : vector<4x8x16xf32>
    %308 = tpu.matmul %306, %307, %cst_91 {dimension_numbers = #tpu.dot_dimension_numbers<[2], [2], [1], [1], [0, 0, 0, 1, 1, 1], [0], [0]>} : vector<4x8x8xbf16>, vector<4x16x8xbf16>, vector<4x8x16xf32> -> vector<4x8x16xf32>
    "tpu.trace_stop"() : () -> ()
    %cst_92 = arith.constant dense<0xFF800000> : vector<4x8xf32>
    %309 = vector.multi_reduction <maximumf>, %308, %cst_92 [2] : vector<4x8x16xf32> to vector<4x8xf32>
    %310 = vector.shape_cast %309 : vector<4x8xf32> to vector<4x8x1xf32>
    %311 = vector.broadcast %310 : vector<4x8x1xf32> to vector<4x8x16xf32>
    %312 = arith.subf %308, %311 : vector<4x8x16xf32>
    %313 = math.exp %312 : vector<4x8x16xf32>
    %cst_93 = arith.constant dense<0.000000e+00> : vector<4x8xf32>
    %314 = vector.multi_reduction <add>, %313, %cst_93 [2] : vector<4x8x16xf32> to vector<4x8xf32>
    %315 = vector.shape_cast %314 : vector<4x8xf32> to vector<4x8x1xf32>
    %316 = arith.truncf %313 : vector<4x8x16xf32> to vector<4x8x16xbf16>
    %317 = arith.truncf %305 : vector<4x16x8xf32> to vector<4x16x8xbf16>
    "tpu.trace_start"() <{level = 10 : i32, message = "hls,hsd->hld"}> : () -> ()
    %cst_94 = arith.constant dense<0.000000e+00> : vector<4x8x8xf32>
    %318 = tpu.matmul %316, %317, %cst_94 {dimension_numbers = #tpu.dot_dimension_numbers<[2], [1], [1], [2], [0, 0, 0, 1, 1, 2], [0], [0]>} : vector<4x8x16xbf16>, vector<4x16x8xbf16>, vector<4x8x8xf32> -> vector<4x8x8xf32>
    "tpu.trace_stop"() : () -> ()
    %319 = tpu.reciprocal %315 {approx = true} : vector<4x8x1xf32> -> vector<4x8x1xf32>
    %320 = vector.broadcast %319 : vector<4x8x1xf32> to vector<4x8x8xf32>
    %321 = arith.mulf %318, %320 : vector<4x8x8xf32>
    %322 = vector.extract_strided_slice %321 {offsets = [0, 0, 0], sizes = [1, 8, 8], strides = [1, 1, 1]} : vector<4x8x8xf32> to vector<1x8x8xf32>
    %323 = vector.shape_cast %322 : vector<1x8x8xf32> to vector<8x8xf32>
    %324 = arith.truncf %323 : vector<8x8xf32> to vector<8x8xbf16>
    %325 = vector.extract_strided_slice %260 {offsets = [0, 0], sizes = [8, 32], strides = [1, 1]} : vector<32x32xbf16> to vector<8x32xbf16>
    %cst_95 = arith.constant dense<0.000000e+00> : vector<8x32xf32>
    %326 = tpu.matmul %324, %325, %cst_95 {dimension_numbers = #tpu.dot_dimension_numbers<[1], [0], [0], [1], [0, 0, 1, 1], [], []>} : vector<8x8xbf16>, vector<8x32xbf16>, vector<8x32xf32> -> vector<8x32xf32>
    %327 = vector.broadcast %264 : vector<1x32xf32> to vector<8x32xf32>
    %328 = arith.addf %327, %326 : vector<8x32xf32>
    %329 = vector.extract_strided_slice %321 {offsets = [1, 0, 0], sizes = [1, 8, 8], strides = [1, 1, 1]} : vector<4x8x8xf32> to vector<1x8x8xf32>
    %330 = vector.shape_cast %329 : vector<1x8x8xf32> to vector<8x8xf32>
    %331 = arith.truncf %330 : vector<8x8xf32> to vector<8x8xbf16>
    %332 = vector.extract_strided_slice %260 {offsets = [8, 0], sizes = [8, 32], strides = [1, 1]} : vector<32x32xbf16> to vector<8x32xbf16>
    %cst_96 = arith.constant dense<0.000000e+00> : vector<8x32xf32>
    %333 = tpu.matmul %331, %332, %cst_96 {dimension_numbers = #tpu.dot_dimension_numbers<[1], [0], [0], [1], [0, 0, 1, 1], [], []>} : vector<8x8xbf16>, vector<8x32xbf16>, vector<8x32xf32> -> vector<8x32xf32>
    %334 = arith.addf %328, %333 : vector<8x32xf32>
    %335 = vector.extract_strided_slice %321 {offsets = [2, 0, 0], sizes = [1, 8, 8], strides = [1, 1, 1]} : vector<4x8x8xf32> to vector<1x8x8xf32>
    %336 = vector.shape_cast %335 : vector<1x8x8xf32> to vector<8x8xf32>
    %337 = arith.truncf %336 : vector<8x8xf32> to vector<8x8xbf16>
    %338 = vector.extract_strided_slice %260 {offsets = [16, 0], sizes = [8, 32], strides = [1, 1]} : vector<32x32xbf16> to vector<8x32xbf16>
    %cst_97 = arith.constant dense<0.000000e+00> : vector<8x32xf32>
    %339 = tpu.matmul %337, %338, %cst_97 {dimension_numbers = #tpu.dot_dimension_numbers<[1], [0], [0], [1], [0, 0, 1, 1], [], []>} : vector<8x8xbf16>, vector<8x32xbf16>, vector<8x32xf32> -> vector<8x32xf32>
    %340 = arith.addf %334, %339 : vector<8x32xf32>
    %341 = vector.extract_strided_slice %321 {offsets = [3, 0, 0], sizes = [1, 8, 8], strides = [1, 1, 1]} : vector<4x8x8xf32> to vector<1x8x8xf32>
    %342 = vector.shape_cast %341 : vector<1x8x8xf32> to vector<8x8xf32>
    %343 = arith.truncf %342 : vector<8x8xf32> to vector<8x8xbf16>
    %344 = vector.extract_strided_slice %260 {offsets = [24, 0], sizes = [8, 32], strides = [1, 1]} : vector<32x32xbf16> to vector<8x32xbf16>
    %cst_98 = arith.constant dense<0.000000e+00> : vector<8x32xf32>
    %345 = tpu.matmul %343, %344, %cst_98 {dimension_numbers = #tpu.dot_dimension_numbers<[1], [0], [0], [1], [0, 0, 1, 1], [], []>} : vector<8x8xbf16>, vector<8x32xbf16>, vector<8x32xf32> -> vector<8x32xf32>
    %346 = arith.addf %340, %345 : vector<8x32xf32>
    %347 = arith.addf %248, %346 : vector<8x32xf32>
    %348 = vector.extract_strided_slice %0 {offsets = [8, 0], sizes = [1, 32], strides = [1, 1]} : vector<12x32xf32> to vector<1x32xf32>
    %349 = vector.extract_strided_slice %0 {offsets = [9, 0], sizes = [1, 32], strides = [1, 1]} : vector<12x32xf32> to vector<1x32xf32>
    %cst_99 = arith.constant dense<0.000000e+00> : vector<8xf32>
    %350 = vector.multi_reduction <add>, %347, %cst_99 [1] : vector<8x32xf32> to vector<8xf32>
    %351 = vector.shape_cast %350 : vector<8xf32> to vector<8x1xf32>
    %cst_100 = arith.constant 3.200000e+01 : f32
    %352 = vector.broadcast %cst_100 : f32 to vector<8x1xf32>
    %353 = arith.divf %351, %352 : vector<8x1xf32>
    %354 = vector.broadcast %353 : vector<8x1xf32> to vector<8x32xf32>
    %355 = arith.subf %347, %354 : vector<8x32xf32>
    %356 = arith.mulf %355, %355 : vector<8x32xf32>
    %cst_101 = arith.constant dense<0.000000e+00> : vector<8xf32>
    %357 = vector.multi_reduction <add>, %356, %cst_101 [1] : vector<8x32xf32> to vector<8xf32>
    %358 = vector.shape_cast %357 : vector<8xf32> to vector<8x1xf32>
    %cst_102 = arith.constant 3.200000e+01 : f32
    %359 = vector.broadcast %cst_102 : f32 to vector<8x1xf32>
    %360 = arith.divf %358, %359 : vector<8x1xf32>
    %cst_103 = arith.constant 9.99999974E-6 : f32
    %361 = vector.broadcast %cst_103 : f32 to vector<8x1xf32>
    %362 = arith.addf %360, %361 : vector<8x1xf32>
    %363 = math.rsqrt %362 : vector<8x1xf32>
    %364 = vector.broadcast %363 : vector<8x1xf32> to vector<8x32xf32>
    %365 = arith.mulf %355, %364 : vector<8x32xf32>
    %366 = vector.broadcast %348 : vector<1x32xf32> to vector<8x32xf32>
    %367 = arith.mulf %365, %366 : vector<8x32xf32>
    %368 = vector.broadcast %349 : vector<1x32xf32> to vector<8x32xf32>
    %369 = arith.addf %367, %368 : vector<8x32xf32>
    %c4_104 = arith.constant 4 : index
    %c0_105 = arith.constant 0 : index
    %c0_106 = arith.constant 0 : index
    %370 = vector.load %arg4[%c4_104, %c0_105, %c0_106] : memref<8x32x32xbf16, #tpu.memory_space<vmem>>, vector<1x32x32xbf16>
    %371 = vector.shape_cast %370 : vector<1x32x32xbf16> to vector<32x32xbf16>
    %c5_107 = arith.constant 5 : index
    %c0_108 = arith.constant 0 : index
    %c0_109 = arith.constant 0 : index
    %372 = vector.load %arg4[%c5_107, %c0_108, %c0_109] : memref<8x32x32xbf16, #tpu.memory_space<vmem>>, vector<1x32x32xbf16>
    %373 = vector.shape_cast %372 : vector<1x32x32xbf16> to vector<32x32xbf16>
    %c6_110 = arith.constant 6 : index
    %c0_111 = arith.constant 0 : index
    %c0_112 = arith.constant 0 : index
    %374 = vector.load %arg4[%c6_110, %c0_111, %c0_112] : memref<8x32x32xbf16, #tpu.memory_space<vmem>>, vector<1x32x32xbf16>
    %375 = vector.shape_cast %374 : vector<1x32x32xbf16> to vector<32x32xbf16>
    %c7_113 = arith.constant 7 : index
    %c0_114 = arith.constant 0 : index
    %c0_115 = arith.constant 0 : index
    %376 = vector.load %arg4[%c7_113, %c0_114, %c0_115] : memref<8x32x32xbf16, #tpu.memory_space<vmem>>, vector<1x32x32xbf16>
    %377 = vector.shape_cast %376 : vector<1x32x32xbf16> to vector<32x32xbf16>
    %378 = vector.extract_strided_slice %0 {offsets = [4, 0], sizes = [1, 32], strides = [1, 1]} : vector<12x32xf32> to vector<1x32xf32>
    %379 = vector.extract_strided_slice %0 {offsets = [5, 0], sizes = [1, 32], strides = [1, 1]} : vector<12x32xf32> to vector<1x32xf32>
    %380 = vector.extract_strided_slice %0 {offsets = [6, 0], sizes = [1, 32], strides = [1, 1]} : vector<12x32xf32> to vector<1x32xf32>
    %381 = vector.extract_strided_slice %0 {offsets = [7, 0], sizes = [1, 32], strides = [1, 1]} : vector<12x32xf32> to vector<1x32xf32>
    %382 = arith.truncf %250 : vector<16x32xf32> to vector<16x32xbf16>
    %cst_116 = arith.constant dense<0.000000e+00> : vector<16x32xf32>
    %383 = tpu.matmul %382, %371, %cst_116 {dimension_numbers = #tpu.dot_dimension_numbers<[1], [0], [0], [1], [0, 0, 1, 1], [], []>} : vector<16x32xbf16>, vector<32x32xbf16>, vector<16x32xf32> -> vector<16x32xf32>
    %384 = vector.broadcast %378 : vector<1x32xf32> to vector<16x32xf32>
    %385 = arith.addf %383, %384 : vector<16x32xf32>
    %386 = arith.truncf %369 : vector<8x32xf32> to vector<8x32xbf16>
    %cst_117 = arith.constant dense<0.000000e+00> : vector<8x32xf32>
    %387 = tpu.matmul %386, %373, %cst_117 {dimension_numbers = #tpu.dot_dimension_numbers<[1], [0], [0], [1], [0, 0, 1, 1], [], []>} : vector<8x32xbf16>, vector<32x32xbf16>, vector<8x32xf32> -> vector<8x32xf32>
    %388 = vector.broadcast %379 : vector<1x32xf32> to vector<8x32xf32>
    %389 = arith.addf %387, %388 : vector<8x32xf32>
    %390 = arith.truncf %369 : vector<8x32xf32> to vector<8x32xbf16>
    %cst_118 = arith.constant dense<0.000000e+00> : vector<8x32xf32>
    %391 = tpu.matmul %390, %375, %cst_118 {dimension_numbers = #tpu.dot_dimension_numbers<[1], [0], [0], [1], [0, 0, 1, 1], [], []>} : vector<8x32xbf16>, vector<32x32xbf16>, vector<8x32xf32> -> vector<8x32xf32>
    %392 = vector.broadcast %380 : vector<1x32xf32> to vector<8x32xf32>
    %393 = arith.addf %391, %392 : vector<8x32xf32>
    %cst_119 = arith.constant 0.353553385 : f32
    %394 = vector.broadcast %cst_119 : f32 to vector<16x32xf32>
    %395 = arith.mulf %385, %394 : vector<16x32xf32>
    %396 = vector.extract_strided_slice %395 {offsets = [0, 0], sizes = [16, 8], strides = [1, 1]} : vector<16x32xf32> to vector<16x8xf32>
    %397 = vector.extract_strided_slice %395 {offsets = [0, 8], sizes = [16, 8], strides = [1, 1]} : vector<16x32xf32> to vector<16x8xf32>
    %398 = vector.extract_strided_slice %395 {offsets = [0, 16], sizes = [16, 8], strides = [1, 1]} : vector<16x32xf32> to vector<16x8xf32>
    %399 = vector.extract_strided_slice %395 {offsets = [0, 24], sizes = [16, 8], strides = [1, 1]} : vector<16x32xf32> to vector<16x8xf32>
    %400 = vector.shape_cast %396 : vector<16x8xf32> to vector<1x16x8xf32>
    %401 = vector.shape_cast %397 : vector<16x8xf32> to vector<1x16x8xf32>
    %402 = vector.shape_cast %398 : vector<16x8xf32> to vector<1x16x8xf32>
    %403 = vector.shape_cast %399 : vector<16x8xf32> to vector<1x16x8xf32>
    %404 = tpu.concatenate %400, %401, %402, %403 in 0 : vector<1x16x8xf32>, vector<1x16x8xf32>, vector<1x16x8xf32>, vector<1x16x8xf32> -> vector<4x16x8xf32>
    %405 = vector.extract_strided_slice %389 {offsets = [0, 0], sizes = [8, 8], strides = [1, 1]} : vector<8x32xf32> to vector<8x8xf32>
    %406 = vector.extract_strided_slice %389 {offsets = [0, 8], sizes = [8, 8], strides = [1, 1]} : vector<8x32xf32> to vector<8x8xf32>
    %407 = vector.extract_strided_slice %389 {offsets = [0, 16], sizes = [8, 8], strides = [1, 1]} : vector<8x32xf32> to vector<8x8xf32>
    %408 = vector.extract_strided_slice %389 {offsets = [0, 24], sizes = [8, 8], strides = [1, 1]} : vector<8x32xf32> to vector<8x8xf32>
    %409 = vector.shape_cast %405 : vector<8x8xf32> to vector<1x8x8xf32>
    %410 = vector.shape_cast %406 : vector<8x8xf32> to vector<1x8x8xf32>
    %411 = vector.shape_cast %407 : vector<8x8xf32> to vector<1x8x8xf32>
    %412 = vector.shape_cast %408 : vector<8x8xf32> to vector<1x8x8xf32>
    %413 = tpu.concatenate %409, %410, %411, %412 in 0 : vector<1x8x8xf32>, vector<1x8x8xf32>, vector<1x8x8xf32>, vector<1x8x8xf32> -> vector<4x8x8xf32>
    %414 = vector.extract_strided_slice %393 {offsets = [0, 0], sizes = [8, 8], strides = [1, 1]} : vector<8x32xf32> to vector<8x8xf32>
    %415 = vector.extract_strided_slice %393 {offsets = [0, 8], sizes = [8, 8], strides = [1, 1]} : vector<8x32xf32> to vector<8x8xf32>
    %416 = vector.extract_strided_slice %393 {offsets = [0, 16], sizes = [8, 8], strides = [1, 1]} : vector<8x32xf32> to vector<8x8xf32>
    %417 = vector.extract_strided_slice %393 {offsets = [0, 24], sizes = [8, 8], strides = [1, 1]} : vector<8x32xf32> to vector<8x8xf32>
    %418 = vector.shape_cast %414 : vector<8x8xf32> to vector<1x8x8xf32>
    %419 = vector.shape_cast %415 : vector<8x8xf32> to vector<1x8x8xf32>
    %420 = vector.shape_cast %416 : vector<8x8xf32> to vector<1x8x8xf32>
    %421 = vector.shape_cast %417 : vector<8x8xf32> to vector<1x8x8xf32>
    %422 = tpu.concatenate %418, %419, %420, %421 in 0 : vector<1x8x8xf32>, vector<1x8x8xf32>, vector<1x8x8xf32>, vector<1x8x8xf32> -> vector<4x8x8xf32>
    %423 = arith.truncf %404 : vector<4x16x8xf32> to vector<4x16x8xbf16>
    %424 = arith.truncf %413 : vector<4x8x8xf32> to vector<4x8x8xbf16>
    "tpu.trace_start"() <{level = 10 : i32, message = "hld,hsd->hls"}> : () -> ()
    %cst_120 = arith.constant dense<0.000000e+00> : vector<4x16x8xf32>
    %425 = tpu.matmul %423, %424, %cst_120 {dimension_numbers = #tpu.dot_dimension_numbers<[2], [2], [1], [1], [0, 0, 0, 1, 1, 1], [0], [0]>} : vector<4x16x8xbf16>, vector<4x8x8xbf16>, vector<4x16x8xf32> -> vector<4x16x8xf32>
    "tpu.trace_stop"() : () -> ()
    %cst_121 = arith.constant dense<0xFF800000> : vector<4x16xf32>
    %426 = vector.multi_reduction <maximumf>, %425, %cst_121 [2] : vector<4x16x8xf32> to vector<4x16xf32>
    %427 = vector.shape_cast %426 : vector<4x16xf32> to vector<4x16x1xf32>
    %428 = vector.broadcast %427 : vector<4x16x1xf32> to vector<4x16x8xf32>
    %429 = arith.subf %425, %428 : vector<4x16x8xf32>
    %430 = math.exp %429 : vector<4x16x8xf32>
    %cst_122 = arith.constant dense<0.000000e+00> : vector<4x16xf32>
    %431 = vector.multi_reduction <add>, %430, %cst_122 [2] : vector<4x16x8xf32> to vector<4x16xf32>
    %432 = vector.shape_cast %431 : vector<4x16xf32> to vector<4x16x1xf32>
    %433 = arith.truncf %430 : vector<4x16x8xf32> to vector<4x16x8xbf16>
    %434 = arith.truncf %422 : vector<4x8x8xf32> to vector<4x8x8xbf16>
    "tpu.trace_start"() <{level = 10 : i32, message = "hls,hsd->hld"}> : () -> ()
    %cst_123 = arith.constant dense<0.000000e+00> : vector<4x16x8xf32>
    %435 = tpu.matmul %433, %434, %cst_123 {dimension_numbers = #tpu.dot_dimension_numbers<[2], [1], [1], [2], [0, 0, 0, 1, 1, 2], [0], [0]>} : vector<4x16x8xbf16>, vector<4x8x8xbf16>, vector<4x16x8xf32> -> vector<4x16x8xf32>
    "tpu.trace_stop"() : () -> ()
    %436 = tpu.reciprocal %432 {approx = true} : vector<4x16x1xf32> -> vector<4x16x1xf32>
    %437 = vector.broadcast %436 : vector<4x16x1xf32> to vector<4x16x8xf32>
    %438 = arith.mulf %435, %437 : vector<4x16x8xf32>
    %439 = vector.extract_strided_slice %438 {offsets = [0, 0, 0], sizes = [1, 16, 8], strides = [1, 1, 1]} : vector<4x16x8xf32> to vector<1x16x8xf32>
    %440 = vector.shape_cast %439 : vector<1x16x8xf32> to vector<16x8xf32>
    %441 = arith.truncf %440 : vector<16x8xf32> to vector<16x8xbf16>
    %442 = vector.extract_strided_slice %377 {offsets = [0, 0], sizes = [8, 32], strides = [1, 1]} : vector<32x32xbf16> to vector<8x32xbf16>
    %cst_124 = arith.constant dense<0.000000e+00> : vector<16x32xf32>
    %443 = tpu.matmul %441, %442, %cst_124 {dimension_numbers = #tpu.dot_dimension_numbers<[1], [0], [0], [1], [0, 0, 1, 1], [], []>} : vector<16x8xbf16>, vector<8x32xbf16>, vector<16x32xf32> -> vector<16x32xf32>
    %444 = vector.broadcast %381 : vector<1x32xf32> to vector<16x32xf32>
    %445 = arith.addf %444, %443 : vector<16x32xf32>
    %446 = vector.extract_strided_slice %438 {offsets = [1, 0, 0], sizes = [1, 16, 8], strides = [1, 1, 1]} : vector<4x16x8xf32> to vector<1x16x8xf32>
    %447 = vector.shape_cast %446 : vector<1x16x8xf32> to vector<16x8xf32>
    %448 = arith.truncf %447 : vector<16x8xf32> to vector<16x8xbf16>
    %449 = vector.extract_strided_slice %377 {offsets = [8, 0], sizes = [8, 32], strides = [1, 1]} : vector<32x32xbf16> to vector<8x32xbf16>
    %cst_125 = arith.constant dense<0.000000e+00> : vector<16x32xf32>
    %450 = tpu.matmul %448, %449, %cst_125 {dimension_numbers = #tpu.dot_dimension_numbers<[1], [0], [0], [1], [0, 0, 1, 1], [], []>} : vector<16x8xbf16>, vector<8x32xbf16>, vector<16x32xf32> -> vector<16x32xf32>
    %451 = arith.addf %445, %450 : vector<16x32xf32>
    %452 = vector.extract_strided_slice %438 {offsets = [2, 0, 0], sizes = [1, 16, 8], strides = [1, 1, 1]} : vector<4x16x8xf32> to vector<1x16x8xf32>
    %453 = vector.shape_cast %452 : vector<1x16x8xf32> to vector<16x8xf32>
    %454 = arith.truncf %453 : vector<16x8xf32> to vector<16x8xbf16>
    %455 = vector.extract_strided_slice %377 {offsets = [16, 0], sizes = [8, 32], strides = [1, 1]} : vector<32x32xbf16> to vector<8x32xbf16>
    %cst_126 = arith.constant dense<0.000000e+00> : vector<16x32xf32>
    %456 = tpu.matmul %454, %455, %cst_126 {dimension_numbers = #tpu.dot_dimension_numbers<[1], [0], [0], [1], [0, 0, 1, 1], [], []>} : vector<16x8xbf16>, vector<8x32xbf16>, vector<16x32xf32> -> vector<16x32xf32>
    %457 = arith.addf %451, %456 : vector<16x32xf32>
    %458 = vector.extract_strided_slice %438 {offsets = [3, 0, 0], sizes = [1, 16, 8], strides = [1, 1, 1]} : vector<4x16x8xf32> to vector<1x16x8xf32>
    %459 = vector.shape_cast %458 : vector<1x16x8xf32> to vector<16x8xf32>
    %460 = arith.truncf %459 : vector<16x8xf32> to vector<16x8xbf16>
    %461 = vector.extract_strided_slice %377 {offsets = [24, 0], sizes = [8, 32], strides = [1, 1]} : vector<32x32xbf16> to vector<8x32xbf16>
    %cst_127 = arith.constant dense<0.000000e+00> : vector<16x32xf32>
    %462 = tpu.matmul %460, %461, %cst_127 {dimension_numbers = #tpu.dot_dimension_numbers<[1], [0], [0], [1], [0, 0, 1, 1], [], []>} : vector<16x8xbf16>, vector<8x32xbf16>, vector<16x32xf32> -> vector<16x32xf32>
    %463 = arith.addf %457, %462 : vector<16x32xf32>
    %464 = arith.addf %250, %463 : vector<16x32xf32>
    %465 = vector.extract_strided_slice %0 {offsets = [10, 0], sizes = [1, 32], strides = [1, 1]} : vector<12x32xf32> to vector<1x32xf32>
    %466 = vector.extract_strided_slice %0 {offsets = [11, 0], sizes = [1, 32], strides = [1, 1]} : vector<12x32xf32> to vector<1x32xf32>
    %cst_128 = arith.constant dense<0.000000e+00> : vector<16xf32>
    %467 = vector.multi_reduction <add>, %464, %cst_128 [1] : vector<16x32xf32> to vector<16xf32>
    %468 = vector.shape_cast %467 : vector<16xf32> to vector<16x1xf32>
    %cst_129 = arith.constant 3.200000e+01 : f32
    %469 = vector.broadcast %cst_129 : f32 to vector<16x1xf32>
    %470 = arith.divf %468, %469 : vector<16x1xf32>
    %471 = vector.broadcast %470 : vector<16x1xf32> to vector<16x32xf32>
    %472 = arith.subf %464, %471 : vector<16x32xf32>
    %473 = arith.mulf %472, %472 : vector<16x32xf32>
    %cst_130 = arith.constant dense<0.000000e+00> : vector<16xf32>
    %474 = vector.multi_reduction <add>, %473, %cst_130 [1] : vector<16x32xf32> to vector<16xf32>
    %475 = vector.shape_cast %474 : vector<16xf32> to vector<16x1xf32>
    %cst_131 = arith.constant 3.200000e+01 : f32
    %476 = vector.broadcast %cst_131 : f32 to vector<16x1xf32>
    %477 = arith.divf %475, %476 : vector<16x1xf32>
    %cst_132 = arith.constant 9.99999974E-6 : f32
    %478 = vector.broadcast %cst_132 : f32 to vector<16x1xf32>
    %479 = arith.addf %477, %478 : vector<16x1xf32>
    %480 = math.rsqrt %479 : vector<16x1xf32>
    %481 = vector.broadcast %480 : vector<16x1xf32> to vector<16x32xf32>
    %482 = arith.mulf %472, %481 : vector<16x32xf32>
    %483 = vector.broadcast %465 : vector<1x32xf32> to vector<16x32xf32>
    %484 = arith.mulf %482, %483 : vector<16x32xf32>
    %485 = vector.broadcast %466 : vector<1x32xf32> to vector<16x32xf32>
    %486 = arith.addf %484, %485 : vector<16x32xf32>
    %c0_133 = arith.constant 0 : index
    %c1_134 = arith.constant 1 : index
    %c0_135 = arith.constant 0 : index
    %487 = vector.load %arg6[%c0_133, %c1_134, %c0_135] : memref<8x2x32xf32, #tpu.memory_space<vmem>>, vector<8x1x32xf32>
    %488 = vector.shape_cast %487 : vector<8x1x32xf32> to vector<8x32xf32>
    %489 = vector.shape_cast %369 : vector<8x32xf32> to vector<8x1x32xf32>
    tpu.vector_store %arg6[%c0_133, %c1_134, %c0_135], %489 {strides = array<i32>} : memref<8x2x32xf32, #tpu.memory_space<vmem>>, vector<8x1x32xf32>,
    %c0_136 = arith.constant 0 : index
    %c1_137 = arith.constant 1 : index
    %c0_138 = arith.constant 0 : index
    %490 = vector.load %arg7[%c0_136, %c1_137, %c0_138] : memref<16x2x32xf32, #tpu.memory_space<vmem>>, vector<16x1x32xf32>
    %491 = vector.shape_cast %490 : vector<16x1x32xf32> to vector<16x32xf32>
    %492 = vector.shape_cast %486 : vector<16x32xf32> to vector<16x1x32xf32>
    tpu.vector_store %arg7[%c0_136, %c1_137, %c0_138], %492 {strides = array<i32>} : memref<16x2x32xf32, #tpu.memory_space<vmem>>, vector<16x1x32xf32>,
    return
  }
  func.func @transform_0(%arg0: i32) -> (i32, i32, i32) {
    %c0_i32 = arith.constant 0 : i32
    %c0_i32_0 = arith.constant 0 : i32
    %c0_i32_1 = arith.constant 0 : i32
    return %c0_i32, %arg0, %c0_i32_0 : i32, i32, i32
  }
  func.func @transform_1(%arg0: i32) -> (i32, i32, i32) {
    %c0_i32 = arith.constant 0 : i32
    %c0_i32_0 = arith.constant 0 : i32
    %c0_i32_1 = arith.constant 0 : i32
    return %c0_i32, %arg0, %c0_i32_0 : i32, i32, i32
  }
  func.func @transform_2(%arg0: i32) -> (i32, i32, i32) {
    %c0_i32 = arith.constant 0 : i32
    %c0_i32_0 = arith.constant 0 : i32
    %c0_i32_1 = arith.constant 0 : i32
    return %c0_i32, %arg0, %c0_i32_0 : i32, i32, i32
  }
  func.func @transform_3(%arg0: i32) -> (i32, i32, i32) {
    %c0_i32 = arith.constant 0 : i32
    %c0_i32_0 = arith.constant 0 : i32
    %c0_i32_1 = arith.constant 0 : i32
    %c0_i32_2 = arith.constant 0 : i32
    return %c0_i32, %c0_i32_0, %c0_i32_1 : i32, i32, i32
  }
  func.func @transform_4(%arg0: i32) -> (i32, i32) {
    %c0_i32 = arith.constant 0 : i32
    %c0_i32_0 = arith.constant 0 : i32
    %c0_i32_1 = arith.constant 0 : i32
    return %c0_i32, %c0_i32_0 : i32, i32
  }
  func.func @transform_5(%arg0: i32) -> (i32, i32, i32) {
    %c0_i32 = arith.constant 0 : i32
    %c0_i32_0 = arith.constant 0 : i32
    %c0_i32_1 = arith.constant 0 : i32
    return %c0_i32, %arg0, %c0_i32_0 : i32, i32, i32
  }
  func.func @transform_6(%arg0: i32) -> (i32, i32, i32) {
    %c0_i32 = arith.constant 0 : i32
    %c0_i32_0 = arith.constant 0 : i32
    %c0_i32_1 = arith.constant 0 : i32
    return %c0_i32, %arg0, %c0_i32_0 : i32, i32, i32
  }
}

</mosaic_0001>

<llo_original>
// kernel: bidirectional_cross_attention_forward.1
$region0: #{bidirectional_cross_attention_forward.1}
  #allocation0 [shape = 'u32[]', space=smem, size = 0x4, offset = 0x4, fixed_abs, tag = 'smem constant byte address 0x4 - core index']
  #allocation1 [shape = 'u32[72,128]{1,0:T(1,128)}', space=vmem, size = 0x9000, scoped, tag = 'internal scratch']
  %s0 = inlined_call_operand.hbm [shape: f32[8,2,32], index: 0, kind: input, shape index: {}]
  %s1 = inlined_call_operand.hbm [shape: f32[16,2,32], index: 1, kind: input, shape index: {}]
  %s2 = inlined_call_operand.hbm [shape: f32[16,2,32], index: 2, kind: input, shape index: {}]
  %s3 = inlined_call_operand.hbm [shape: bf16[8,32,32], index: 3, kind: input, shape index: {}]
  %s4 = inlined_call_operand.hbm [shape: f32[12,32], index: 4, kind: input, shape index: {}]
  %s5 = inlined_call_operand.hbm [shape: f32[8,2,32], index: 5, kind: output, shape index: {0}]
  %s6 = inlined_call_operand.hbm [shape: f32[16,2,32], index: 6, kind: output, shape index: {1}]
  %7 = xla_tuple %s5, %s6
  %s8 = sld [smem:[#allocation0]]
  $region58: #{bidirectional_cross_attention_forward.1} parent=0
    _
  %s10 = ssub.s32 1, %s8
  %s11 = scalar_select 0, %s10, %s8
  $region1: #{bidirectional_cross_attention_forward.1} parent=0
    #allocation2 [shape = 'u8[8192]{0}', space=vmem, size = 0x2000, scoped, tag = 'input window, operand 0, single buffered']
    #allocation3 [shape = 's32[1]{0}', space=sflag, size = 0x4, scoped, tag = 'scoped memory for bidirectional_cross_attention_forward.1']
    #allocation4 [shape = 's32[1]{0}', space=sflag, size = 0x4, scoped, tag = 'scoped memory for bidirectional_cross_attention_forward.1']
    #allocation5 [shape = 'u8[16384]{0}', space=vmem, size = 0x4000, scoped, tag = 'input window, operand 1, single buffered']
    #allocation6 [shape = 's32[1]{0}', space=sflag, size = 0x4, scoped, tag = 'scoped memory for bidirectional_cross_attention_forward.1']
    #allocation7 [shape = 'u8[16384]{0}', space=vmem, size = 0x4000, scoped, tag = 'input window, operand 2, single buffered']
    #allocation8 [shape = 'u8[65536]{0}', space=vmem, size = 0x10000, scoped, tag = 'input window, operand 3, single buffered']
    #allocation9 [shape = 's32[1]{0}', space=sflag, size = 0x4, scoped, tag = 'scoped memory for bidirectional_cross_attention_forward.1']
    #allocation10 [shape = 'u8[8192]{0}', space=vmem, size = 0x2000, scoped, tag = 'input window, operand 4, single buffered']
    #allocation11 [shape = 'u8[8192]{0}', space=vmem, size = 0x2000, scoped, tag = 'output window, operand 0, single buffered']
    #allocation12 [shape = 'u8[16384]{0}', space=vmem, size = 0x4000, scoped, tag = 'output window, operand 1, single buffered']
    #allocation13 [shape = 's32[1]{0}', space=sflag, size = 0x4, scoped, tag = 'scoped memory for bidirectional_cross_attention_forward.1']
    %12 = vsyncpa [#allocation3], 0
    %13 = vsyncpa [#allocation6], 0
    %14 = vsyncpa [#allocation9], 0
    %15 = vsyncpa [#allocation4], 0
    %16 = vsyncpa [#allocation13], 0
    // Predicated region
    $region2: #{bidirectional_cross_attention_forward.1} parent=1 // pred_check
      _
    $region3: #{bidirectional_cross_attention_forward.1} parent=1 // pred_check_branch
      %18 = sbr.rel (0) target = $region5
    $region4: #{bidirectional_cross_attention_forward.1} parent=1 // pred_region
      %20 = vsyncadd [#allocation3], 0
      %s21 = sshll.u32 %s0, 4
      %s22 = int_to_ptr.hbm [resolvable:$true] %s21
      %s23 = sshll.u32 [#allocation2], 4
      %s24 = int_to_ptr.vmem [resolvable:$true] %s23
      %29 = dma.hbm_to_vmem [thread:$0]  %s22, 256, %s24, [#allocation3], 32, 32, 2
    $region5: #{bidirectional_cross_attention_forward.1} parent=1 // pred_fallthru
      _
    // Predicated region
    $region6: #{bidirectional_cross_attention_forward.1} parent=1 // pred_check
      _
    $region7: #{bidirectional_cross_attention_forward.1} parent=1 // pred_check_branch
      %31 = sbr.rel (0) target = $region9
    $region8: #{bidirectional_cross_attention_forward.1} parent=1 // pred_region
      %33 = vsyncadd [#allocation6], 0
      %s34 = sshll.u32 %s1, 4
      %s35 = int_to_ptr.hbm [resolvable:$true] %s34
      %s36 = sshll.u32 [#allocation5], 4
      %s37 = int_to_ptr.vmem [resolvable:$true] %s36
      %42 = dma.hbm_to_vmem [thread:$0]  %s35, 512, %s37, [#allocation6], 32, 32, 2
    $region9: #{bidirectional_cross_attention_forward.1} parent=1 // pred_fallthru
      _
    // Predicated region
    $region10: #{bidirectional_cross_attention_forward.1} parent=1 // pred_check
      _
    $region11: #{bidirectional_cross_attention_forward.1} parent=1 // pred_check_branch
      %44 = sbr.rel (0) target = $region13
    $region12: #{bidirectional_cross_attention_forward.1} parent=1 // pred_region
      %46 = vsyncadd [#allocation6], 0
      %s47 = sshll.u32 %s2, 4
      %s48 = int_to_ptr.hbm [resolvable:$true] %s47
      %s49 = sshll.u32 [#allocation7], 4
      %s50 = int_to_ptr.vmem [resolvable:$true] %s49
      %55 = dma.hbm_to_vmem [thread:$0]  %s48, 512, %s50, [#allocation6], 32, 32, 2
    $region13: #{bidirectional_cross_attention_forward.1} parent=1 // pred_fallthru
      _
    // Predicated region
    $region14: #{bidirectional_cross_attention_forward.1} parent=1 // pred_check
      _
    $region15: #{bidirectional_cross_attention_forward.1} parent=1 // pred_check_branch
      %57 = sbr.rel (0) target = $region17
    $region16: #{bidirectional_cross_attention_forward.1} parent=1 // pred_region
      %59 = vsyncadd [#allocation9], 0
      %s60 = sshll.u32 %s3, 4
      %s61 = int_to_ptr.hbm [resolvable:$true] %s60
      %s62 = sshll.u32 [#allocation8], 4
      %s63 = int_to_ptr.vmem [resolvable:$true] %s62
      %68 = dma.hbm_to_vmem [thread:$0]  %s61, 2048, %s63, [#allocation9], 64, 64, 4
    $region17: #{bidirectional_cross_attention_forward.1} parent=1 // pred_fallthru
      _
    // Predicated region
    $region18: #{bidirectional_cross_attention_forward.1} parent=1 // pred_check
      _
    $region19: #{bidirectional_cross_attention_forward.1} parent=1 // pred_check_branch
      %70 = sbr.rel (0) target = $region21
    $region20: #{bidirectional_cross_attention_forward.1} parent=1 // pred_region
      %72 = vsyncadd [#allocation9], 0
      %s73 = sshll.u32 %s4, 4
      %s74 = int_to_ptr.hbm [resolvable:$true] %s73
      %s75 = sshll.u32 [#allocation10], 4
      %s76 = int_to_ptr.vmem [resolvable:$true] %s75
      %81 = dma.hbm_to_vmem [thread:$0]  %s74, 256, %s76, [#allocation9], 128, 128, 8
    $region21: #{bidirectional_cross_attention_forward.1} parent=1 // pred_fallthru
      _
    // Predicated region
    $region22: #{bidirectional_cross_attention_forward.1} parent=1 // pred_check
      _
    $region23: #{bidirectional_cross_attention_forward.1} parent=1 // pred_check_branch
      %83 = sbr.rel (0) target = $region25
    $region24: #{bidirectional_cross_attention_forward.1} parent=1 // pred_region
      %85 = dma.done [#allocation3], 256
    $region25: #{bidirectional_cross_attention_forward.1} parent=1 // pred_fallthru
      _
    // Predicated region
    $region26: #{bidirectional_cross_attention_forward.1} parent=1 // pred_check
      _
    $region27: #{bidirectional_cross_attention_forward.1} parent=1 // pred_check_branch
      %87 = sbr.rel (0) target = $region29
    $region28: #{bidirectional_cross_attention_forward.1} parent=1 // pred_region
      %89 = dma.done [#allocation6], 512
    $region29: #{bidirectional_cross_attention_forward.1} parent=1 // pred_fallthru
      _
    // Predicated region
    $region30: #{bidirectional_cross_attention_forward.1} parent=1 // pred_check
      _
    $region31: #{bidirectional_cross_attention_forward.1} parent=1 // pred_check_branch
      %91 = sbr.rel (0) target = $region33
    $region32: #{bidirectional_cross_attention_forward.1} parent=1 // pred_region
      %93 = dma.done [#allocation6], 512
    $region33: #{bidirectional_cross_attention_forward.1} parent=1 // pred_fallthru
      _
    // Predicated region
    $region34: #{bidirectional_cross_attention_forward.1} parent=1 // pred_check
      _
    $region35: #{bidirectional_cross_attention_forward.1} parent=1 // pred_check_branch
      %95 = sbr.rel (0) target = $region37
    $region36: #{bidirectional_cross_attention_forward.1} parent=1 // pred_region
      %97 = dma.done [#allocation9], 2048
    $region37: #{bidirectional_cross_attention_forward.1} parent=1 // pred_fallthru
      _
    // Predicated region
    $region38: #{bidirectional_cross_attention_forward.1} parent=1 // pred_check
      _
    $region39: #{bidirectional_cross_attention_forward.1} parent=1 // pred_check_branch
      %99 = sbr.rel (0) target = $region41
    $region40: #{bidirectional_cross_attention_forward.1} parent=1 // pred_region
      %101 = dma.done [#allocation9], 256
    $region41: #{bidirectional_cross_attention_forward.1} parent=1 // pred_fallthru
      _
    %v103 = vld [vmem:[#allocation10] sm:$0xff]
    %v104 = vld [vmem:[#allocation10 + $0x8] sm:$0xf]
    %v105 = vld [vmem:[#allocation2] sm:$0x1]
    %v106 = vld [vmem:[#allocation2 + $0x2] sm:$0x1]
    %v107 = vld [vmem:[#allocation2 + $0x4] sm:$0x1]
    %v108 = vld [vmem:[#allocation2 + $0x6] sm:$0x1]
    %v109 = vld [vmem:[#allocation2 + $0x8] sm:$0x1]
    %v110 = vld [vmem:[#allocation2 + $0xa] sm:$0x1]
    %v111 = vld [vmem:[#allocation2 + $0xc] sm:$0x1]
    %v112 = vld [vmem:[#allocation2 + $0xe] sm:$0x1]
    %v113 = vld [vmem:[#allocation5] sm:$0x1]
    %v114 = vld [vmem:[#allocation5 + $0x2] sm:$0x1]
    %v115 = vld [vmem:[#allocation5 + $0x4] sm:$0x1]
    %v116 = vld [vmem:[#allocation5 + $0x6] sm:$0x1]
    %v117 = vld [vmem:[#allocation5 + $0x8] sm:$0x1]
    %v118 = vld [vmem:[#allocation5 + $0xa] sm:$0x1]
    %v119 = vld [vmem:[#allocation5 + $0xc] sm:$0x1]
    %v120 = vld [vmem:[#allocation5 + $0xe] sm:$0x1]
    %v121 = vld [vmem:[#allocation5 + $0x10] sm:$0x1]
    %v122 = vld [vmem:[#allocation5 + $0x12] sm:$0x1]
    %v123 = vld [vmem:[#allocation5 + $0x14] sm:$0x1]
    %v124 = vld [vmem:[#allocation5 + $0x16] sm:$0x1]
    %v125 = vld [vmem:[#allocation5 + $0x18] sm:$0x1]
    %v126 = vld [vmem:[#allocation5 + $0x1a] sm:$0x1]
    %v127 = vld [vmem:[#allocation5 + $0x1c] sm:$0x1]
    %v128 = vld [vmem:[#allocation5 + $0x1e] sm:$0x1]
    %v129 = vld [vmem:[#allocation7] sm:$0x1]
    %v130 = vld [vmem:[#allocation7 + $0x2] sm:$0x1]
    %v131 = vld [vmem:[#allocation7 + $0x4] sm:$0x1]
    %v132 = vld [vmem:[#allocation7 + $0x6] sm:$0x1]
    %v133 = vld [vmem:[#allocation7 + $0x8] sm:$0x1]
    %v134 = vld [vmem:[#allocation7 + $0xa] sm:$0x1]
    %v135 = vld [vmem:[#allocation7 + $0xc] sm:$0x1]
    %v136 = vld [vmem:[#allocation7 + $0xe] sm:$0x1]
    %v137 = vld [vmem:[#allocation7 + $0x10] sm:$0x1]
    %v138 = vld [vmem:[#allocation7 + $0x12] sm:$0x1]
    %v139 = vld [vmem:[#allocation7 + $0x14] sm:$0x1]
    %v140 = vld [vmem:[#allocation7 + $0x16] sm:$0x1]
    %v141 = vld [vmem:[#allocation7 + $0x18] sm:$0x1]
    %v142 = vld [vmem:[#allocation7 + $0x1a] sm:$0x1]
    %v143 = vld [vmem:[#allocation7 + $0x1c] sm:$0x1]
    %v144 = vld [vmem:[#allocation7 + $0x1e] sm:$0x1]
    %v145 = vld [vmem:[#allocation8] sm:$0xf]
    %v146 = vld [vmem:[#allocation8 + $0x4] sm:$0xf]
    %v147 = vld [vmem:[#allocation8 + $0x8] sm:$0xf]
    %v148 = vld [vmem:[#allocation8 + $0xc] sm:$0xf]
    %s149 = scalar_lea.vmem [#allocation8], 16
    %v150 = vld [vmem:[%s149] sm:$0xf]
    %v151 = vld [vmem:[%s149 + $0x4] sm:$0xf]
    %v152 = vld [vmem:[%s149 + $0x8] sm:$0xf]
    %v153 = vld [vmem:[%s149 + $0xc] sm:$0xf]
    %s154 = scalar_lea.vmem [#allocation8], 32
    %v155 = vld [vmem:[%s154] sm:$0xf]
    %v156 = vld [vmem:[%s154 + $0x4] sm:$0xf]
    %v157 = vld [vmem:[%s154 + $0x8] sm:$0xf]
    %v158 = vld [vmem:[%s154 + $0xc] sm:$0xf]
    %s159 = scalar_lea.vmem [#allocation8], 48
    %v160 = vld [vmem:[%s159] sm:$0xf]
    %v161 = vld [vmem:[%s159 + $0x4] sm:$0xf]
    %v162 = vld [vmem:[%s159 + $0x8] sm:$0xf]
    %v163 = vld [vmem:[%s159 + $0xc] sm:$0xf]
    %v164 = vpack.c.bf16 %v105, %v105
    %v165 = vpack.c.bf16 %v106, %v106
    %v166 = vpack.c.bf16 %v107, %v107
    %v167 = vpack.c.bf16 %v108, %v108
    %v168 = vpack.c.bf16 %v109, %v109
    %v169 = vpack.c.bf16 %v110, %v110
    %v170 = vpack.c.bf16 %v111, %v111
    %v171 = vpack.c.bf16 %v112, %v112
    %v172 = vperm.slane %v103, 0
    %v181 = vunpack.c.l.b16 %v164
    %v182 = vunpack.c.l.b16 %v165
    %v183 = vunpack.c.l.b16 %v166
    %v184 = vunpack.c.l.b16 %v167
    %v185 = vunpack.c.l.b16 %v168
    %v186 = vunpack.c.l.b16 %v169
    %v187 = vunpack.c.l.b16 %v170
    %v188 = vunpack.c.l.b16 %v171
    %v189 = vrot.slane %v182, 7
    %vm190 = vcmask 1041409
    %v191 = vsel %vm190, %v189, %v181
    %v192 = vrot.slane %v183, 6
    %vm193 = vcmask 1042434
    %v194 = vsel %vm193, %v192, %v191
    %v195 = vrot.slane %v184, 5
    %vm196 = vcmask 1043459
    %v197 = vsel %vm196, %v195, %v194
    %v198 = vrot.slane %v185, 4
    %vm199 = vcmask 1044484
    %v200 = vsel %vm199, %v198, %v197
    %v201 = vrot.slane %v186, 3
    %vm202 = vcmask 1045509
    %v203 = vsel %vm202, %v201, %v200
    %v204 = vrot.slane %v187, 2
    %vm205 = vcmask 1046534
    %v206 = vsel %vm205, %v204, %v203
    %v207 = vrot.slane %v188, 1
    %vm208 = vcmask 1047559
    %v209 = vsel %vm208, %v207, %v206
    %v210 = vpack.c.b16 %v209, %v209
    %v215 = vunpack.c.l.b16 %v145
    %v216 = vunpack.c.l.b16 %v146
    %v217 = vunpack.c.l.b16 %v147
    %v218 = vunpack.c.l.b16 %v148
    %v219 = vpack.c.b16 %v216, %v215
    %v220 = vpack.c.b16 %v218, %v217
    %vm223 = vcmask 261120
    %v225 = vsel %vm223, %v210, 0
    %227 = vmatpush.bf16.msra.mxu0 0
    %228 = vmatpush.bf16.msra.mxu0 0
    %229 = vmatpush.bf16.msra.mxu0 0
    %230 = vmatpush.bf16.msra.mxu0 0
    %231 = vmatpush.bf16.msra.mxu0 0
    %232 = vmatpush.bf16.msra.mxu0 0
    %233 = vmatpush.bf16.msra.mxu0 %v220
    %234 = vmatpush.bf16.msra.mxu0 %v219
    %235 = vmatmul.bf16.gmra.mxu0 %v225
    %v236 = vpop.f32.mrf.mxu0
    %v237 = vadd.f32 %v172, %v236
    %v238 = vpop.f32.mrf.mxu0
    %239 = vdwg.mxu0
    %v240 = vpack.c.bf16 %v113, %v113
    %v241 = vpack.c.bf16 %v114, %v114
    %v242 = vpack.c.bf16 %v115, %v115
    %v243 = vpack.c.bf16 %v116, %v116
    %v244 = vpack.c.bf16 %v117, %v117
    %v245 = vpack.c.bf16 %v118, %v118
    %v246 = vpack.c.bf16 %v119, %v119
    %v247 = vpack.c.bf16 %v120, %v120
    %v248 = vpack.c.bf16 %v121, %v121
    %v249 = vpack.c.bf16 %v122, %v122
    %v250 = vpack.c.bf16 %v123, %v123
    %v251 = vpack.c.bf16 %v124, %v124
    %v252 = vpack.c.bf16 %v125, %v125
    %v253 = vpack.c.bf16 %v126, %v126
    %v254 = vpack.c.bf16 %v127, %v127
    %v255 = vpack.c.bf16 %v128, %v128
    %v256 = vperm.slane %v103, 1
    %v273 = vunpack.c.l.b16 %v240
    %v274 = vunpack.c.l.b16 %v241
    %v275 = vunpack.c.l.b16 %v242
    %v276 = vunpack.c.l.b16 %v243
    %v277 = vunpack.c.l.b16 %v244
    %v278 = vunpack.c.l.b16 %v245
    %v279 = vunpack.c.l.b16 %v246
    %v280 = vunpack.c.l.b16 %v247
    %v281 = vunpack.c.l.b16 %v248
    %v282 = vunpack.c.l.b16 %v249
    %v283 = vunpack.c.l.b16 %v250
    %v284 = vunpack.c.l.b16 %v251
    %v285 = vunpack.c.l.b16 %v252
    %v286 = vunpack.c.l.b16 %v253
    %v287 = vunpack.c.l.b16 %v254
    %v288 = vunpack.c.l.b16 %v255
    %v289 = vrot.slane %v274, 7
    %v290 = vsel %vm190, %v289, %v273
    %v291 = vrot.slane %v275, 6
    %v292 = vsel %vm193, %v291, %v290
    %v293 = vrot.slane %v276, 5
    %v294 = vsel %vm196, %v293, %v292
    %v295 = vrot.slane %v277, 4
    %v296 = vsel %vm199, %v295, %v294
    %v297 = vrot.slane %v278, 3
    %v298 = vsel %vm202, %v297, %v296
    %v299 = vrot.slane %v279, 2
    %v300 = vsel %vm205, %v299, %v298
    %v301 = vrot.slane %v280, 1
    %v302 = vsel %vm208, %v301, %v300
    %v303 = vrot.slane %v282, 7
    %v304 = vsel %vm190, %v303, %v281
    %v305 = vrot.slane %v283, 6
    %v306 = vsel %vm193, %v305, %v304
    %v307 = vrot.slane %v284, 5
    %v308 = vsel %vm196, %v307, %v306
    %v309 = vrot.slane %v285, 4
    %v310 = vsel %vm199, %v309, %v308
    %v311 = vrot.slane %v286, 3
    %v312 = vsel %vm202, %v311, %v310
    %v313 = vrot.slane %v287, 2
    %v314 = vsel %vm205, %v313, %v312
    %v315 = vrot.slane %v288, 1
    %v316 = vsel %vm208, %v315, %v314
    %v317 = vpack.c.b16 %v316, %v302
    %v322 = vunpack.c.l.b16 %v150
    %v323 = vunpack.c.l.b16 %v151
    %v324 = vunpack.c.l.b16 %v152
    %v325 = vunpack.c.l.b16 %v153
    %v326 = vpack.c.b16 %v323, %v322
    %v327 = vpack.c.b16 %v325, %v324
    %v331 = vsel %vm223, %v317, 0
    %333 = vmatpush.bf16.msra.mxu0 0
    %334 = vmatpush.bf16.msra.mxu0 0
    %335 = vmatpush.bf16.msra.mxu0 0
    %336 = vmatpush.bf16.msra.mxu0 0
    %337 = vmatpush.bf16.msra.mxu0 0
    %338 = vmatpush.bf16.msra.mxu0 0
    %339 = vmatpush.bf16.msra.mxu0 %v327
    %340 = vmatpush.bf16.msra.mxu0 %v326
    %341 = vmatmul.bf16.gmra.mxu0 %v331
    %v342 = vpop.f32.mrf.mxu0
    %v343 = vadd.f32 %v256, %v342
    %v344 = vpop.f32.mrf.mxu0
    %v345 = vadd.f32 %v256, %v344
    %346 = vdwg.mxu0
    %v347 = vpack.c.bf16 %v129, %v129
    %v348 = vpack.c.bf16 %v130, %v130
    %v349 = vpack.c.bf16 %v131, %v131
    %v350 = vpack.c.bf16 %v132, %v132
    %v351 = vpack.c.bf16 %v133, %v133
    %v352 = vpack.c.bf16 %v134, %v134
    %v353 = vpack.c.bf16 %v135, %v135
    %v354 = vpack.c.bf16 %v136, %v136
    %v355 = vpack.c.bf16 %v137, %v137
    %v356 = vpack.c.bf16 %v138, %v138
    %v357 = vpack.c.bf16 %v139, %v139
    %v358 = vpack.c.bf16 %v140, %v140
    %v359 = vpack.c.bf16 %v141, %v141
    %v360 = vpack.c.bf16 %v142, %v142
    %v361 = vpack.c.bf16 %v143, %v143
    %v362 = vpack.c.bf16 %v144, %v144
    %v363 = vperm.slane %v103, 2
    %v380 = vunpack.c.l.b16 %v347
    %v381 = vunpack.c.l.b16 %v348
    %v382 = vunpack.c.l.b16 %v349
    %v383 = vunpack.c.l.b16 %v350
    %v384 = vunpack.c.l.b16 %v351
    %v385 = vunpack.c.l.b16 %v352
    %v386 = vunpack.c.l.b16 %v353
    %v387 = vunpack.c.l.b16 %v354
    %v388 = vunpack.c.l.b16 %v355
    %v389 = vunpack.c.l.b16 %v356
    %v390 = vunpack.c.l.b16 %v357
    %v391 = vunpack.c.l.b16 %v358
    %v392 = vunpack.c.l.b16 %v359
    %v393 = vunpack.c.l.b16 %v360
    %v394 = vunpack.c.l.b16 %v361
    %v395 = vunpack.c.l.b16 %v362
    %v396 = vrot.slane %v381, 7
    %v397 = vsel %vm190, %v396, %v380
    %v398 = vrot.slane %v382, 6
    %v399 = vsel %vm193, %v398, %v397
    %v400 = vrot.slane %v383, 5
    %v401 = vsel %vm196, %v400, %v399
    %v402 = vrot.slane %v384, 4
    %v403 = vsel %vm199, %v402, %v401
    %v404 = vrot.slane %v385, 3
    %v405 = vsel %vm202, %v404, %v403
    %v406 = vrot.slane %v386, 2
    %v407 = vsel %vm205, %v406, %v405
    %v408 = vrot.slane %v387, 1
    %v409 = vsel %vm208, %v408, %v407
    %v410 = vrot.slane %v389, 7
    %v411 = vsel %vm190, %v410, %v388
    %v412 = vrot.slane %v390, 6
    %v413 = vsel %vm193, %v412, %v411
    %v414 = vrot.slane %v391, 5
    %v415 = vsel %vm196, %v414, %v413
    %v416 = vrot.slane %v392, 4
    %v417 = vsel %vm199, %v416, %v415
    %v418 = vrot.slane %v393, 3
    %v419 = vsel %vm202, %v418, %v417
    %v420 = vrot.slane %v394, 2
    %v421 = vsel %vm205, %v420, %v419
    %v422 = vrot.slane %v395, 1
    %v423 = vsel %vm208, %v422, %v421
    %v424 = vpack.c.b16 %v423, %v409
    %v429 = vunpack.c.l.b16 %v155
    %v430 = vunpack.c.l.b16 %v156
    %v431 = vunpack.c.l.b16 %v157
    %v432 = vunpack.c.l.b16 %v158
    %v433 = vpack.c.b16 %v430, %v429
    %v434 = vpack.c.b16 %v432, %v431
    %v438 = vsel %vm223, %v424, 0
    %440 = vmatpush.bf16.msra.mxu0 0
    %441 = vmatpush.bf16.msra.mxu0 0
    %442 = vmatpush.bf16.msra.mxu0 0
    %443 = vmatpush.bf16.msra.mxu0 0
    %444 = vmatpush.bf16.msra.mxu0 0
    %445 = vmatpush.bf16.msra.mxu0 0
    %446 = vmatpush.bf16.msra.mxu0 %v434
    %447 = vmatpush.bf16.msra.mxu0 %v433
    %448 = vmatmul.bf16.gmra.mxu0 %v438
    %v449 = vpop.f32.mrf.mxu0
    %v450 = vadd.f32 %v363, %v449
    %v451 = vpop.f32.mrf.mxu0
    %v452 = vadd.f32 %v363, %v451
    %453 = vdwg.mxu0
    %v454 = vmul.f32 %v237, 0.35355338
    %456 = vrot.lane.b32.xlu0 %v454, 120
    %v457 = vpop.permute.xlu0 %456
    %459 = vrot.lane.b32.xlu0 %v454, 112
    %v460 = vpop.permute.xlu0 %459
    %462 = vrot.lane.b32.xlu0 %v454, 104
    %v463 = vpop.permute.xlu0 %462
    %467 = vrot.lane.b32.xlu0 %v343, 120
    %v468 = vpop.permute.xlu0 %467
    %469 = vrot.lane.b32.xlu0 %v345, 120
    %v470 = vpop.permute.xlu0 %469
    %473 = vrot.lane.b32.xlu0 %v343, 112
    %v474 = vpop.permute.xlu0 %473
    %475 = vrot.lane.b32.xlu0 %v345, 112
    %v476 = vpop.permute.xlu0 %475
    %479 = vrot.lane.b32.xlu0 %v343, 104
    %v480 = vpop.permute.xlu0 %479
    %481 = vrot.lane.b32.xlu0 %v345, 104
    %v482 = vpop.permute.xlu0 %481
    %487 = vrot.lane.b32.xlu0 %v450, 120
    %v488 = vpop.permute.xlu0 %487
    %489 = vrot.lane.b32.xlu0 %v452, 120
    %v490 = vpop.permute.xlu0 %489
    %493 = vrot.lane.b32.xlu0 %v450, 112
    %v494 = vpop.permute.xlu0 %493
    %495 = vrot.lane.b32.xlu0 %v452, 112
    %v496 = vpop.permute.xlu0 %495
    %499 = vrot.lane.b32.xlu0 %v450, 104
    %v500 = vpop.permute.xlu0 %499
    %501 = vrot.lane.b32.xlu0 %v452, 104
    %v502 = vpop.permute.xlu0 %501
    %v505 = vpack.c.bf16 %v454, %v454
    %v506 = vpack.c.bf16 %v457, %v457
    %v507 = vpack.c.bf16 %v460, %v460
    %v508 = vpack.c.bf16 %v463, %v463
    %v509 = vpack.c.bf16 %v343, %v343
    %v510 = vpack.c.bf16 %v345, %v345
    %v511 = vpack.c.bf16 %v468, %v468
    %v512 = vpack.c.bf16 %v470, %v470
    %v513 = vpack.c.bf16 %v474, %v474
    %v514 = vpack.c.bf16 %v476, %v476
    %v515 = vpack.c.bf16 %v480, %v480
    %v516 = vpack.c.bf16 %v482, %v482
    %v519 = vunpack.c.l.b16 %v509
    %v520 = vunpack.c.l.b16 %v510
    %v521 = vpack.c.b16 %v520, %v519
    %vm522 = vcmask 64512
    %v524 = vsel %vm522, %v505, 0
    %v527 = vsel %vm522, %v521, 0
    %529 = vmatpush.bf16.xpose.msra.mxu0 0
    %530 = vmatpush.bf16.xpose.msra.mxu0 0
    %531 = vmatpush.bf16.xpose.msra.mxu0 0
    %532 = vmatpush.bf16.xpose.msra.mxu0 0
    %533 = vmatpush.bf16.xpose.msra.mxu0 0
    %534 = vmatpush.bf16.xpose.msra.mxu0 0
    %535 = vmatpush.bf16.xpose.msra.mxu0 0
    %536 = vmatpush.bf16.xpose.msra.mxu0 %v527
    %537 = vmatmul.bf16.gmra.mxu0 %v524
    %v538 = vpop.f32.mrf.mxu0
    %v539 = vadd.f32 0.0, %v538
    %v540 = vpop.f32.mrf.mxu0
    %541 = vdwg.mxu0
    %v544 = vunpack.c.l.b16 %v511
    %v545 = vunpack.c.l.b16 %v512
    %v546 = vpack.c.b16 %v545, %v544
    %v548 = vsel %vm522, %v506, 0
    %v551 = vsel %vm522, %v546, 0
    %553 = vmatpush.bf16.xpose.msra.mxu0 0
    %554 = vmatpush.bf16.xpose.msra.mxu0 0
    %555 = vmatpush.bf16.xpose.msra.mxu0 0
    %556 = vmatpush.bf16.xpose.msra.mxu0 0
    %557 = vmatpush.bf16.xpose.msra.mxu0 0
    %558 = vmatpush.bf16.xpose.msra.mxu0 0
    %559 = vmatpush.bf16.xpose.msra.mxu0 0
    %560 = vmatpush.bf16.xpose.msra.mxu0 %v551
    %561 = vmatmul.bf16.gmra.mxu0 %v548
    %v562 = vpop.f32.mrf.mxu0
    %v563 = vadd.f32 0.0, %v562
    %v564 = vpop.f32.mrf.mxu0
    %565 = vdwg.mxu0
    %v568 = vunpack.c.l.b16 %v513
    %v569 = vunpack.c.l.b16 %v514
    %v570 = vpack.c.b16 %v569, %v568
    %v572 = vsel %vm522, %v507, 0
    %v575 = vsel %vm522, %v570, 0
    %577 = vmatpush.bf16.xpose.msra.mxu0 0
    %578 = vmatpush.bf16.xpose.msra.mxu0 0
    %579 = vmatpush.bf16.xpose.msra.mxu0 0
    %580 = vmatpush.bf16.xpose.msra.mxu0 0
    %581 = vmatpush.bf16.xpose.msra.mxu0 0
    %582 = vmatpush.bf16.xpose.msra.mxu0 0
    %583 = vmatpush.bf16.xpose.msra.mxu0 0
    %584 = vmatpush.bf16.xpose.msra.mxu0 %v575
    %585 = vmatmul.bf16.gmra.mxu0 %v572
    %v586 = vpop.f32.mrf.mxu0
    %v587 = vadd.f32 0.0, %v586
    %v588 = vpop.f32.mrf.mxu0
    %589 = vdwg.mxu0
    %v592 = vunpack.c.l.b16 %v515
    %v593 = vunpack.c.l.b16 %v516
    %v594 = vpack.c.b16 %v593, %v592
    %v596 = vsel %vm522, %v508, 0
    %v599 = vsel %vm522, %v594, 0
    %601 = vmatpush.bf16.xpose.msra.mxu0 0
    %602 = vmatpush.bf16.xpose.msra.mxu0 0
    %603 = vmatpush.bf16.xpose.msra.mxu0 0
    %604 = vmatpush.bf16.xpose.msra.mxu0 0
    %605 = vmatpush.bf16.xpose.msra.mxu0 0
    %606 = vmatpush.bf16.xpose.msra.mxu0 0
    %607 = vmatpush.bf16.xpose.msra.mxu0 0
    %608 = vmatpush.bf16.xpose.msra.mxu0 %v599
    %609 = vmatmul.bf16.gmra.mxu0 %v596
    %v610 = vpop.f32.mrf.mxu0
    %v611 = vadd.f32 0.0, %v610
    %v612 = vpop.f32.mrf.mxu0
    %613 = vdwg.mxu0
    %vm614 = vcmask 130048
    %v615 = vsel %vm614, %v539, -inf
    %616 = vmax.xlane.f32.xlu0 %v615
    %v617 = vpop.xlane.xlu0 %616
    %v618 = vsel %vm614, %v563, -inf
    %619 = vmax.xlane.f32.xlu0 %v618
    %v620 = vpop.xlane.xlu0 %619
    %v621 = vsel %vm614, %v587, -inf
    %622 = vmax.xlane.f32.xlu0 %v621
    %v623 = vpop.xlane.xlu0 %622
    %v624 = vsel %vm614, %v611, -inf
    %625 = vmax.xlane.f32.xlu0 %v624
    %v626 = vpop.xlane.xlu0 %625
    %v627 = vsub.f32 %v539, %v617
    %v628 = vsub.f32 %v563, %v620
    %v629 = vsub.f32 %v587, %v623
    %v630 = vsub.f32 %v611, %v626
    %v631 = vmul.f32 %v627, 1.442695
    %v632 = vpow.pop %v631
    %v633 = vmul.f32 %v628, 1.442695
    %v634 = vpow.pop %v633
    %v635 = vmul.f32 %v629, 1.442695
    %v636 = vpow.pop %v635
    %v637 = vmul.f32 %v630, 1.442695
    %v638 = vpow.pop %v637
    %v639 = vsel %vm614, %v632, 0.0
    %640 = vadd.xlane.f32.xlu0 %v639
    %v641 = vpop.xlane.xlu0 %640
    %v642 = vsel %vm614, %v634, 0.0
    %643 = vadd.xlane.f32.xlu0 %v642
    %v644 = vpop.xlane.xlu0 %643
    %v645 = vsel %vm614, %v636, 0.0
    %646 = vadd.xlane.f32.xlu0 %v645
    %v647 = vpop.xlane.xlu0 %646
    %v648 = vsel %vm614, %v638, 0.0
    %649 = vadd.xlane.f32.xlu0 %v648
    %v650 = vpop.xlane.xlu0 %649
    %v651 = vpack.c.bf16 %v632, %v632
    %v652 = vpack.c.bf16 %v634, %v634
    %v653 = vpack.c.bf16 %v636, %v636
    %v654 = vpack.c.bf16 %v638, %v638
    %v655 = vpack.c.bf16 %v450, %v450
    %v656 = vpack.c.bf16 %v452, %v452
    %v657 = vpack.c.bf16 %v488, %v488
    %v658 = vpack.c.bf16 %v490, %v490
    %v659 = vpack.c.bf16 %v494, %v494
    %v660 = vpack.c.bf16 %v496, %v496
    %v661 = vpack.c.bf16 %v500, %v500
    %v662 = vpack.c.bf16 %v502, %v502
    %v665 = vunpack.c.l.b16 %v655
    %v666 = vunpack.c.l.b16 %v656
    %v667 = vpack.c.b16 %v666, %v665
    %v670 = vsel %vm614, %v651, 0
    %672 = vmatpush.bf16.msra.mxu0 0
    %673 = vmatpush.bf16.msra.mxu0 0
    %674 = vmatpush.bf16.msra.mxu0 0
    %675 = vmatpush.bf16.msra.mxu0 0
    %676 = vmatpush.bf16.msra.mxu0 0
    %677 = vmatpush.bf16.msra.mxu0 0
    %678 = vmatpush.bf16.msra.mxu0 0
    %679 = vmatpush.bf16.msra.mxu0 %v667
    %680 = vmatmul.bf16.gmra.mxu0 %v670
    %v681 = vpop.f32.mrf.mxu0
    %v682 = vadd.f32 0.0, %v681
    %v683 = vpop.f32.mrf.mxu0
    %684 = vdwg.mxu0
    %v687 = vunpack.c.l.b16 %v657
    %v688 = vunpack.c.l.b16 %v658
    %v689 = vpack.c.b16 %v688, %v687
    %v692 = vsel %vm614, %v652, 0
    %694 = vmatpush.bf16.msra.mxu0 0
    %695 = vmatpush.bf16.msra.mxu0 0
    %696 = vmatpush.bf16.msra.mxu0 0
    %697 = vmatpush.bf16.msra.mxu0 0
    %698 = vmatpush.bf16.msra.mxu0 0
    %699 = vmatpush.bf16.msra.mxu0 0
    %700 = vmatpush.bf16.msra.mxu0 0
    %701 = vmatpush.bf16.msra.mxu0 %v689
    %702 = vmatmul.bf16.gmra.mxu0 %v692
    %v703 = vpop.f32.mrf.mxu0
    %v704 = vadd.f32 0.0, %v703
    %v705 = vpop.f32.mrf.mxu0
    %706 = vdwg.mxu0
    %v709 = vunpack.c.l.b16 %v659
    %v710 = vunpack.c.l.b16 %v660
    %v711 = vpack.c.b16 %v710, %v709
    %v714 = vsel %vm614, %v653, 0
    %716 = vmatpush.bf16.msra.mxu0 0
    %717 = vmatpush.bf16.msra.mxu0 0
    %718 = vmatpush.bf16.msra.mxu0 0
    %719 = vmatpush.bf16.msra.mxu0 0
    %720 = vmatpush.bf16.msra.mxu0 0
    %721 = vmatpush.bf16.msra.mxu0 0
    %722 = vmatpush.bf16.msra.mxu0 0
    %723 = vmatpush.bf16.msra.mxu0 %v711
    %724 = vmatmul.bf16.gmra.mxu0 %v714
    %v725 = vpop.f32.mrf.mxu0
    %v726 = vadd.f32 0.0, %v725
    %v727 = vpop.f32.mrf.mxu0
    %728 = vdwg.mxu0
    %v731 = vunpack.c.l.b16 %v661
    %v732 = vunpack.c.l.b16 %v662
    %v733 = vpack.c.b16 %v732, %v731
    %v736 = vsel %vm614, %v654, 0
    %738 = vmatpush.bf16.msra.mxu0 0
    %739 = vmatpush.bf16.msra.mxu0 0
    %740 = vmatpush.bf16.msra.mxu0 0
    %741 = vmatpush.bf16.msra.mxu0 0
    %742 = vmatpush.bf16.msra.mxu0 0
    %743 = vmatpush.bf16.msra.mxu0 0
    %744 = vmatpush.bf16.msra.mxu0 0
    %745 = vmatpush.bf16.msra.mxu0 %v733
    %746 = vmatmul.bf16.gmra.mxu0 %v736
    %v747 = vpop.f32.mrf.mxu0
    %v748 = vadd.f32 0.0, %v747
    %v749 = vpop.f32.mrf.mxu0
    %750 = vdwg.mxu0
    %v751 = vrcp.pop %v641
    %v752 = vrcp.pop %v644
    %v753 = vrcp.pop %v647
    %v754 = vrcp.pop %v650
    %v755 = vmul.f32 %v682, %v751
    %v756 = vmul.f32 %v704, %v752
    %v757 = vmul.f32 %v726, %v753
    %v758 = vmul.f32 %v748, %v754
    %v759 = vpack.c.bf16 %v755, %v755
    %v761 = vsel %vm522, %v759, 0
    %vm763 = vcmask 1043456
    %v765 = vsel %vm763, %v160, 0
    %767 = vmatpush.bf16.msra.mxu0 0
    %768 = vmatpush.bf16.msra.mxu0 0
    %769 = vmatpush.bf16.msra.mxu0 0
    %770 = vmatpush.bf16.msra.mxu0 0
    %771 = vmatpush.bf16.msra.mxu0 0
    %772 = vmatpush.bf16.msra.mxu0 0
    %773 = vmatpush.bf16.msra.mxu0 0
    %774 = vmatpush.bf16.msra.mxu0 %v765
    %775 = vmatmul.bf16.gmra.mxu0 %v761
    %v776 = vpop.f32.mrf.mxu0
    %v777 = vadd.f32 0.0, %v776
    %v778 = vpop.f32.mrf.mxu0
    %779 = vdwg.mxu0
    %v780 = vperm.slane %v103, 3
    %v781 = vadd.f32 %v780, %v777
    %v782 = vpack.c.bf16 %v756, %v756
    %v784 = vsel %vm522, %v782, 0
    %v787 = vsel %vm763, %v161, 0
    %789 = vmatpush.bf16.msra.mxu0 0
    %790 = vmatpush.bf16.msra.mxu0 0
    %791 = vmatpush.bf16.msra.mxu0 0
    %792 = vmatpush.bf16.msra.mxu0 0
    %793 = vmatpush.bf16.msra.mxu0 0
    %794 = vmatpush.bf16.msra.mxu0 0
    %795 = vmatpush.bf16.msra.mxu0 0
    %796 = vmatpush.bf16.msra.mxu0 %v787
    %797 = vmatmul.bf16.gmra.mxu0 %v784
    %v798 = vpop.f32.mrf.mxu0
    %v799 = vadd.f32 0.0, %v798
    %v800 = vpop.f32.mrf.mxu0
    %801 = vdwg.mxu0
    %v802 = vadd.f32 %v781, %v799
    %v803 = vpack.c.bf16 %v757, %v757
    %v805 = vsel %vm522, %v803, 0
    %v808 = vsel %vm763, %v162, 0
    %810 = vmatpush.bf16.msra.mxu0 0
    %811 = vmatpush.bf16.msra.mxu0 0
    %812 = vmatpush.bf16.msra.mxu0 0
    %813 = vmatpush.bf16.msra.mxu0 0
    %814 = vmatpush.bf16.msra.mxu0 0
    %815 = vmatpush.bf16.msra.mxu0 0
    %816 = vmatpush.bf16.msra.mxu0 0
    %817 = vmatpush.bf16.msra.mxu0 %v808
    %818 = vmatmul.bf16.gmra.mxu0 %v805
    %v819 = vpop.f32.mrf.mxu0
    %v820 = vadd.f32 0.0, %v819
    %v821 = vpop.f32.mrf.mxu0
    %822 = vdwg.mxu0
    %v823 = vadd.f32 %v802, %v820
    %v824 = vpack.c.bf16 %v758, %v758
    %v826 = vsel %vm522, %v824, 0
    %v829 = vsel %vm763, %v163, 0
    %831 = vmatpush.bf16.msra.mxu0 0
    %832 = vmatpush.bf16.msra.mxu0 0
    %833 = vmatpush.bf16.msra.mxu0 0
    %834 = vmatpush.bf16.msra.mxu0 0
    %835 = vmatpush.bf16.msra.mxu0 0
    %836 = vmatpush.bf16.msra.mxu0 0
    %837 = vmatpush.bf16.msra.mxu0 0
    %838 = vmatpush.bf16.msra.mxu0 %v829
    %839 = vmatmul.bf16.gmra.mxu0 %v826
    %v840 = vpop.f32.mrf.mxu0
    %v841 = vadd.f32 0.0, %v840
    %v842 = vpop.f32.mrf.mxu0
    %843 = vdwg.mxu0
    %v844 = vadd.f32 %v823, %v841
    %v846 = vrot.slane %v844, 1
    %v847 = vrot.slane %v844, 2
    %v848 = vrot.slane %v844, 3
    %v849 = vrot.slane %v844, 4
    %v850 = vrot.slane %v844, 5
    %v851 = vrot.slane %v844, 6
    %v852 = vrot.slane %v844, 7
    %v861 = vadd.f32 %v105, %v844
    %v862 = vadd.f32 %v106, %v846
    %v863 = vadd.f32 %v107, %v847
    %v864 = vadd.f32 %v108, %v848
    %v865 = vadd.f32 %v109, %v849
    %v866 = vadd.f32 %v110, %v850
    %v867 = vadd.f32 %v111, %v851
    %v868 = vadd.f32 %v112, %v852
    %v877 = vrot.slane %v862, 7
    %v878 = vsel %vm190, %v877, %v861
    %v879 = vrot.slane %v863, 6
    %v880 = vsel %vm193, %v879, %v878
    %v881 = vrot.slane %v864, 5
    %v882 = vsel %vm196, %v881, %v880
    %v883 = vrot.slane %v865, 4
    %v884 = vsel %vm199, %v883, %v882
    %v885 = vrot.slane %v866, 3
    %v886 = vsel %vm202, %v885, %v884
    %v887 = vrot.slane %v867, 2
    %v888 = vsel %vm205, %v887, %v886
    %v889 = vrot.slane %v868, 1
    %v890 = vsel %vm208, %v889, %v888
    %v892 = vsel %vm223, %v890, 0.0
    %893 = vadd.xlane.f32.xlu0 %v892
    %v894 = vpop.xlane.xlu0 %893
    %v895 = vrcp.pop 32.0
    %v896 = vmul.f32 32.0, %v895
    %v897 = vsub.f32 1.0, %v896
    %v898 = vmul.f32 %v895, %v897
    %v899 = vadd.f32 %v895, %v898
    %vm900 = vweird.f32 %v895
    %v901 = vsel %vm900, %v895, %v899
    %v902 = vmul.f32 %v894, %v901
    %v904 = vrot.slane %v902, 1
    %v905 = vrot.slane %v902, 2
    %v906 = vrot.slane %v902, 3
    %v907 = vrot.slane %v902, 4
    %v908 = vrot.slane %v902, 5
    %v909 = vrot.slane %v902, 6
    %v910 = vrot.slane %v902, 7
    %v919 = vsub.f32 %v861, %v902
    %v920 = vsub.f32 %v862, %v904
    %v921 = vsub.f32 %v863, %v905
    %v922 = vsub.f32 %v864, %v906
    %v923 = vsub.f32 %v865, %v907
    %v924 = vsub.f32 %v866, %v908
    %v925 = vsub.f32 %v867, %v909
    %v926 = vsub.f32 %v868, %v910
    %v927 = vmul.f32 %v919, %v919
    %v928 = vmul.f32 %v920, %v920
    %v929 = vmul.f32 %v921, %v921
    %v930 = vmul.f32 %v922, %v922
    %v931 = vmul.f32 %v923, %v923
    %v932 = vmul.f32 %v924, %v924
    %v933 = vmul.f32 %v925, %v925
    %v934 = vmul.f32 %v926, %v926
    %v943 = vrot.slane %v928, 7
    %v944 = vsel %vm190, %v943, %v927
    %v945 = vrot.slane %v929, 6
    %v946 = vsel %vm193, %v945, %v944
    %v947 = vrot.slane %v930, 5
    %v948 = vsel %vm196, %v947, %v946
    %v949 = vrot.slane %v931, 4
    %v950 = vsel %vm199, %v949, %v948
    %v951 = vrot.slane %v932, 3
    %v952 = vsel %vm202, %v951, %v950
    %v953 = vrot.slane %v933, 2
    %v954 = vsel %vm205, %v953, %v952
    %v955 = vrot.slane %v934, 1
    %v956 = vsel %vm208, %v955, %v954
    %v958 = vsel %vm223, %v956, 0.0
    %959 = vadd.xlane.f32.xlu0 %v958
    %v960 = vpop.xlane.xlu0 %959
    %v961 = vmul.f32 %v960, %v901
    %v962 = vadd.f32 %v961, 1e-05
    %v963 = vrsqrt.pop %v962
    %v964 = vmul.f32 %v963, %v962
    %v965 = vmul.f32 %v964, %v963
    %v966 = vmul.f32 0.5, %v965
    %v967 = vsub.f32 1.5, %v966
    %v968 = vmul.f32 %v963, %v967
    %vm969 = vweird.f32 %v962
    %vm970 = vweird.f32 %v963
    %vm971 = vmor %vm969, %vm970
    %v972 = vsel %vm971, %v963, %v968
    %v974 = vrot.slane %v972, 1
    %v975 = vrot.slane %v972, 2
    %v976 = vrot.slane %v972, 3
    %v977 = vrot.slane %v972, 4
    %v978 = vrot.slane %v972, 5
    %v979 = vrot.slane %v972, 6
    %v980 = vrot.slane %v972, 7
    %v989 = vmul.f32 %v919, %v972
    %v990 = vmul.f32 %v920, %v974
    %v991 = vmul.f32 %v921, %v975
    %v992 = vmul.f32 %v922, %v976
    %v993 = vmul.f32 %v923, %v977
    %v994 = vmul.f32 %v924, %v978
    %v995 = vmul.f32 %v925, %v979
    %v996 = vmul.f32 %v926, %v980
    %v997 = vperm.slane %v104, 0
    %v998 = vmul.f32 %v989, %v997
    %v999 = vmul.f32 %v990, %v997
    %v1000 = vmul.f32 %v991, %v997
    %v1001 = vmul.f32 %v992, %v997
    %v1002 = vmul.f32 %v993, %v997
    %v1003 = vmul.f32 %v994, %v997
    %v1004 = vmul.f32 %v995, %v997
    %v1005 = vmul.f32 %v996, %v997
    %v1006 = vperm.slane %v104, 1
    %v1007 = vadd.f32 %v998, %v1006
    %v1008 = vadd.f32 %v999, %v1006
    %v1009 = vadd.f32 %v1000, %v1006
    %v1010 = vadd.f32 %v1001, %v1006
    %v1011 = vadd.f32 %v1002, %v1006
    %v1012 = vadd.f32 %v1003, %v1006
    %v1013 = vadd.f32 %v1004, %v1006
    %v1014 = vadd.f32 %v1005, %v1006
    %s1015 = scalar_lea.vmem [#allocation8], 64
    %v1016 = vld [vmem:[%s1015] sm:$0xf]
    %v1017 = vld [vmem:[%s1015 + $0x4] sm:$0xf]
    %v1018 = vld [vmem:[%s1015 + $0x8] sm:$0xf]
    %v1019 = vld [vmem:[%s1015 + $0xc] sm:$0xf]
    %s1020 = scalar_lea.vmem [#allocation8], 80
    %v1021 = vld [vmem:[%s1020] sm:$0xf]
    %v1022 = vld [vmem:[%s1020 + $0x4] sm:$0xf]
    %v1023 = vld [vmem:[%s1020 + $0x8] sm:$0xf]
    %v1024 = vld [vmem:[%s1020 + $0xc] sm:$0xf]
    %s1025 = scalar_lea.vmem [#allocation8], 96
    %v1026 = vld [vmem:[%s1025] sm:$0xf]
    %v1027 = vld [vmem:[%s1025 + $0x4] sm:$0xf]
    %v1028 = vld [vmem:[%s1025 + $0x8] sm:$0xf]
    %v1029 = vld [vmem:[%s1025 + $0xc] sm:$0xf]
    %s1030 = scalar_lea.vmem [#allocation8], 112
    %v1031 = vld [vmem:[%s1030] sm:$0xf]
    %v1032 = vld [vmem:[%s1030 + $0x4] sm:$0xf]
    %v1033 = vld [vmem:[%s1030 + $0x8] sm:$0xf]
    %v1034 = vld [vmem:[%s1030 + $0xc] sm:$0xf]
    %v1035 = vperm.slane %v103, 4
    %v1040 = vunpack.c.l.b16 %v1016
    %v1041 = vunpack.c.l.b16 %v1017
    %v1042 = vunpack.c.l.b16 %v1018
    %v1043 = vunpack.c.l.b16 %v1019
    %v1044 = vpack.c.b16 %v1041, %v1040
    %v1045 = vpack.c.b16 %v1043, %v1042
    %1048 = vmatpush.bf16.msra.mxu0 0
    %1049 = vmatpush.bf16.msra.mxu0 0
    %1050 = vmatpush.bf16.msra.mxu0 0
    %1051 = vmatpush.bf16.msra.mxu0 0
    %1052 = vmatpush.bf16.msra.mxu0 0
    %1053 = vmatpush.bf16.msra.mxu0 0
    %1054 = vmatpush.bf16.msra.mxu0 %v1045
    %1055 = vmatpush.bf16.msra.mxu0 %v1044
    %1056 = vmatmul.bf16.gmra.mxu0 %v331
    %v1057 = vpop.f32.mrf.mxu0
    %v1058 = vadd.f32 %v1035, %v1057
    %v1059 = vpop.f32.mrf.mxu0
    %v1060 = vadd.f32 %v1035, %v1059
    %1061 = vdwg.mxu0
    %v1062 = vpack.c.bf16 %v1007, %v1007
    %v1063 = vpack.c.bf16 %v1008, %v1008
    %v1064 = vpack.c.bf16 %v1009, %v1009
    %v1065 = vpack.c.bf16 %v1010, %v1010
    %v1066 = vpack.c.bf16 %v1011, %v1011
    %v1067 = vpack.c.bf16 %v1012, %v1012
    %v1068 = vpack.c.bf16 %v1013, %v1013
    %v1069 = vpack.c.bf16 %v1014, %v1014
    %v1070 = vperm.slane %v103, 5
    %v1079 = vunpack.c.l.b16 %v1062
    %v1080 = vunpack.c.l.b16 %v1063
    %v1081 = vunpack.c.l.b16 %v1064
    %v1082 = vunpack.c.l.b16 %v1065
    %v1083 = vunpack.c.l.b16 %v1066
    %v1084 = vunpack.c.l.b16 %v1067
    %v1085 = vunpack.c.l.b16 %v1068
    %v1086 = vunpack.c.l.b16 %v1069
    %v1087 = vrot.slane %v1080, 7
    %v1088 = vsel %vm190, %v1087, %v1079
    %v1089 = vrot.slane %v1081, 6
    %v1090 = vsel %vm193, %v1089, %v1088
    %v1091 = vrot.slane %v1082, 5
    %v1092 = vsel %vm196, %v1091, %v1090
    %v1093 = vrot.slane %v1083, 4
    %v1094 = vsel %vm199, %v1093, %v1092
    %v1095 = vrot.slane %v1084, 3
    %v1096 = vsel %vm202, %v1095, %v1094
    %v1097 = vrot.slane %v1085, 2
    %v1098 = vsel %vm205, %v1097, %v1096
    %v1099 = vrot.slane %v1086, 1
    %v1100 = vsel %vm208, %v1099, %v1098
    %v1101 = vpack.c.b16 %v1100, %v1100
    %v1106 = vunpack.c.l.b16 %v1021
    %v1107 = vunpack.c.l.b16 %v1022
    %v1108 = vunpack.c.l.b16 %v1023
    %v1109 = vunpack.c.l.b16 %v1024
    %v1110 = vpack.c.b16 %v1107, %v1106
    %v1111 = vpack.c.b16 %v1109, %v1108
    %v1115 = vsel %vm223, %v1101, 0
    %1117 = vmatpush.bf16.msra.mxu0 0
    %1118 = vmatpush.bf16.msra.mxu0 0
    %1119 = vmatpush.bf16.msra.mxu0 0
    %1120 = vmatpush.bf16.msra.mxu0 0
    %1121 = vmatpush.bf16.msra.mxu0 0
    %1122 = vmatpush.bf16.msra.mxu0 0
    %1123 = vmatpush.bf16.msra.mxu0 %v1111
    %1124 = vmatpush.bf16.msra.mxu0 %v1110
    %1125 = vmatmul.bf16.gmra.mxu0 %v1115
    %v1126 = vpop.f32.mrf.mxu0
    %v1127 = vadd.f32 %v1070, %v1126
    %v1128 = vpop.f32.mrf.mxu0
    %1129 = vdwg.mxu0
    %v1130 = vperm.slane %v103, 6
    %v1135 = vunpack.c.l.b16 %v1026
    %v1136 = vunpack.c.l.b16 %v1027
    %v1137 = vunpack.c.l.b16 %v1028
    %v1138 = vunpack.c.l.b16 %v1029
    %v1139 = vpack.c.b16 %v1136, %v1135
    %v1140 = vpack.c.b16 %v1138, %v1137
    %1143 = vmatpush.bf16.msra.mxu0 0
    %1144 = vmatpush.bf16.msra.mxu0 0
    %1145 = vmatpush.bf16.msra.mxu0 0
    %1146 = vmatpush.bf16.msra.mxu0 0
    %1147 = vmatpush.bf16.msra.mxu0 0
    %1148 = vmatpush.bf16.msra.mxu0 0
    %1149 = vmatpush.bf16.msra.mxu0 %v1140
    %1150 = vmatpush.bf16.msra.mxu0 %v1139
    %1151 = vmatmul.bf16.gmra.mxu0 %v1115
    %v1152 = vpop.f32.mrf.mxu0
    %v1153 = vadd.f32 %v1130, %v1152
    %v1154 = vpop.f32.mrf.mxu0
    %1155 = vdwg.mxu0
    %v1156 = vmul.f32 %v1058, 0.35355338
    %v1157 = vmul.f32 %v1060, 0.35355338
    %1160 = vrot.lane.b32.xlu0 %v1156, 120
    %v1161 = vpop.permute.xlu0 %1160
    %1162 = vrot.lane.b32.xlu0 %v1157, 120
    %v1163 = vpop.permute.xlu0 %1162
    %1166 = vrot.lane.b32.xlu0 %v1156, 112
    %v1167 = vpop.permute.xlu0 %1166
    %1168 = vrot.lane.b32.xlu0 %v1157, 112
    %v1169 = vpop.permute.xlu0 %1168
    %1172 = vrot.lane.b32.xlu0 %v1156, 104
    %v1173 = vpop.permute.xlu0 %1172
    %1174 = vrot.lane.b32.xlu0 %v1157, 104
    %v1175 = vpop.permute.xlu0 %1174
    %1179 = vrot.lane.b32.xlu0 %v1127, 120
    %v1180 = vpop.permute.xlu0 %1179
    %1182 = vrot.lane.b32.xlu0 %v1127, 112
    %v1183 = vpop.permute.xlu0 %1182
    %1185 = vrot.lane.b32.xlu0 %v1127, 104
    %v1186 = vpop.permute.xlu0 %1185
    %1189 = vrot.lane.b32.xlu0 %v1153, 120
    %v1190 = vpop.permute.xlu0 %1189
    %1192 = vrot.lane.b32.xlu0 %v1153, 112
    %v1193 = vpop.permute.xlu0 %1192
    %1195 = vrot.lane.b32.xlu0 %v1153, 104
    %v1196 = vpop.permute.xlu0 %1195
    %v1198 = vpack.c.bf16 %v1156, %v1156
    %v1199 = vpack.c.bf16 %v1157, %v1157
    %v1200 = vpack.c.bf16 %v1161, %v1161
    %v1201 = vpack.c.bf16 %v1163, %v1163
    %v1202 = vpack.c.bf16 %v1167, %v1167
    %v1203 = vpack.c.bf16 %v1169, %v1169
    %v1204 = vpack.c.bf16 %v1173, %v1173
    %v1205 = vpack.c.bf16 %v1175, %v1175
    %v1206 = vpack.c.bf16 %v1127, %v1127
    %v1207 = vpack.c.bf16 %v1180, %v1180
    %v1208 = vpack.c.bf16 %v1183, %v1183
    %v1209 = vpack.c.bf16 %v1186, %v1186
    %v1212 = vunpack.c.l.b16 %v1198
    %v1213 = vunpack.c.l.b16 %v1199
    %v1214 = vpack.c.b16 %v1213, %v1212
    %v1216 = vsel %vm522, %v1214, 0
    %v1219 = vsel %vm522, %v1206, 0
    %1221 = vmatpush.bf16.xpose.msra.mxu0 0
    %1222 = vmatpush.bf16.xpose.msra.mxu0 0
    %1223 = vmatpush.bf16.xpose.msra.mxu0 0
    %1224 = vmatpush.bf16.xpose.msra.mxu0 0
    %1225 = vmatpush.bf16.xpose.msra.mxu0 0
    %1226 = vmatpush.bf16.xpose.msra.mxu0 0
    %1227 = vmatpush.bf16.xpose.msra.mxu0 0
    %1228 = vmatpush.bf16.xpose.msra.mxu0 %v1219
    %1229 = vmatmul.bf16.gmra.mxu0 %v1216
    %v1230 = vpop.f32.mrf.mxu0
    %v1231 = vadd.f32 0.0, %v1230
    %v1232 = vpop.f32.mrf.mxu0
    %v1233 = vadd.f32 0.0, %v1232
    %1234 = vdwg.mxu0
    %v1237 = vunpack.c.l.b16 %v1200
    %v1238 = vunpack.c.l.b16 %v1201
    %v1239 = vpack.c.b16 %v1238, %v1237
    %v1241 = vsel %vm522, %v1239, 0
    %v1244 = vsel %vm522, %v1207, 0
    %1246 = vmatpush.bf16.xpose.msra.mxu0 0
    %1247 = vmatpush.bf16.xpose.msra.mxu0 0
    %1248 = vmatpush.bf16.xpose.msra.mxu0 0
    %1249 = vmatpush.bf16.xpose.msra.mxu0 0
    %1250 = vmatpush.bf16.xpose.msra.mxu0 0
    %1251 = vmatpush.bf16.xpose.msra.mxu0 0
    %1252 = vmatpush.bf16.xpose.msra.mxu0 0
    %1253 = vmatpush.bf16.xpose.msra.mxu0 %v1244
    %1254 = vmatmul.bf16.gmra.mxu0 %v1241
    %v1255 = vpop.f32.mrf.mxu0
    %v1256 = vadd.f32 0.0, %v1255
    %v1257 = vpop.f32.mrf.mxu0
    %v1258 = vadd.f32 0.0, %v1257
    %1259 = vdwg.mxu0
    %v1262 = vunpack.c.l.b16 %v1202
    %v1263 = vunpack.c.l.b16 %v1203
    %v1264 = vpack.c.b16 %v1263, %v1262
    %v1266 = vsel %vm522, %v1264, 0
    %v1269 = vsel %vm522, %v1208, 0
    %1271 = vmatpush.bf16.xpose.msra.mxu0 0
    %1272 = vmatpush.bf16.xpose.msra.mxu0 0
    %1273 = vmatpush.bf16.xpose.msra.mxu0 0
    %1274 = vmatpush.bf16.xpose.msra.mxu0 0
    %1275 = vmatpush.bf16.xpose.msra.mxu0 0
    %1276 = vmatpush.bf16.xpose.msra.mxu0 0
    %1277 = vmatpush.bf16.xpose.msra.mxu0 0
    %1278 = vmatpush.bf16.xpose.msra.mxu0 %v1269
    %1279 = vmatmul.bf16.gmra.mxu0 %v1266
    %v1280 = vpop.f32.mrf.mxu0
    %v1281 = vadd.f32 0.0, %v1280
    %v1282 = vpop.f32.mrf.mxu0
    %v1283 = vadd.f32 0.0, %v1282
    %1284 = vdwg.mxu0
    %v1287 = vunpack.c.l.b16 %v1204
    %v1288 = vunpack.c.l.b16 %v1205
    %v1289 = vpack.c.b16 %v1288, %v1287
    %v1291 = vsel %vm522, %v1289, 0
    %v1294 = vsel %vm522, %v1209, 0
    %1296 = vmatpush.bf16.xpose.msra.mxu0 0
    %1297 = vmatpush.bf16.xpose.msra.mxu0 0
    %1298 = vmatpush.bf16.xpose.msra.mxu0 0
    %1299 = vmatpush.bf16.xpose.msra.mxu0 0
    %1300 = vmatpush.bf16.xpose.msra.mxu0 0
    %1301 = vmatpush.bf16.xpose.msra.mxu0 0
    %1302 = vmatpush.bf16.xpose.msra.mxu0 0
    %1303 = vmatpush.bf16.xpose.msra.mxu0 %v1294
    %1304 = vmatmul.bf16.gmra.mxu0 %v1291
    %v1305 = vpop.f32.mrf.mxu0
    %v1306 = vadd.f32 0.0, %v1305
    %v1307 = vpop.f32.mrf.mxu0
    %v1308 = vadd.f32 0.0, %v1307
    %1309 = vdwg.mxu0
    %v1310 = vsel %vm522, %v1231, -inf
    %1311 = vmax.xlane.f32.xlu0 %v1310
    %v1312 = vpop.xlane.xlu0 %1311
    %v1313 = vsel %vm522, %v1233, -inf
    %1314 = vmax.xlane.f32.xlu0 %v1313
    %v1315 = vpop.xlane.xlu0 %1314
    %v1316 = vsel %vm522, %v1256, -inf
    %1317 = vmax.xlane.f32.xlu0 %v1316
    %v1318 = vpop.xlane.xlu0 %1317
    %v1319 = vsel %vm522, %v1258, -inf
    %1320 = vmax.xlane.f32.xlu0 %v1319
    %v1321 = vpop.xlane.xlu0 %1320
    %v1322 = vsel %vm522, %v1281, -inf
    %1323 = vmax.xlane.f32.xlu0 %v1322
    %v1324 = vpop.xlane.xlu0 %1323
    %v1325 = vsel %vm522, %v1283, -inf
    %1326 = vmax.xlane.f32.xlu0 %v1325
    %v1327 = vpop.xlane.xlu0 %1326
    %v1328 = vsel %vm522, %v1306, -inf
    %1329 = vmax.xlane.f32.xlu0 %v1328
    %v1330 = vpop.xlane.xlu0 %1329
    %v1331 = vsel %vm522, %v1308, -inf
    %1332 = vmax.xlane.f32.xlu0 %v1331
    %v1333 = vpop.xlane.xlu0 %1332
    %v1334 = vsub.f32 %v1231, %v1312
    %v1335 = vsub.f32 %v1233, %v1315
    %v1336 = vsub.f32 %v1256, %v1318
    %v1337 = vsub.f32 %v1258, %v1321
    %v1338 = vsub.f32 %v1281, %v1324
    %v1339 = vsub.f32 %v1283, %v1327
    %v1340 = vsub.f32 %v1306, %v1330
    %v1341 = vsub.f32 %v1308, %v1333
    %v1342 = vmul.f32 %v1334, 1.442695
    %v1343 = vpow.pop %v1342
    %v1344 = vmul.f32 %v1335, 1.442695
    %v1345 = vpow.pop %v1344
    %v1346 = vmul.f32 %v1336, 1.442695
    %v1347 = vpow.pop %v1346
    %v1348 = vmul.f32 %v1337, 1.442695
    %v1349 = vpow.pop %v1348
    %v1350 = vmul.f32 %v1338, 1.442695
    %v1351 = vpow.pop %v1350
    %v1352 = vmul.f32 %v1339, 1.442695
    %v1353 = vpow.pop %v1352
    %v1354 = vmul.f32 %v1340, 1.442695
    %v1355 = vpow.pop %v1354
    %v1356 = vmul.f32 %v1341, 1.442695
    %v1357 = vpow.pop %v1356
    %v1358 = vsel %vm522, %v1343, 0.0
    %1359 = vadd.xlane.f32.xlu0 %v1358
    %v1360 = vpop.xlane.xlu0 %1359
    %v1361 = vsel %vm522, %v1345, 0.0
    %1362 = vadd.xlane.f32.xlu0 %v1361
    %v1363 = vpop.xlane.xlu0 %1362
    %v1364 = vsel %vm522, %v1347, 0.0
    %1365 = vadd.xlane.f32.xlu0 %v1364
    %v1366 = vpop.xlane.xlu0 %1365
    %v1367 = vsel %vm522, %v1349, 0.0
    %1368 = vadd.xlane.f32.xlu0 %v1367
    %v1369 = vpop.xlane.xlu0 %1368
    %v1370 = vsel %vm522, %v1351, 0.0
    %1371 = vadd.xlane.f32.xlu0 %v1370
    %v1372 = vpop.xlane.xlu0 %1371
    %v1373 = vsel %vm522, %v1353, 0.0
    %1374 = vadd.xlane.f32.xlu0 %v1373
    %v1375 = vpop.xlane.xlu0 %1374
    %v1376 = vsel %vm522, %v1355, 0.0
    %1377 = vadd.xlane.f32.xlu0 %v1376
    %v1378 = vpop.xlane.xlu0 %1377
    %v1379 = vsel %vm522, %v1357, 0.0
    %1380 = vadd.xlane.f32.xlu0 %v1379
    %v1381 = vpop.xlane.xlu0 %1380
    %v1382 = vpack.c.bf16 %v1343, %v1343
    %v1383 = vpack.c.bf16 %v1345, %v1345
    %v1384 = vpack.c.bf16 %v1347, %v1347
    %v1385 = vpack.c.bf16 %v1349, %v1349
    %v1386 = vpack.c.bf16 %v1351, %v1351
    %v1387 = vpack.c.bf16 %v1353, %v1353
    %v1388 = vpack.c.bf16 %v1355, %v1355
    %v1389 = vpack.c.bf16 %v1357, %v1357
    %v1390 = vpack.c.bf16 %v1153, %v1153
    %v1391 = vpack.c.bf16 %v1190, %v1190
    %v1392 = vpack.c.bf16 %v1193, %v1193
    %v1393 = vpack.c.bf16 %v1196, %v1196
    %v1396 = vunpack.c.l.b16 %v1382
    %v1397 = vunpack.c.l.b16 %v1383
    %v1398 = vpack.c.b16 %v1397, %v1396
    %v1400 = vsel %vm522, %v1398, 0
    %v1403 = vsel %vm763, %v1390, 0
    %1405 = vmatpush.bf16.msra.mxu0 0
    %1406 = vmatpush.bf16.msra.mxu0 0
    %1407 = vmatpush.bf16.msra.mxu0 0
    %1408 = vmatpush.bf16.msra.mxu0 0
    %1409 = vmatpush.bf16.msra.mxu0 0
    %1410 = vmatpush.bf16.msra.mxu0 0
    %1411 = vmatpush.bf16.msra.mxu0 0
    %1412 = vmatpush.bf16.msra.mxu0 %v1403
    %1413 = vmatmul.bf16.gmra.mxu0 %v1400
    %v1414 = vpop.f32.mrf.mxu0
    %v1415 = vadd.f32 0.0, %v1414
    %v1416 = vpop.f32.mrf.mxu0
    %v1417 = vadd.f32 0.0, %v1416
    %1418 = vdwg.mxu0
    %v1421 = vunpack.c.l.b16 %v1384
    %v1422 = vunpack.c.l.b16 %v1385
    %v1423 = vpack.c.b16 %v1422, %v1421
    %v1425 = vsel %vm522, %v1423, 0
    %v1428 = vsel %vm763, %v1391, 0
    %1430 = vmatpush.bf16.msra.mxu0 0
    %1431 = vmatpush.bf16.msra.mxu0 0
    %1432 = vmatpush.bf16.msra.mxu0 0
    %1433 = vmatpush.bf16.msra.mxu0 0
    %1434 = vmatpush.bf16.msra.mxu0 0
    %1435 = vmatpush.bf16.msra.mxu0 0
    %1436 = vmatpush.bf16.msra.mxu0 0
    %1437 = vmatpush.bf16.msra.mxu0 %v1428
    %1438 = vmatmul.bf16.gmra.mxu0 %v1425
    %v1439 = vpop.f32.mrf.mxu0
    %v1440 = vadd.f32 0.0, %v1439
    %v1441 = vpop.f32.mrf.mxu0
    %v1442 = vadd.f32 0.0, %v1441
    %1443 = vdwg.mxu0
    %v1446 = vunpack.c.l.b16 %v1386
    %v1447 = vunpack.c.l.b16 %v1387
    %v1448 = vpack.c.b16 %v1447, %v1446
    %v1450 = vsel %vm522, %v1448, 0
    %v1453 = vsel %vm763, %v1392, 0
    %1455 = vmatpush.bf16.msra.mxu0 0
    %1456 = vmatpush.bf16.msra.mxu0 0
    %1457 = vmatpush.bf16.msra.mxu0 0
    %1458 = vmatpush.bf16.msra.mxu0 0
    %1459 = vmatpush.bf16.msra.mxu0 0
    %1460 = vmatpush.bf16.msra.mxu0 0
    %1461 = vmatpush.bf16.msra.mxu0 0
    %1462 = vmatpush.bf16.msra.mxu0 %v1453
    %1463 = vmatmul.bf16.gmra.mxu0 %v1450
    %v1464 = vpop.f32.mrf.mxu0
    %v1465 = vadd.f32 0.0, %v1464
    %v1466 = vpop.f32.mrf.mxu0
    %v1467 = vadd.f32 0.0, %v1466
    %1468 = vdwg.mxu0
    %v1471 = vunpack.c.l.b16 %v1388
    %v1472 = vunpack.c.l.b16 %v1389
    %v1473 = vpack.c.b16 %v1472, %v1471
    %v1475 = vsel %vm522, %v1473, 0
    %v1478 = vsel %vm763, %v1393, 0
    %1480 = vmatpush.bf16.msra.mxu0 0
    %1481 = vmatpush.bf16.msra.mxu0 0
    %1482 = vmatpush.bf16.msra.mxu0 0
    %1483 = vmatpush.bf16.msra.mxu0 0
    %1484 = vmatpush.bf16.msra.mxu0 0
    %1485 = vmatpush.bf16.msra.mxu0 0
    %1486 = vmatpush.bf16.msra.mxu0 0
    %1487 = vmatpush.bf16.msra.mxu0 %v1478
    %1488 = vmatmul.bf16.gmra.mxu0 %v1475
    %v1489 = vpop.f32.mrf.mxu0
    %v1490 = vadd.f32 0.0, %v1489
    %v1491 = vpop.f32.mrf.mxu0
    %v1492 = vadd.f32 0.0, %v1491
    %1493 = vdwg.mxu0
    %v1494 = vrcp.pop %v1360
    %v1495 = vrcp.pop %v1363
    %v1496 = vrcp.pop %v1366
    %v1497 = vrcp.pop %v1369
    %v1498 = vrcp.pop %v1372
    %v1499 = vrcp.pop %v1375
    %v1500 = vrcp.pop %v1378
    %v1501 = vrcp.pop %v1381
    %v1502 = vmul.f32 %v1415, %v1494
    %v1503 = vmul.f32 %v1417, %v1495
    %v1504 = vmul.f32 %v1440, %v1496
    %v1505 = vmul.f32 %v1442, %v1497
    %v1506 = vmul.f32 %v1465, %v1498
    %v1507 = vmul.f32 %v1467, %v1499
    %v1508 = vmul.f32 %v1490, %v1500
    %v1509 = vmul.f32 %v1492, %v1501
    %v1510 = vpack.c.bf16 %v1503, %v1502
    %v1512 = vsel %vm522, %v1510, 0
    %v1515 = vsel %vm763, %v1031, 0
    %1517 = vmatpush.bf16.msra.mxu0 0
    %1518 = vmatpush.bf16.msra.mxu0 0
    %1519 = vmatpush.bf16.msra.mxu0 0
    %1520 = vmatpush.bf16.msra.mxu0 0
    %1521 = vmatpush.bf16.msra.mxu0 0
    %1522 = vmatpush.bf16.msra.mxu0 0
    %1523 = vmatpush.bf16.msra.mxu0 0
    %1524 = vmatpush.bf16.msra.mxu0 %v1515
    %1525 = vmatmul.bf16.gmra.mxu0 %v1512
    %v1526 = vpop.f32.mrf.mxu0
    %v1527 = vadd.f32 0.0, %v1526
    %v1528 = vpop.f32.mrf.mxu0
    %v1529 = vadd.f32 0.0, %v1528
    %1530 = vdwg.mxu0
    %v1531 = vperm.slane %v103, 7
    %v1532 = vadd.f32 %v1531, %v1527
    %v1533 = vadd.f32 %v1531, %v1529
    %v1534 = vpack.c.bf16 %v1505, %v1504
    %v1536 = vsel %vm522, %v1534, 0
    %v1539 = vsel %vm763, %v1032, 0
    %1541 = vmatpush.bf16.msra.mxu0 0
    %1542 = vmatpush.bf16.msra.mxu0 0
    %1543 = vmatpush.bf16.msra.mxu0 0
    %1544 = vmatpush.bf16.msra.mxu0 0
    %1545 = vmatpush.bf16.msra.mxu0 0
    %1546 = vmatpush.bf16.msra.mxu0 0
    %1547 = vmatpush.bf16.msra.mxu0 0
    %1548 = vmatpush.bf16.msra.mxu0 %v1539
    %1549 = vmatmul.bf16.gmra.mxu0 %v1536
    %v1550 = vpop.f32.mrf.mxu0
    %v1551 = vadd.f32 0.0, %v1550
    %v1552 = vpop.f32.mrf.mxu0
    %v1553 = vadd.f32 0.0, %v1552
    %1554 = vdwg.mxu0
    %v1555 = vadd.f32 %v1532, %v1551
    %v1556 = vadd.f32 %v1533, %v1553
    %v1557 = vpack.c.bf16 %v1507, %v1506
    %v1559 = vsel %vm522, %v1557, 0
    %v1562 = vsel %vm763, %v1033, 0
    %1564 = vmatpush.bf16.msra.mxu0 0
    %1565 = vmatpush.bf16.msra.mxu0 0
    %1566 = vmatpush.bf16.msra.mxu0 0
    %1567 = vmatpush.bf16.msra.mxu0 0
    %1568 = vmatpush.bf16.msra.mxu0 0
    %1569 = vmatpush.bf16.msra.mxu0 0
    %1570 = vmatpush.bf16.msra.mxu0 0
    %1571 = vmatpush.bf16.msra.mxu0 %v1562
    %1572 = vmatmul.bf16.gmra.mxu0 %v1559
    %v1573 = vpop.f32.mrf.mxu0
    %v1574 = vadd.f32 0.0, %v1573
    %v1575 = vpop.f32.mrf.mxu0
    %v1576 = vadd.f32 0.0, %v1575
    %1577 = vdwg.mxu0
    %v1578 = vadd.f32 %v1555, %v1574
    %v1579 = vadd.f32 %v1556, %v1576
    %v1580 = vpack.c.bf16 %v1509, %v1508
    %v1582 = vsel %vm522, %v1580, 0
    %v1585 = vsel %vm763, %v1034, 0
    %1587 = vmatpush.bf16.msra.mxu0 0
    %1588 = vmatpush.bf16.msra.mxu0 0
    %1589 = vmatpush.bf16.msra.mxu0 0
    %1590 = vmatpush.bf16.msra.mxu0 0
    %1591 = vmatpush.bf16.msra.mxu0 0
    %1592 = vmatpush.bf16.msra.mxu0 0
    %1593 = vmatpush.bf16.msra.mxu0 0
    %1594 = vmatpush.bf16.msra.mxu0 %v1585
    %1595 = vmatmul.bf16.gmra.mxu0 %v1582
    %v1596 = vpop.f32.mrf.mxu0
    %v1597 = vadd.f32 0.0, %v1596
    %v1598 = vpop.f32.mrf.mxu0
    %v1599 = vadd.f32 0.0, %v1598
    %1600 = vdwg.mxu0
    %v1601 = vadd.f32 %v1578, %v1597
    %v1602 = vadd.f32 %v1579, %v1599
    %v1605 = vrot.slane %v1601, 1
    %v1606 = vrot.slane %v1601, 2
    %v1607 = vrot.slane %v1601, 3
    %v1608 = vrot.slane %v1601, 4
    %v1609 = vrot.slane %v1601, 5
    %v1610 = vrot.slane %v1601, 6
    %v1611 = vrot.slane %v1601, 7
    %v1612 = vrot.slane %v1602, 1
    %v1613 = vrot.slane %v1602, 2
    %v1614 = vrot.slane %v1602, 3
    %v1615 = vrot.slane %v1602, 4
    %v1616 = vrot.slane %v1602, 5
    %v1617 = vrot.slane %v1602, 6
    %v1618 = vrot.slane %v1602, 7
    %v1635 = vadd.f32 %v113, %v1601
    %v1636 = vadd.f32 %v114, %v1605
    %v1637 = vadd.f32 %v115, %v1606
    %v1638 = vadd.f32 %v116, %v1607
    %v1639 = vadd.f32 %v117, %v1608
    %v1640 = vadd.f32 %v118, %v1609
    %v1641 = vadd.f32 %v119, %v1610
    %v1642 = vadd.f32 %v120, %v1611
    %v1643 = vadd.f32 %v121, %v1602
    %v1644 = vadd.f32 %v122, %v1612
    %v1645 = vadd.f32 %v123, %v1613
    %v1646 = vadd.f32 %v124, %v1614
    %v1647 = vadd.f32 %v125, %v1615
    %v1648 = vadd.f32 %v126, %v1616
    %v1649 = vadd.f32 %v127, %v1617
    %v1650 = vadd.f32 %v128, %v1618
    %v1667 = vrot.slane %v1636, 7
    %v1668 = vsel %vm190, %v1667, %v1635
    %v1669 = vrot.slane %v1637, 6
    %v1670 = vsel %vm193, %v1669, %v1668
    %v1671 = vrot.slane %v1638, 5
    %v1672 = vsel %vm196, %v1671, %v1670
    %v1673 = vrot.slane %v1639, 4
    %v1674 = vsel %vm199, %v1673, %v1672
    %v1675 = vrot.slane %v1640, 3
    %v1676 = vsel %vm202, %v1675, %v1674
    %v1677 = vrot.slane %v1641, 2
    %v1678 = vsel %vm205, %v1677, %v1676
    %v1679 = vrot.slane %v1642, 1
    %v1680 = vsel %vm208, %v1679, %v1678
    %v1681 = vrot.slane %v1644, 7
    %v1682 = vsel %vm190, %v1681, %v1643
    %v1683 = vrot.slane %v1645, 6
    %v1684 = vsel %vm193, %v1683, %v1682
    %v1685 = vrot.slane %v1646, 5
    %v1686 = vsel %vm196, %v1685, %v1684
    %v1687 = vrot.slane %v1647, 4
    %v1688 = vsel %vm199, %v1687, %v1686
    %v1689 = vrot.slane %v1648, 3
    %v1690 = vsel %vm202, %v1689, %v1688
    %v1691 = vrot.slane %v1649, 2
    %v1692 = vsel %vm205, %v1691, %v1690
    %v1693 = vrot.slane %v1650, 1
    %v1694 = vsel %vm208, %v1693, %v1692
    %v1697 = vsel %vm223, %v1680, 0.0
    %1698 = vadd.xlane.f32.xlu0 %v1697
    %v1699 = vpop.xlane.xlu0 %1698
    %v1700 = vsel %vm223, %v1694, 0.0
    %1701 = vadd.xlane.f32.xlu0 %v1700
    %v1702 = vpop.xlane.xlu0 %1701
    %v1703 = vmul.f32 %v1699, %v901
    %v1704 = vmul.f32 %v1702, %v901
    %v1707 = vrot.slane %v1703, 1
    %v1708 = vrot.slane %v1703, 2
    %v1709 = vrot.slane %v1703, 3
    %v1710 = vrot.slane %v1703, 4
    %v1711 = vrot.slane %v1703, 5
    %v1712 = vrot.slane %v1703, 6
    %v1713 = vrot.slane %v1703, 7
    %v1714 = vrot.slane %v1704, 1
    %v1715 = vrot.slane %v1704, 2
    %v1716 = vrot.slane %v1704, 3
    %v1717 = vrot.slane %v1704, 4
    %v1718 = vrot.slane %v1704, 5
    %v1719 = vrot.slane %v1704, 6
    %v1720 = vrot.slane %v1704, 7
    %v1737 = vsub.f32 %v1635, %v1703
    %v1738 = vsub.f32 %v1636, %v1707
    %v1739 = vsub.f32 %v1637, %v1708
    %v1740 = vsub.f32 %v1638, %v1709
    %v1741 = vsub.f32 %v1639, %v1710
    %v1742 = vsub.f32 %v1640, %v1711
    %v1743 = vsub.f32 %v1641, %v1712
    %v1744 = vsub.f32 %v1642, %v1713
    %v1745 = vsub.f32 %v1643, %v1704
    %v1746 = vsub.f32 %v1644, %v1714
    %v1747 = vsub.f32 %v1645, %v1715
    %v1748 = vsub.f32 %v1646, %v1716
    %v1749 = vsub.f32 %v1647, %v1717
    %v1750 = vsub.f32 %v1648, %v1718
    %v1751 = vsub.f32 %v1649, %v1719
    %v1752 = vsub.f32 %v1650, %v1720
    %v1753 = vmul.f32 %v1737, %v1737
    %v1754 = vmul.f32 %v1738, %v1738
    %v1755 = vmul.f32 %v1739, %v1739
    %v1756 = vmul.f32 %v1740, %v1740
    %v1757 = vmul.f32 %v1741, %v1741
    %v1758 = vmul.f32 %v1742, %v1742
    %v1759 = vmul.f32 %v1743, %v1743
    %v1760 = vmul.f32 %v1744, %v1744
    %v1761 = vmul.f32 %v1745, %v1745
    %v1762 = vmul.f32 %v1746, %v1746
    %v1763 = vmul.f32 %v1747, %v1747
    %v1764 = vmul.f32 %v1748, %v1748
    %v1765 = vmul.f32 %v1749, %v1749
    %v1766 = vmul.f32 %v1750, %v1750
    %v1767 = vmul.f32 %v1751, %v1751
    %v1768 = vmul.f32 %v1752, %v1752
    %v1785 = vrot.slane %v1754, 7
    %v1786 = vsel %vm190, %v1785, %v1753
    %v1787 = vrot.slane %v1755, 6
    %v1788 = vsel %vm193, %v1787, %v1786
    %v1789 = vrot.slane %v1756, 5
    %v1790 = vsel %vm196, %v1789, %v1788
    %v1791 = vrot.slane %v1757, 4
    %v1792 = vsel %vm199, %v1791, %v1790
    %v1793 = vrot.slane %v1758, 3
    %v1794 = vsel %vm202, %v1793, %v1792
    %v1795 = vrot.slane %v1759, 2
    %v1796 = vsel %vm205, %v1795, %v1794
    %v1797 = vrot.slane %v1760, 1
    %v1798 = vsel %vm208, %v1797, %v1796
    %v1799 = vrot.slane %v1762, 7
    %v1800 = vsel %vm190, %v1799, %v1761
    %v1801 = vrot.slane %v1763, 6
    %v1802 = vsel %vm193, %v1801, %v1800
    %v1803 = vrot.slane %v1764, 5
    %v1804 = vsel %vm196, %v1803, %v1802
    %v1805 = vrot.slane %v1765, 4
    %v1806 = vsel %vm199, %v1805, %v1804
    %v1807 = vrot.slane %v1766, 3
    %v1808 = vsel %vm202, %v1807, %v1806
    %v1809 = vrot.slane %v1767, 2
    %v1810 = vsel %vm205, %v1809, %v1808
    %v1811 = vrot.slane %v1768, 1
    %v1812 = vsel %vm208, %v1811, %v1810
    %v1815 = vsel %vm223, %v1798, 0.0
    %1816 = vadd.xlane.f32.xlu0 %v1815
    %v1817 = vpop.xlane.xlu0 %1816
    %v1818 = vsel %vm223, %v1812, 0.0
    %1819 = vadd.xlane.f32.xlu0 %v1818
    %v1820 = vpop.xlane.xlu0 %1819
    %v1821 = vmul.f32 %v1817, %v901
    %v1822 = vmul.f32 %v1820, %v901
    %v1823 = vadd.f32 %v1821, 1e-05
    %v1824 = vadd.f32 %v1822, 1e-05
    %v1825 = vrsqrt.pop %v1823
    %v1826 = vmul.f32 %v1825, %v1823
    %v1827 = vmul.f32 %v1826, %v1825
    %v1828 = vmul.f32 0.5, %v1827
    %v1829 = vsub.f32 1.5, %v1828
    %v1830 = vmul.f32 %v1825, %v1829
    %vm1831 = vweird.f32 %v1823
    %vm1832 = vweird.f32 %v1825
    %vm1833 = vmor %vm1831, %vm1832
    %v1834 = vsel %vm1833, %v1825, %v1830
    %v1835 = vrsqrt.pop %v1824
    %v1836 = vmul.f32 %v1835, %v1824
    %v1837 = vmul.f32 %v1836, %v1835
    %v1838 = vmul.f32 0.5, %v1837
    %v1839 = vsub.f32 1.5, %v1838
    %v1840 = vmul.f32 %v1835, %v1839
    %vm1841 = vweird.f32 %v1824
    %vm1842 = vweird.f32 %v1835
    %vm1843 = vmor %vm1841, %vm1842
    %v1844 = vsel %vm1843, %v1835, %v1840
    %v1847 = vrot.slane %v1834, 1
    %v1848 = vrot.slane %v1834, 2
    %v1849 = vrot.slane %v1834, 3
    %v1850 = vrot.slane %v1834, 4
    %v1851 = vrot.slane %v1834, 5
    %v1852 = vrot.slane %v1834, 6
    %v1853 = vrot.slane %v1834, 7
    %v1854 = vrot.slane %v1844, 1
    %v1855 = vrot.slane %v1844, 2
    %v1856 = vrot.slane %v1844, 3
    %v1857 = vrot.slane %v1844, 4
    %v1858 = vrot.slane %v1844, 5
    %v1859 = vrot.slane %v1844, 6
    %v1860 = vrot.slane %v1844, 7
    %v1877 = vmul.f32 %v1737, %v1834
    %v1878 = vmul.f32 %v1738, %v1847
    %v1879 = vmul.f32 %v1739, %v1848
    %v1880 = vmul.f32 %v1740, %v1849
    %v1881 = vmul.f32 %v1741, %v1850
    %v1882 = vmul.f32 %v1742, %v1851
    %v1883 = vmul.f32 %v1743, %v1852
    %v1884 = vmul.f32 %v1744, %v1853
    %v1885 = vmul.f32 %v1745, %v1844
    %v1886 = vmul.f32 %v1746, %v1854
    %v1887 = vmul.f32 %v1747, %v1855
    %v1888 = vmul.f32 %v1748, %v1856
    %v1889 = vmul.f32 %v1749, %v1857
    %v1890 = vmul.f32 %v1750, %v1858
    %v1891 = vmul.f32 %v1751, %v1859
    %v1892 = vmul.f32 %v1752, %v1860
    %v1893 = vperm.slane %v104, 2
    %v1894 = vmul.f32 %v1877, %v1893
    %v1895 = vmul.f32 %v1878, %v1893
    %v1896 = vmul.f32 %v1879, %v1893
    %v1897 = vmul.f32 %v1880, %v1893
    %v1898 = vmul.f32 %v1881, %v1893
    %v1899 = vmul.f32 %v1882, %v1893
    %v1900 = vmul.f32 %v1883, %v1893
    %v1901 = vmul.f32 %v1884, %v1893
    %v1902 = vmul.f32 %v1885, %v1893
    %v1903 = vmul.f32 %v1886, %v1893
    %v1904 = vmul.f32 %v1887, %v1893
    %v1905 = vmul.f32 %v1888, %v1893
    %v1906 = vmul.f32 %v1889, %v1893
    %v1907 = vmul.f32 %v1890, %v1893
    %v1908 = vmul.f32 %v1891, %v1893
    %v1909 = vmul.f32 %v1892, %v1893
    %v1910 = vperm.slane %v104, 3
    %v1911 = vadd.f32 %v1894, %v1910
    %v1912 = vadd.f32 %v1895, %v1910
    %v1913 = vadd.f32 %v1896, %v1910
    %v1914 = vadd.f32 %v1897, %v1910
    %v1915 = vadd.f32 %v1898, %v1910
    %v1916 = vadd.f32 %v1899, %v1910
    %v1917 = vadd.f32 %v1900, %v1910
    %v1918 = vadd.f32 %v1901, %v1910
    %v1919 = vadd.f32 %v1902, %v1910
    %v1920 = vadd.f32 %v1903, %v1910
    %v1921 = vadd.f32 %v1904, %v1910
    %v1922 = vadd.f32 %v1905, %v1910
    %v1923 = vadd.f32 %v1906, %v1910
    %v1924 = vadd.f32 %v1907, %v1910
    %v1925 = vadd.f32 %v1908, %v1910
    %v1926 = vadd.f32 %v1909, %v1910
    %vm1927 = vcmask 253952
    %1928 = vst.msk [vmem:[#allocation11] sm:$0x1] %vm1927, %v1007
    %1929 = vst.msk [vmem:[#allocation11 + $0x2] sm:$0x1] %vm1927, %v1008
    %1930 = vst.msk [vmem:[#allocation11 + $0x4] sm:$0x1] %vm1927, %v1009
    %1931 = vst.msk [vmem:[#allocation11 + $0x6] sm:$0x1] %vm1927, %v1010
    %1932 = vst.msk [vmem:[#allocation11 + $0x8] sm:$0x1] %vm1927, %v1011
    %1933 = vst.msk [vmem:[#allocation11 + $0xa] sm:$0x1] %vm1927, %v1012
    %1934 = vst.msk [vmem:[#allocation11 + $0xc] sm:$0x1] %vm1927, %v1013
    %1935 = vst.msk [vmem:[#allocation11 + $0xe] sm:$0x1] %vm1927, %v1014
    %1936 = vst.msk [vmem:[#allocation12] sm:$0x1] %vm1927, %v1911
    %1937 = vst.msk [vmem:[#allocation12 + $0x2] sm:$0x1] %vm1927, %v1912
    %1938 = vst.msk [vmem:[#allocation12 + $0x4] sm:$0x1] %vm1927, %v1913
    %1939 = vst.msk [vmem:[#allocation12 + $0x6] sm:$0x1] %vm1927, %v1914
    %1940 = vst.msk [vmem:[#allocation12 + $0x8] sm:$0x1] %vm1927, %v1915
    %1941 = vst.msk [vmem:[#allocation12 + $0xa] sm:$0x1] %vm1927, %v1916
    %1942 = vst.msk [vmem:[#allocation12 + $0xc] sm:$0x1] %vm1927, %v1917
    %1943 = vst.msk [vmem:[#allocation12 + $0xe] sm:$0x1] %vm1927, %v1918
    %1944 = vst.msk [vmem:[#allocation12 + $0x10] sm:$0x1] %vm1927, %v1919
    %1945 = vst.msk [vmem:[#allocation12 + $0x12] sm:$0x1] %vm1927, %v1920
    %1946 = vst.msk [vmem:[#allocation12 + $0x14] sm:$0x1] %vm1927, %v1921
    %1947 = vst.msk [vmem:[#allocation12 + $0x16] sm:$0x1] %vm1927, %v1922
    %1948 = vst.msk [vmem:[#allocation12 + $0x18] sm:$0x1] %vm1927, %v1923
    %1949 = vst.msk [vmem:[#allocation12 + $0x1a] sm:$0x1] %vm1927, %v1924
    %1950 = vst.msk [vmem:[#allocation12 + $0x1c] sm:$0x1] %vm1927, %v1925
    %1951 = vst.msk [vmem:[#allocation12 + $0x1e] sm:$0x1] %vm1927, %v1926
    %v1952 = vld [vmem:[#allocation2 + $0x1] sm:$0x1]
    %v1953 = vld [vmem:[#allocation2 + $0x3] sm:$0x1]
    %v1954 = vld [vmem:[#allocation2 + $0x5] sm:$0x1]
    %v1955 = vld [vmem:[#allocation2 + $0x7] sm:$0x1]
    %v1956 = vld [vmem:[#allocation2 + $0x9] sm:$0x1]
    %v1957 = vld [vmem:[#allocation2 + $0xb] sm:$0x1]
    %v1958 = vld [vmem:[#allocation2 + $0xd] sm:$0x1]
    %v1959 = vld [vmem:[#allocation2 + $0xf] sm:$0x1]
    %v1960 = vld [vmem:[#allocation5 + $0x1] sm:$0x1]
    %v1961 = vld [vmem:[#allocation5 + $0x3] sm:$0x1]
    %v1962 = vld [vmem:[#allocation5 + $0x5] sm:$0x1]
    %v1963 = vld [vmem:[#allocation5 + $0x7] sm:$0x1]
    %v1964 = vld [vmem:[#allocation5 + $0x9] sm:$0x1]
    %v1965 = vld [vmem:[#allocation5 + $0xb] sm:$0x1]
    %v1966 = vld [vmem:[#allocation5 + $0xd] sm:$0x1]
    %v1967 = vld [vmem:[#allocation5 + $0xf] sm:$0x1]
    %v1968 = vld [vmem:[#allocation5 + $0x11] sm:$0x1]
    %v1969 = vld [vmem:[#allocation5 + $0x13] sm:$0x1]
    %v1970 = vld [vmem:[#allocation5 + $0x15] sm:$0x1]
    %v1971 = vld [vmem:[#allocation5 + $0x17] sm:$0x1]
    %v1972 = vld [vmem:[#allocation5 + $0x19] sm:$0x1]
    %v1973 = vld [vmem:[#allocation5 + $0x1b] sm:$0x1]
    %v1974 = vld [vmem:[#allocation5 + $0x1d] sm:$0x1]
    %v1975 = vld [vmem:[#allocation5 + $0x1f] sm:$0x1]
    %v1976 = vld [vmem:[#allocation7 + $0x1] sm:$0x1]
    %v1977 = vld [vmem:[#allocation7 + $0x3] sm:$0x1]
    %v1978 = vld [vmem:[#allocation7 + $0x5] sm:$0x1]
    %v1979 = vld [vmem:[#allocation7 + $0x7] sm:$0x1]
    %v1980 = vld [vmem:[#allocation7 + $0x9] sm:$0x1]
    %v1981 = vld [vmem:[#allocation7 + $0xb] sm:$0x1]
    %v1982 = vld [vmem:[#allocation7 + $0xd] sm:$0x1]
    %v1983 = vld [vmem:[#allocation7 + $0xf] sm:$0x1]
    %v1984 = vld [vmem:[#allocation7 + $0x11] sm:$0x1]
    %v1985 = vld [vmem:[#allocation7 + $0x13] sm:$0x1]
    %v1986 = vld [vmem:[#allocation7 + $0x15] sm:$0x1]
    %v1987 = vld [vmem:[#allocation7 + $0x17] sm:$0x1]
    %v1988 = vld [vmem:[#allocation7 + $0x19] sm:$0x1]
    %v1989 = vld [vmem:[#allocation7 + $0x1b] sm:$0x1]
    %v1990 = vld [vmem:[#allocation7 + $0x1d] sm:$0x1]
    %v1991 = vld [vmem:[#allocation7 + $0x1f] sm:$0x1]
    %v1992 = vld [vmem:[#allocation8] sm:$0xf]
    %v1993 = vld [vmem:[#allocation8 + $0x4] sm:$0xf]
    %v1994 = vld [vmem:[#allocation8 + $0x8] sm:$0xf]
    %v1995 = vld [vmem:[#allocation8 + $0xc] sm:$0xf]
    %v1996 = vld [vmem:[%s149] sm:$0xf]
    %v1997 = vld [vmem:[%s149 + $0x4] sm:$0xf]
    %v1998 = vld [vmem:[%s149 + $0x8] sm:$0xf]
    %v1999 = vld [vmem:[%s149 + $0xc] sm:$0xf]
    %v2000 = vld [vmem:[%s154] sm:$0xf]
    %v2001 = vld [vmem:[%s154 + $0x4] sm:$0xf]
    %v2002 = vld [vmem:[%s154 + $0x8] sm:$0xf]
    %v2003 = vld [vmem:[%s154 + $0xc] sm:$0xf]
    %v2004 = vld [vmem:[%s159] sm:$0xf]
    %v2005 = vld [vmem:[%s159 + $0x4] sm:$0xf]
    %v2006 = vld [vmem:[%s159 + $0x8] sm:$0xf]
    %v2007 = vld [vmem:[%s159 + $0xc] sm:$0xf]
    %v2008 = vpack.c.bf16 %v1952, %v1952
    %v2009 = vpack.c.bf16 %v1953, %v1953
    %v2010 = vpack.c.bf16 %v1954, %v1954
    %v2011 = vpack.c.bf16 %v1955, %v1955
    %v2012 = vpack.c.bf16 %v1956, %v1956
    %v2013 = vpack.c.bf16 %v1957, %v1957
    %v2014 = vpack.c.bf16 %v1958, %v1958
    %v2015 = vpack.c.bf16 %v1959, %v1959
    %v2024 = vunpack.c.l.b16 %v2008
    %v2025 = vunpack.c.l.b16 %v2009
    %v2026 = vunpack.c.l.b16 %v2010
    %v2027 = vunpack.c.l.b16 %v2011
    %v2028 = vunpack.c.l.b16 %v2012
    %v2029 = vunpack.c.l.b16 %v2013
    %v2030 = vunpack.c.l.b16 %v2014
    %v2031 = vunpack.c.l.b16 %v2015
    %v2032 = vrot.slane %v2025, 7
    %v2033 = vsel %vm190, %v2032, %v2024
    %v2034 = vrot.slane %v2026, 6
    %v2035 = vsel %vm193, %v2034, %v2033
    %v2036 = vrot.slane %v2027, 5
    %v2037 = vsel %vm196, %v2036, %v2035
    %v2038 = vrot.slane %v2028, 4
    %v2039 = vsel %vm199, %v2038, %v2037
    %v2040 = vrot.slane %v2029, 3
    %v2041 = vsel %vm202, %v2040, %v2039
    %v2042 = vrot.slane %v2030, 2
    %v2043 = vsel %vm205, %v2042, %v2041
    %v2044 = vrot.slane %v2031, 1
    %v2045 = vsel %vm208, %v2044, %v2043
    %v2046 = vpack.c.b16 %v2045, %v2045
    %v2051 = vunpack.c.l.b16 %v1992
    %v2052 = vunpack.c.l.b16 %v1993
    %v2053 = vunpack.c.l.b16 %v1994
    %v2054 = vunpack.c.l.b16 %v1995
    %v2055 = vpack.c.b16 %v2052, %v2051
    %v2056 = vpack.c.b16 %v2054, %v2053
    %v2060 = vsel %vm223, %v2046, 0
    %2062 = vmatpush.bf16.msra.mxu0 0
    %2063 = vmatpush.bf16.msra.mxu0 0
    %2064 = vmatpush.bf16.msra.mxu0 0
    %2065 = vmatpush.bf16.msra.mxu0 0
    %2066 = vmatpush.bf16.msra.mxu0 0
    %2067 = vmatpush.bf16.msra.mxu0 0
    %2068 = vmatpush.bf16.msra.mxu0 %v2056
    %2069 = vmatpush.bf16.msra.mxu0 %v2055
    %2070 = vmatmul.bf16.gmra.mxu0 %v2060
    %v2071 = vpop.f32.mrf.mxu0
    %v2072 = vadd.f32 %v172, %v2071
    %v2073 = vpop.f32.mrf.mxu0
    %2074 = vdwg.mxu0
    %v2075 = vpack.c.bf16 %v1960, %v1960
    %v2076 = vpack.c.bf16 %v1961, %v1961
    %v2077 = vpack.c.bf16 %v1962, %v1962
    %v2078 = vpack.c.bf16 %v1963, %v1963
    %v2079 = vpack.c.bf16 %v1964, %v1964
    %v2080 = vpack.c.bf16 %v1965, %v1965
    %v2081 = vpack.c.bf16 %v1966, %v1966
    %v2082 = vpack.c.bf16 %v1967, %v1967
    %v2083 = vpack.c.bf16 %v1968, %v1968
    %v2084 = vpack.c.bf16 %v1969, %v1969
    %v2085 = vpack.c.bf16 %v1970, %v1970
    %v2086 = vpack.c.bf16 %v1971, %v1971
    %v2087 = vpack.c.bf16 %v1972, %v1972
    %v2088 = vpack.c.bf16 %v1973, %v1973
    %v2089 = vpack.c.bf16 %v1974, %v1974
    %v2090 = vpack.c.bf16 %v1975, %v1975
    %v2107 = vunpack.c.l.b16 %v2075
    %v2108 = vunpack.c.l.b16 %v2076
    %v2109 = vunpack.c.l.b16 %v2077
    %v2110 = vunpack.c.l.b16 %v2078
    %v2111 = vunpack.c.l.b16 %v2079
    %v2112 = vunpack.c.l.b16 %v2080
    %v2113 = vunpack.c.l.b16 %v2081
    %v2114 = vunpack.c.l.b16 %v2082
    %v2115 = vunpack.c.l.b16 %v2083
    %v2116 = vunpack.c.l.b16 %v2084
    %v2117 = vunpack.c.l.b16 %v2085
    %v2118 = vunpack.c.l.b16 %v2086
    %v2119 = vunpack.c.l.b16 %v2087
    %v2120 = vunpack.c.l.b16 %v2088
    %v2121 = vunpack.c.l.b16 %v2089
    %v2122 = vunpack.c.l.b16 %v2090
    %v2123 = vrot.slane %v2108, 7
    %v2124 = vsel %vm190, %v2123, %v2107
    %v2125 = vrot.slane %v2109, 6
    %v2126 = vsel %vm193, %v2125, %v2124
    %v2127 = vrot.slane %v2110, 5
    %v2128 = vsel %vm196, %v2127, %v2126
    %v2129 = vrot.slane %v2111, 4
    %v2130 = vsel %vm199, %v2129, %v2128
    %v2131 = vrot.slane %v2112, 3
    %v2132 = vsel %vm202, %v2131, %v2130
    %v2133 = vrot.slane %v2113, 2
    %v2134 = vsel %vm205, %v2133, %v2132
    %v2135 = vrot.slane %v2114, 1
    %v2136 = vsel %vm208, %v2135, %v2134
    %v2137 = vrot.slane %v2116, 7
    %v2138 = vsel %vm190, %v2137, %v2115
    %v2139 = vrot.slane %v2117, 6
    %v2140 = vsel %vm193, %v2139, %v2138
    %v2141 = vrot.slane %v2118, 5
    %v2142 = vsel %vm196, %v2141, %v2140
    %v2143 = vrot.slane %v2119, 4
    %v2144 = vsel %vm199, %v2143, %v2142
    %v2145 = vrot.slane %v2120, 3
    %v2146 = vsel %vm202, %v2145, %v2144
    %v2147 = vrot.slane %v2121, 2
    %v2148 = vsel %vm205, %v2147, %v2146
    %v2149 = vrot.slane %v2122, 1
    %v2150 = vsel %vm208, %v2149, %v2148
    %v2151 = vpack.c.b16 %v2150, %v2136
    %v2156 = vunpack.c.l.b16 %v1996
    %v2157 = vunpack.c.l.b16 %v1997
    %v2158 = vunpack.c.l.b16 %v1998
    %v2159 = vunpack.c.l.b16 %v1999
    %v2160 = vpack.c.b16 %v2157, %v2156
    %v2161 = vpack.c.b16 %v2159, %v2158
    %v2165 = vsel %vm223, %v2151, 0
    %2167 = vmatpush.bf16.msra.mxu0 0
    %2168 = vmatpush.bf16.msra.mxu0 0
    %2169 = vmatpush.bf16.msra.mxu0 0
    %2170 = vmatpush.bf16.msra.mxu0 0
    %2171 = vmatpush.bf16.msra.mxu0 0
    %2172 = vmatpush.bf16.msra.mxu0 0
    %2173 = vmatpush.bf16.msra.mxu0 %v2161
    %2174 = vmatpush.bf16.msra.mxu0 %v2160
    %2175 = vmatmul.bf16.gmra.mxu0 %v2165
    %v2176 = vpop.f32.mrf.mxu0
    %v2177 = vadd.f32 %v256, %v2176
    %v2178 = vpop.f32.mrf.mxu0
    %v2179 = vadd.f32 %v256, %v2178
    %2180 = vdwg.mxu0
    %v2181 = vpack.c.bf16 %v1976, %v1976
    %v2182 = vpack.c.bf16 %v1977, %v1977
    %v2183 = vpack.c.bf16 %v1978, %v1978
    %v2184 = vpack.c.bf16 %v1979, %v1979
    %v2185 = vpack.c.bf16 %v1980, %v1980
    %v2186 = vpack.c.bf16 %v1981, %v1981
    %v2187 = vpack.c.bf16 %v1982, %v1982
    %v2188 = vpack.c.bf16 %v1983, %v1983
    %v2189 = vpack.c.bf16 %v1984, %v1984
    %v2190 = vpack.c.bf16 %v1985, %v1985
    %v2191 = vpack.c.bf16 %v1986, %v1986
    %v2192 = vpack.c.bf16 %v1987, %v1987
    %v2193 = vpack.c.bf16 %v1988, %v1988
    %v2194 = vpack.c.bf16 %v1989, %v1989
    %v2195 = vpack.c.bf16 %v1990, %v1990
    %v2196 = vpack.c.bf16 %v1991, %v1991
    %v2213 = vunpack.c.l.b16 %v2181
    %v2214 = vunpack.c.l.b16 %v2182
    %v2215 = vunpack.c.l.b16 %v2183
    %v2216 = vunpack.c.l.b16 %v2184
    %v2217 = vunpack.c.l.b16 %v2185
    %v2218 = vunpack.c.l.b16 %v2186
    %v2219 = vunpack.c.l.b16 %v2187
    %v2220 = vunpack.c.l.b16 %v2188
    %v2221 = vunpack.c.l.b16 %v2189
    %v2222 = vunpack.c.l.b16 %v2190
    %v2223 = vunpack.c.l.b16 %v2191
    %v2224 = vunpack.c.l.b16 %v2192
    %v2225 = vunpack.c.l.b16 %v2193
    %v2226 = vunpack.c.l.b16 %v2194
    %v2227 = vunpack.c.l.b16 %v2195
    %v2228 = vunpack.c.l.b16 %v2196
    %v2229 = vrot.slane %v2214, 7
    %v2230 = vsel %vm190, %v2229, %v2213
    %v2231 = vrot.slane %v2215, 6
    %v2232 = vsel %vm193, %v2231, %v2230
    %v2233 = vrot.slane %v2216, 5
    %v2234 = vsel %vm196, %v2233, %v2232
    %v2235 = vrot.slane %v2217, 4
    %v2236 = vsel %vm199, %v2235, %v2234
    %v2237 = vrot.slane %v2218, 3
    %v2238 = vsel %vm202, %v2237, %v2236
    %v2239 = vrot.slane %v2219, 2
    %v2240 = vsel %vm205, %v2239, %v2238
    %v2241 = vrot.slane %v2220, 1
    %v2242 = vsel %vm208, %v2241, %v2240
    %v2243 = vrot.slane %v2222, 7
    %v2244 = vsel %vm190, %v2243, %v2221
    %v2245 = vrot.slane %v2223, 6
    %v2246 = vsel %vm193, %v2245, %v2244
    %v2247 = vrot.slane %v2224, 5
    %v2248 = vsel %vm196, %v2247, %v2246
    %v2249 = vrot.slane %v2225, 4
    %v2250 = vsel %vm199, %v2249, %v2248
    %v2251 = vrot.slane %v2226, 3
    %v2252 = vsel %vm202, %v2251, %v2250
    %v2253 = vrot.slane %v2227, 2
    %v2254 = vsel %vm205, %v2253, %v2252
    %v2255 = vrot.slane %v2228, 1
    %v2256 = vsel %vm208, %v2255, %v2254
    %v2257 = vpack.c.b16 %v2256, %v2242
    %v2262 = vunpack.c.l.b16 %v2000
    %v2263 = vunpack.c.l.b16 %v2001
    %v2264 = vunpack.c.l.b16 %v2002
    %v2265 = vunpack.c.l.b16 %v2003
    %v2266 = vpack.c.b16 %v2263, %v2262
    %v2267 = vpack.c.b16 %v2265, %v2264
    %v2271 = vsel %vm223, %v2257, 0
    %2273 = vmatpush.bf16.msra.mxu0 0
    %2274 = vmatpush.bf16.msra.mxu0 0
    %2275 = vmatpush.bf16.msra.mxu0 0
    %2276 = vmatpush.bf16.msra.mxu0 0
    %2277 = vmatpush.bf16.msra.mxu0 0
    %2278 = vmatpush.bf16.msra.mxu0 0
    %2279 = vmatpush.bf16.msra.mxu0 %v2267
    %2280 = vmatpush.bf16.msra.mxu0 %v2266
    %2281 = vmatmul.bf16.gmra.mxu0 %v2271
    %v2282 = vpop.f32.mrf.mxu0
    %v2283 = vadd.f32 %v363, %v2282
    %v2284 = vpop.f32.mrf.mxu0
    %v2285 = vadd.f32 %v363, %v2284
    %2286 = vdwg.mxu0
    %v2287 = vmul.f32 %v2072, 0.35355338
    %2289 = vrot.lane.b32.xlu0 %v2287, 120
    %v2290 = vpop.permute.xlu0 %2289
    %2292 = vrot.lane.b32.xlu0 %v2287, 112
    %v2293 = vpop.permute.xlu0 %2292
    %2295 = vrot.lane.b32.xlu0 %v2287, 104
    %v2296 = vpop.permute.xlu0 %2295
    %2300 = vrot.lane.b32.xlu0 %v2177, 120
    %v2301 = vpop.permute.xlu0 %2300
    %2302 = vrot.lane.b32.xlu0 %v2179, 120
    %v2303 = vpop.permute.xlu0 %2302
    %2306 = vrot.lane.b32.xlu0 %v2177, 112
    %v2307 = vpop.permute.xlu0 %2306
    %2308 = vrot.lane.b32.xlu0 %v2179, 112
    %v2309 = vpop.permute.xlu0 %2308
    %2312 = vrot.lane.b32.xlu0 %v2177, 104
    %v2313 = vpop.permute.xlu0 %2312
    %2314 = vrot.lane.b32.xlu0 %v2179, 104
    %v2315 = vpop.permute.xlu0 %2314
    %2320 = vrot.lane.b32.xlu0 %v2283, 120
    %v2321 = vpop.permute.xlu0 %2320
    %2322 = vrot.lane.b32.xlu0 %v2285, 120
    %v2323 = vpop.permute.xlu0 %2322
    %2326 = vrot.lane.b32.xlu0 %v2283, 112
    %v2327 = vpop.permute.xlu0 %2326
    %2328 = vrot.lane.b32.xlu0 %v2285, 112
    %v2329 = vpop.permute.xlu0 %2328
    %2332 = vrot.lane.b32.xlu0 %v2283, 104
    %v2333 = vpop.permute.xlu0 %2332
    %2334 = vrot.lane.b32.xlu0 %v2285, 104
    %v2335 = vpop.permute.xlu0 %2334
    %v2338 = vpack.c.bf16 %v2287, %v2287
    %v2339 = vpack.c.bf16 %v2290, %v2290
    %v2340 = vpack.c.bf16 %v2293, %v2293
    %v2341 = vpack.c.bf16 %v2296, %v2296
    %v2342 = vpack.c.bf16 %v2177, %v2177
    %v2343 = vpack.c.bf16 %v2179, %v2179
    %v2344 = vpack.c.bf16 %v2301, %v2301
    %v2345 = vpack.c.bf16 %v2303, %v2303
    %v2346 = vpack.c.bf16 %v2307, %v2307
    %v2347 = vpack.c.bf16 %v2309, %v2309
    %v2348 = vpack.c.bf16 %v2313, %v2313
    %v2349 = vpack.c.bf16 %v2315, %v2315
    %v2352 = vunpack.c.l.b16 %v2342
    %v2353 = vunpack.c.l.b16 %v2343
    %v2354 = vpack.c.b16 %v2353, %v2352
    %v2356 = vsel %vm522, %v2338, 0
    %v2359 = vsel %vm522, %v2354, 0
    %2361 = vmatpush.bf16.xpose.msra.mxu0 0
    %2362 = vmatpush.bf16.xpose.msra.mxu0 0
    %2363 = vmatpush.bf16.xpose.msra.mxu0 0
    %2364 = vmatpush.bf16.xpose.msra.mxu0 0
    %2365 = vmatpush.bf16.xpose.msra.mxu0 0
    %2366 = vmatpush.bf16.xpose.msra.mxu0 0
    %2367 = vmatpush.bf16.xpose.msra.mxu0 0
    %2368 = vmatpush.bf16.xpose.msra.mxu0 %v2359
    %2369 = vmatmul.bf16.gmra.mxu0 %v2356
    %v2370 = vpop.f32.mrf.mxu0
    %v2371 = vadd.f32 0.0, %v2370
    %v2372 = vpop.f32.mrf.mxu0
    %2373 = vdwg.mxu0
    %v2376 = vunpack.c.l.b16 %v2344
    %v2377 = vunpack.c.l.b16 %v2345
    %v2378 = vpack.c.b16 %v2377, %v2376
    %v2380 = vsel %vm522, %v2339, 0
    %v2383 = vsel %vm522, %v2378, 0
    %2385 = vmatpush.bf16.xpose.msra.mxu0 0
    %2386 = vmatpush.bf16.xpose.msra.mxu0 0
    %2387 = vmatpush.bf16.xpose.msra.mxu0 0
    %2388 = vmatpush.bf16.xpose.msra.mxu0 0
    %2389 = vmatpush.bf16.xpose.msra.mxu0 0
    %2390 = vmatpush.bf16.xpose.msra.mxu0 0
    %2391 = vmatpush.bf16.xpose.msra.mxu0 0
    %2392 = vmatpush.bf16.xpose.msra.mxu0 %v2383
    %2393 = vmatmul.bf16.gmra.mxu0 %v2380
    %v2394 = vpop.f32.mrf.mxu0
    %v2395 = vadd.f32 0.0, %v2394
    %v2396 = vpop.f32.mrf.mxu0
    %2397 = vdwg.mxu0
    %v2400 = vunpack.c.l.b16 %v2346
    %v2401 = vunpack.c.l.b16 %v2347
    %v2402 = vpack.c.b16 %v2401, %v2400
    %v2404 = vsel %vm522, %v2340, 0
    %v2407 = vsel %vm522, %v2402, 0
    %2409 = vmatpush.bf16.xpose.msra.mxu0 0
    %2410 = vmatpush.bf16.xpose.msra.mxu0 0
    %2411 = vmatpush.bf16.xpose.msra.mxu0 0
    %2412 = vmatpush.bf16.xpose.msra.mxu0 0
    %2413 = vmatpush.bf16.xpose.msra.mxu0 0
    %2414 = vmatpush.bf16.xpose.msra.mxu0 0
    %2415 = vmatpush.bf16.xpose.msra.mxu0 0
    %2416 = vmatpush.bf16.xpose.msra.mxu0 %v2407
    %2417 = vmatmul.bf16.gmra.mxu0 %v2404
    %v2418 = vpop.f32.mrf.mxu0
    %v2419 = vadd.f32 0.0, %v2418
    %v2420 = vpop.f32.mrf.mxu0
    %2421 = vdwg.mxu0
    %v2424 = vunpack.c.l.b16 %v2348
    %v2425 = vunpack.c.l.b16 %v2349
    %v2426 = vpack.c.b16 %v2425, %v2424
    %v2428 = vsel %vm522, %v2341, 0
    %v2431 = vsel %vm522, %v2426, 0
    %2433 = vmatpush.bf16.xpose.msra.mxu0 0
    %2434 = vmatpush.bf16.xpose.msra.mxu0 0
    %2435 = vmatpush.bf16.xpose.msra.mxu0 0
    %2436 = vmatpush.bf16.xpose.msra.mxu0 0
    %2437 = vmatpush.bf16.xpose.msra.mxu0 0
    %2438 = vmatpush.bf16.xpose.msra.mxu0 0
    %2439 = vmatpush.bf16.xpose.msra.mxu0 0
    %2440 = vmatpush.bf16.xpose.msra.mxu0 %v2431
    %2441 = vmatmul.bf16.gmra.mxu0 %v2428
    %v2442 = vpop.f32.mrf.mxu0
    %v2443 = vadd.f32 0.0, %v2442
    %v2444 = vpop.f32.mrf.mxu0
    %2445 = vdwg.mxu0
    %v2446 = vsel %vm614, %v2371, -inf
    %2447 = vmax.xlane.f32.xlu0 %v2446
    %v2448 = vpop.xlane.xlu0 %2447
    %v2449 = vsel %vm614, %v2395, -inf
    %2450 = vmax.xlane.f32.xlu0 %v2449
    %v2451 = vpop.xlane.xlu0 %2450
    %v2452 = vsel %vm614, %v2419, -inf
    %2453 = vmax.xlane.f32.xlu0 %v2452
    %v2454 = vpop.xlane.xlu0 %2453
    %v2455 = vsel %vm614, %v2443, -inf
    %2456 = vmax.xlane.f32.xlu0 %v2455
    %v2457 = vpop.xlane.xlu0 %2456
    %v2458 = vsub.f32 %v2371, %v2448
    %v2459 = vsub.f32 %v2395, %v2451
    %v2460 = vsub.f32 %v2419, %v2454
    %v2461 = vsub.f32 %v2443, %v2457
    %v2462 = vmul.f32 %v2458, 1.442695
    %v2463 = vpow.pop %v2462
    %v2464 = vmul.f32 %v2459, 1.442695
    %v2465 = vpow.pop %v2464
    %v2466 = vmul.f32 %v2460, 1.442695
    %v2467 = vpow.pop %v2466
    %v2468 = vmul.f32 %v2461, 1.442695
    %v2469 = vpow.pop %v2468
    %v2470 = vsel %vm614, %v2463, 0.0
    %2471 = vadd.xlane.f32.xlu0 %v2470
    %v2472 = vpop.xlane.xlu0 %2471
    %v2473 = vsel %vm614, %v2465, 0.0
    %2474 = vadd.xlane.f32.xlu0 %v2473
    %v2475 = vpop.xlane.xlu0 %2474
    %v2476 = vsel %vm614, %v2467, 0.0
    %2477 = vadd.xlane.f32.xlu0 %v2476
    %v2478 = vpop.xlane.xlu0 %2477
    %v2479 = vsel %vm614, %v2469, 0.0
    %2480 = vadd.xlane.f32.xlu0 %v2479
    %v2481 = vpop.xlane.xlu0 %2480
    %v2482 = vpack.c.bf16 %v2463, %v2463
    %v2483 = vpack.c.bf16 %v2465, %v2465
    %v2484 = vpack.c.bf16 %v2467, %v2467
    %v2485 = vpack.c.bf16 %v2469, %v2469
    %v2486 = vpack.c.bf16 %v2283, %v2283
    %v2487 = vpack.c.bf16 %v2285, %v2285
    %v2488 = vpack.c.bf16 %v2321, %v2321
    %v2489 = vpack.c.bf16 %v2323, %v2323
    %v2490 = vpack.c.bf16 %v2327, %v2327
    %v2491 = vpack.c.bf16 %v2329, %v2329
    %v2492 = vpack.c.bf16 %v2333, %v2333
    %v2493 = vpack.c.bf16 %v2335, %v2335
    %v2496 = vunpack.c.l.b16 %v2486
    %v2497 = vunpack.c.l.b16 %v2487
    %v2498 = vpack.c.b16 %v2497, %v2496
    %v2501 = vsel %vm614, %v2482, 0
    %2503 = vmatpush.bf16.msra.mxu0 0
    %2504 = vmatpush.bf16.msra.mxu0 0
    %2505 = vmatpush.bf16.msra.mxu0 0
    %2506 = vmatpush.bf16.msra.mxu0 0
    %2507 = vmatpush.bf16.msra.mxu0 0
    %2508 = vmatpush.bf16.msra.mxu0 0
    %2509 = vmatpush.bf16.msra.mxu0 0
    %2510 = vmatpush.bf16.msra.mxu0 %v2498
    %2511 = vmatmul.bf16.gmra.mxu0 %v2501
    %v2512 = vpop.f32.mrf.mxu0
    %v2513 = vadd.f32 0.0, %v2512
    %v2514 = vpop.f32.mrf.mxu0
    %2515 = vdwg.mxu0
    %v2518 = vunpack.c.l.b16 %v2488
    %v2519 = vunpack.c.l.b16 %v2489
    %v2520 = vpack.c.b16 %v2519, %v2518
    %v2523 = vsel %vm614, %v2483, 0
    %2525 = vmatpush.bf16.msra.mxu0 0
    %2526 = vmatpush.bf16.msra.mxu0 0
    %2527 = vmatpush.bf16.msra.mxu0 0
    %2528 = vmatpush.bf16.msra.mxu0 0
    %2529 = vmatpush.bf16.msra.mxu0 0
    %2530 = vmatpush.bf16.msra.mxu0 0
    %2531 = vmatpush.bf16.msra.mxu0 0
    %2532 = vmatpush.bf16.msra.mxu0 %v2520
    %2533 = vmatmul.bf16.gmra.mxu0 %v2523
    %v2534 = vpop.f32.mrf.mxu0
    %v2535 = vadd.f32 0.0, %v2534
    %v2536 = vpop.f32.mrf.mxu0
    %2537 = vdwg.mxu0
    %v2540 = vunpack.c.l.b16 %v2490
    %v2541 = vunpack.c.l.b16 %v2491
    %v2542 = vpack.c.b16 %v2541, %v2540
    %v2545 = vsel %vm614, %v2484, 0
    %2547 = vmatpush.bf16.msra.mxu0 0
    %2548 = vmatpush.bf16.msra.mxu0 0
    %2549 = vmatpush.bf16.msra.mxu0 0
    %2550 = vmatpush.bf16.msra.mxu0 0
    %2551 = vmatpush.bf16.msra.mxu0 0
    %2552 = vmatpush.bf16.msra.mxu0 0
    %2553 = vmatpush.bf16.msra.mxu0 0
    %2554 = vmatpush.bf16.msra.mxu0 %v2542
    %2555 = vmatmul.bf16.gmra.mxu0 %v2545
    %v2556 = vpop.f32.mrf.mxu0
    %v2557 = vadd.f32 0.0, %v2556
    %v2558 = vpop.f32.mrf.mxu0
    %2559 = vdwg.mxu0
    %v2562 = vunpack.c.l.b16 %v2492
    %v2563 = vunpack.c.l.b16 %v2493
    %v2564 = vpack.c.b16 %v2563, %v2562
    %v2567 = vsel %vm614, %v2485, 0
    %2569 = vmatpush.bf16.msra.mxu0 0
    %2570 = vmatpush.bf16.msra.mxu0 0
    %2571 = vmatpush.bf16.msra.mxu0 0
    %2572 = vmatpush.bf16.msra.mxu0 0
    %2573 = vmatpush.bf16.msra.mxu0 0
    %2574 = vmatpush.bf16.msra.mxu0 0
    %2575 = vmatpush.bf16.msra.mxu0 0
    %2576 = vmatpush.bf16.msra.mxu0 %v2564
    %2577 = vmatmul.bf16.gmra.mxu0 %v2567
    %v2578 = vpop.f32.mrf.mxu0
    %v2579 = vadd.f32 0.0, %v2578
    %v2580 = vpop.f32.mrf.mxu0
    %2581 = vdwg.mxu0
    %v2582 = vrcp.pop %v2472
    %v2583 = vrcp.pop %v2475
    %v2584 = vrcp.pop %v2478
    %v2585 = vrcp.pop %v2481
    %v2586 = vmul.f32 %v2513, %v2582
    %v2587 = vmul.f32 %v2535, %v2583
    %v2588 = vmul.f32 %v2557, %v2584
    %v2589 = vmul.f32 %v2579, %v2585
    %v2590 = vpack.c.bf16 %v2586, %v2586
    %v2592 = vsel %vm522, %v2590, 0
    %v2595 = vsel %vm763, %v2004, 0
    %2597 = vmatpush.bf16.msra.mxu0 0
    %2598 = vmatpush.bf16.msra.mxu0 0
    %2599 = vmatpush.bf16.msra.mxu0 0
    %2600 = vmatpush.bf16.msra.mxu0 0
    %2601 = vmatpush.bf16.msra.mxu0 0
    %2602 = vmatpush.bf16.msra.mxu0 0
    %2603 = vmatpush.bf16.msra.mxu0 0
    %2604 = vmatpush.bf16.msra.mxu0 %v2595
    %2605 = vmatmul.bf16.gmra.mxu0 %v2592
    %v2606 = vpop.f32.mrf.mxu0
    %v2607 = vadd.f32 0.0, %v2606
    %v2608 = vpop.f32.mrf.mxu0
    %2609 = vdwg.mxu0
    %v2610 = vadd.f32 %v780, %v2607
    %v2611 = vpack.c.bf16 %v2587, %v2587
    %v2613 = vsel %vm522, %v2611, 0
    %v2616 = vsel %vm763, %v2005, 0
    %2618 = vmatpush.bf16.msra.mxu0 0
    %2619 = vmatpush.bf16.msra.mxu0 0
    %2620 = vmatpush.bf16.msra.mxu0 0
    %2621 = vmatpush.bf16.msra.mxu0 0
    %2622 = vmatpush.bf16.msra.mxu0 0
    %2623 = vmatpush.bf16.msra.mxu0 0
    %2624 = vmatpush.bf16.msra.mxu0 0
    %2625 = vmatpush.bf16.msra.mxu0 %v2616
    %2626 = vmatmul.bf16.gmra.mxu0 %v2613
    %v2627 = vpop.f32.mrf.mxu0
    %v2628 = vadd.f32 0.0, %v2627
    %v2629 = vpop.f32.mrf.mxu0
    %2630 = vdwg.mxu0
    %v2631 = vadd.f32 %v2610, %v2628
    %v2632 = vpack.c.bf16 %v2588, %v2588
    %v2634 = vsel %vm522, %v2632, 0
    %v2637 = vsel %vm763, %v2006, 0
    %2639 = vmatpush.bf16.msra.mxu0 0
    %2640 = vmatpush.bf16.msra.mxu0 0
    %2641 = vmatpush.bf16.msra.mxu0 0
    %2642 = vmatpush.bf16.msra.mxu0 0
    %2643 = vmatpush.bf16.msra.mxu0 0
    %2644 = vmatpush.bf16.msra.mxu0 0
    %2645 = vmatpush.bf16.msra.mxu0 0
    %2646 = vmatpush.bf16.msra.mxu0 %v2637
    %2647 = vmatmul.bf16.gmra.mxu0 %v2634
    %v2648 = vpop.f32.mrf.mxu0
    %v2649 = vadd.f32 0.0, %v2648
    %v2650 = vpop.f32.mrf.mxu0
    %2651 = vdwg.mxu0
    %v2652 = vadd.f32 %v2631, %v2649
    %v2653 = vpack.c.bf16 %v2589, %v2589
    %v2655 = vsel %vm522, %v2653, 0
    %v2658 = vsel %vm763, %v2007, 0
    %2660 = vmatpush.bf16.msra.mxu0 0
    %2661 = vmatpush.bf16.msra.mxu0 0
    %2662 = vmatpush.bf16.msra.mxu0 0
    %2663 = vmatpush.bf16.msra.mxu0 0
    %2664 = vmatpush.bf16.msra.mxu0 0
    %2665 = vmatpush.bf16.msra.mxu0 0
    %2666 = vmatpush.bf16.msra.mxu0 0
    %2667 = vmatpush.bf16.msra.mxu0 %v2658
    %2668 = vmatmul.bf16.gmra.mxu0 %v2655
    %v2669 = vpop.f32.mrf.mxu0
    %v2670 = vadd.f32 0.0, %v2669
    %v2671 = vpop.f32.mrf.mxu0
    %2672 = vdwg.mxu0
    %v2673 = vadd.f32 %v2652, %v2670
    %v2675 = vrot.slane %v2673, 1
    %v2676 = vrot.slane %v2673, 2
    %v2677 = vrot.slane %v2673, 3
    %v2678 = vrot.slane %v2673, 4
    %v2679 = vrot.slane %v2673, 5
    %v2680 = vrot.slane %v2673, 6
    %v2681 = vrot.slane %v2673, 7
    %v2690 = vadd.f32 %v1952, %v2673
    %v2691 = vadd.f32 %v1953, %v2675
    %v2692 = vadd.f32 %v1954, %v2676
    %v2693 = vadd.f32 %v1955, %v2677
    %v2694 = vadd.f32 %v1956, %v2678
    %v2695 = vadd.f32 %v1957, %v2679
    %v2696 = vadd.f32 %v1958, %v2680
    %v2697 = vadd.f32 %v1959, %v2681
    %v2706 = vrot.slane %v2691, 7
    %v2707 = vsel %vm190, %v2706, %v2690
    %v2708 = vrot.slane %v2692, 6
    %v2709 = vsel %vm193, %v2708, %v2707
    %v2710 = vrot.slane %v2693, 5
    %v2711 = vsel %vm196, %v2710, %v2709
    %v2712 = vrot.slane %v2694, 4
    %v2713 = vsel %vm199, %v2712, %v2711
    %v2714 = vrot.slane %v2695, 3
    %v2715 = vsel %vm202, %v2714, %v2713
    %v2716 = vrot.slane %v2696, 2
    %v2717 = vsel %vm205, %v2716, %v2715
    %v2718 = vrot.slane %v2697, 1
    %v2719 = vsel %vm208, %v2718, %v2717
    %v2721 = vsel %vm223, %v2719, 0.0
    %2722 = vadd.xlane.f32.xlu0 %v2721
    %v2723 = vpop.xlane.xlu0 %2722
    %v2724 = vmul.f32 %v2723, %v901
    %v2726 = vrot.slane %v2724, 1
    %v2727 = vrot.slane %v2724, 2
    %v2728 = vrot.slane %v2724, 3
    %v2729 = vrot.slane %v2724, 4
    %v2730 = vrot.slane %v2724, 5
    %v2731 = vrot.slane %v2724, 6
    %v2732 = vrot.slane %v2724, 7
    %v2741 = vsub.f32 %v2690, %v2724
    %v2742 = vsub.f32 %v2691, %v2726
    %v2743 = vsub.f32 %v2692, %v2727
    %v2744 = vsub.f32 %v2693, %v2728
    %v2745 = vsub.f32 %v2694, %v2729
    %v2746 = vsub.f32 %v2695, %v2730
    %v2747 = vsub.f32 %v2696, %v2731
    %v2748 = vsub.f32 %v2697, %v2732
    %v2749 = vmul.f32 %v2741, %v2741
    %v2750 = vmul.f32 %v2742, %v2742
    %v2751 = vmul.f32 %v2743, %v2743
    %v2752 = vmul.f32 %v2744, %v2744
    %v2753 = vmul.f32 %v2745, %v2745
    %v2754 = vmul.f32 %v2746, %v2746
    %v2755 = vmul.f32 %v2747, %v2747
    %v2756 = vmul.f32 %v2748, %v2748
    %v2765 = vrot.slane %v2750, 7
    %v2766 = vsel %vm190, %v2765, %v2749
    %v2767 = vrot.slane %v2751, 6
    %v2768 = vsel %vm193, %v2767, %v2766
    %v2769 = vrot.slane %v2752, 5
    %v2770 = vsel %vm196, %v2769, %v2768
    %v2771 = vrot.slane %v2753, 4
    %v2772 = vsel %vm199, %v2771, %v2770
    %v2773 = vrot.slane %v2754, 3
    %v2774 = vsel %vm202, %v2773, %v2772
    %v2775 = vrot.slane %v2755, 2
    %v2776 = vsel %vm205, %v2775, %v2774
    %v2777 = vrot.slane %v2756, 1
    %v2778 = vsel %vm208, %v2777, %v2776
    %v2780 = vsel %vm223, %v2778, 0.0
    %2781 = vadd.xlane.f32.xlu0 %v2780
    %v2782 = vpop.xlane.xlu0 %2781
    %v2783 = vmul.f32 %v2782, %v901
    %v2784 = vadd.f32 %v2783, 1e-05
    %v2785 = vrsqrt.pop %v2784
    %v2786 = vmul.f32 %v2785, %v2784
    %v2787 = vmul.f32 %v2786, %v2785
    %v2788 = vmul.f32 0.5, %v2787
    %v2789 = vsub.f32 1.5, %v2788
    %v2790 = vmul.f32 %v2785, %v2789
    %vm2791 = vweird.f32 %v2784
    %vm2792 = vweird.f32 %v2785
    %vm2793 = vmor %vm2791, %vm2792
    %v2794 = vsel %vm2793, %v2785, %v2790
    %v2796 = vrot.slane %v2794, 1
    %v2797 = vrot.slane %v2794, 2
    %v2798 = vrot.slane %v2794, 3
    %v2799 = vrot.slane %v2794, 4
    %v2800 = vrot.slane %v2794, 5
    %v2801 = vrot.slane %v2794, 6
    %v2802 = vrot.slane %v2794, 7
    %v2811 = vmul.f32 %v2741, %v2794
    %v2812 = vmul.f32 %v2742, %v2796
    %v2813 = vmul.f32 %v2743, %v2797
    %v2814 = vmul.f32 %v2744, %v2798
    %v2815 = vmul.f32 %v2745, %v2799
    %v2816 = vmul.f32 %v2746, %v2800
    %v2817 = vmul.f32 %v2747, %v2801
    %v2818 = vmul.f32 %v2748, %v2802
    %v2819 = vmul.f32 %v2811, %v997
    %v2820 = vmul.f32 %v2812, %v997
    %v2821 = vmul.f32 %v2813, %v997
    %v2822 = vmul.f32 %v2814, %v997
    %v2823 = vmul.f32 %v2815, %v997
    %v2824 = vmul.f32 %v2816, %v997
    %v2825 = vmul.f32 %v2817, %v997
    %v2826 = vmul.f32 %v2818, %v997
    %v2827 = vadd.f32 %v2819, %v1006
    %v2828 = vadd.f32 %v2820, %v1006
    %v2829 = vadd.f32 %v2821, %v1006
    %v2830 = vadd.f32 %v2822, %v1006
    %v2831 = vadd.f32 %v2823, %v1006
    %v2832 = vadd.f32 %v2824, %v1006
    %v2833 = vadd.f32 %v2825, %v1006
    %v2834 = vadd.f32 %v2826, %v1006
    %v2835 = vld [vmem:[%s1015] sm:$0xf]
    %v2836 = vld [vmem:[%s1015 + $0x4] sm:$0xf]
    %v2837 = vld [vmem:[%s1015 + $0x8] sm:$0xf]
    %v2838 = vld [vmem:[%s1015 + $0xc] sm:$0xf]
    %v2839 = vld [vmem:[%s1020] sm:$0xf]
    %v2840 = vld [vmem:[%s1020 + $0x4] sm:$0xf]
    %v2841 = vld [vmem:[%s1020 + $0x8] sm:$0xf]
    %v2842 = vld [vmem:[%s1020 + $0xc] sm:$0xf]
    %v2843 = vld [vmem:[%s1025] sm:$0xf]
    %v2844 = vld [vmem:[%s1025 + $0x4] sm:$0xf]
    %v2845 = vld [vmem:[%s1025 + $0x8] sm:$0xf]
    %v2846 = vld [vmem:[%s1025 + $0xc] sm:$0xf]
    %v2847 = vld [vmem:[%s1030] sm:$0xf]
    %v2848 = vld [vmem:[%s1030 + $0x4] sm:$0xf]
    %v2849 = vld [vmem:[%s1030 + $0x8] sm:$0xf]
    %v2850 = vld [vmem:[%s1030 + $0xc] sm:$0xf]
    %v2855 = vunpack.c.l.b16 %v2835
    %v2856 = vunpack.c.l.b16 %v2836
    %v2857 = vunpack.c.l.b16 %v2837
    %v2858 = vunpack.c.l.b16 %v2838
    %v2859 = vpack.c.b16 %v2856, %v2855
    %v2860 = vpack.c.b16 %v2858, %v2857
    %2863 = vmatpush.bf16.msra.mxu0 0
    %2864 = vmatpush.bf16.msra.mxu0 0
    %2865 = vmatpush.bf16.msra.mxu0 0
    %2866 = vmatpush.bf16.msra.mxu0 0
    %2867 = vmatpush.bf16.msra.mxu0 0
    %2868 = vmatpush.bf16.msra.mxu0 0
    %2869 = vmatpush.bf16.msra.mxu0 %v2860
    %2870 = vmatpush.bf16.msra.mxu0 %v2859
    %2871 = vmatmul.bf16.gmra.mxu0 %v2165
    %v2872 = vpop.f32.mrf.mxu0
    %v2873 = vadd.f32 %v1035, %v2872
    %v2874 = vpop.f32.mrf.mxu0
    %v2875 = vadd.f32 %v1035, %v2874
    %2876 = vdwg.mxu0
    %v2877 = vpack.c.bf16 %v2827, %v2827
    %v2878 = vpack.c.bf16 %v2828, %v2828
    %v2879 = vpack.c.bf16 %v2829, %v2829
    %v2880 = vpack.c.bf16 %v2830, %v2830
    %v2881 = vpack.c.bf16 %v2831, %v2831
    %v2882 = vpack.c.bf16 %v2832, %v2832
    %v2883 = vpack.c.bf16 %v2833, %v2833
    %v2884 = vpack.c.bf16 %v2834, %v2834
    %v2893 = vunpack.c.l.b16 %v2877
    %v2894 = vunpack.c.l.b16 %v2878
    %v2895 = vunpack.c.l.b16 %v2879
    %v2896 = vunpack.c.l.b16 %v2880
    %v2897 = vunpack.c.l.b16 %v2881
    %v2898 = vunpack.c.l.b16 %v2882
    %v2899 = vunpack.c.l.b16 %v2883
    %v2900 = vunpack.c.l.b16 %v2884
    %v2901 = vrot.slane %v2894, 7
    %v2902 = vsel %vm190, %v2901, %v2893
    %v2903 = vrot.slane %v2895, 6
    %v2904 = vsel %vm193, %v2903, %v2902
    %v2905 = vrot.slane %v2896, 5
    %v2906 = vsel %vm196, %v2905, %v2904
    %v2907 = vrot.slane %v2897, 4
    %v2908 = vsel %vm199, %v2907, %v2906
    %v2909 = vrot.slane %v2898, 3
    %v2910 = vsel %vm202, %v2909, %v2908
    %v2911 = vrot.slane %v2899, 2
    %v2912 = vsel %vm205, %v2911, %v2910
    %v2913 = vrot.slane %v2900, 1
    %v2914 = vsel %vm208, %v2913, %v2912
    %v2915 = vpack.c.b16 %v2914, %v2914
    %v2920 = vunpack.c.l.b16 %v2839
    %v2921 = vunpack.c.l.b16 %v2840
    %v2922 = vunpack.c.l.b16 %v2841
    %v2923 = vunpack.c.l.b16 %v2842
    %v2924 = vpack.c.b16 %v2921, %v2920
    %v2925 = vpack.c.b16 %v2923, %v2922
    %v2929 = vsel %vm223, %v2915, 0
    %2931 = vmatpush.bf16.msra.mxu0 0
    %2932 = vmatpush.bf16.msra.mxu0 0
    %2933 = vmatpush.bf16.msra.mxu0 0
    %2934 = vmatpush.bf16.msra.mxu0 0
    %2935 = vmatpush.bf16.msra.mxu0 0
    %2936 = vmatpush.bf16.msra.mxu0 0
    %2937 = vmatpush.bf16.msra.mxu0 %v2925
    %2938 = vmatpush.bf16.msra.mxu0 %v2924
    %2939 = vmatmul.bf16.gmra.mxu0 %v2929
    %v2940 = vpop.f32.mrf.mxu0
    %v2941 = vadd.f32 %v1070, %v2940
    %v2942 = vpop.f32.mrf.mxu0
    %2943 = vdwg.mxu0
    %v2948 = vunpack.c.l.b16 %v2843
    %v2949 = vunpack.c.l.b16 %v2844
    %v2950 = vunpack.c.l.b16 %v2845
    %v2951 = vunpack.c.l.b16 %v2846
    %v2952 = vpack.c.b16 %v2949, %v2948
    %v2953 = vpack.c.b16 %v2951, %v2950
    %2956 = vmatpush.bf16.msra.mxu0 0
    %2957 = vmatpush.bf16.msra.mxu0 0
    %2958 = vmatpush.bf16.msra.mxu0 0
    %2959 = vmatpush.bf16.msra.mxu0 0
    %2960 = vmatpush.bf16.msra.mxu0 0
    %2961 = vmatpush.bf16.msra.mxu0 0
    %2962 = vmatpush.bf16.msra.mxu0 %v2953
    %2963 = vmatpush.bf16.msra.mxu0 %v2952
    %2964 = vmatmul.bf16.gmra.mxu0 %v2929
    %v2965 = vpop.f32.mrf.mxu0
    %v2966 = vadd.f32 %v1130, %v2965
    %v2967 = vpop.f32.mrf.mxu0
    %2968 = vdwg.mxu0
    %v2969 = vmul.f32 %v2873, 0.35355338
    %v2970 = vmul.f32 %v2875, 0.35355338
    %2973 = vrot.lane.b32.xlu0 %v2969, 120
    %v2974 = vpop.permute.xlu0 %2973
    %2975 = vrot.lane.b32.xlu0 %v2970, 120
    %v2976 = vpop.permute.xlu0 %2975
    %2979 = vrot.lane.b32.xlu0 %v2969, 112
    %v2980 = vpop.permute.xlu0 %2979
    %2981 = vrot.lane.b32.xlu0 %v2970, 112
    %v2982 = vpop.permute.xlu0 %2981
    %2985 = vrot.lane.b32.xlu0 %v2969, 104
    %v2986 = vpop.permute.xlu0 %2985
    %2987 = vrot.lane.b32.xlu0 %v2970, 104
    %v2988 = vpop.permute.xlu0 %2987
    %2992 = vrot.lane.b32.xlu0 %v2941, 120
    %v2993 = vpop.permute.xlu0 %2992
    %2995 = vrot.lane.b32.xlu0 %v2941, 112
    %v2996 = vpop.permute.xlu0 %2995
    %2998 = vrot.lane.b32.xlu0 %v2941, 104
    %v2999 = vpop.permute.xlu0 %2998
    %3002 = vrot.lane.b32.xlu0 %v2966, 120
    %v3003 = vpop.permute.xlu0 %3002
    %3005 = vrot.lane.b32.xlu0 %v2966, 112
    %v3006 = vpop.permute.xlu0 %3005
    %3008 = vrot.lane.b32.xlu0 %v2966, 104
    %v3009 = vpop.permute.xlu0 %3008
    %v3011 = vpack.c.bf16 %v2969, %v2969
    %v3012 = vpack.c.bf16 %v2970, %v2970
    %v3013 = vpack.c.bf16 %v2974, %v2974
    %v3014 = vpack.c.bf16 %v2976, %v2976
    %v3015 = vpack.c.bf16 %v2980, %v2980
    %v3016 = vpack.c.bf16 %v2982, %v2982
    %v3017 = vpack.c.bf16 %v2986, %v2986
    %v3018 = vpack.c.bf16 %v2988, %v2988
    %v3019 = vpack.c.bf16 %v2941, %v2941
    %v3020 = vpack.c.bf16 %v2993, %v2993
    %v3021 = vpack.c.bf16 %v2996, %v2996
    %v3022 = vpack.c.bf16 %v2999, %v2999
    %v3025 = vunpack.c.l.b16 %v3011
    %v3026 = vunpack.c.l.b16 %v3012
    %v3027 = vpack.c.b16 %v3026, %v3025
    %v3029 = vsel %vm522, %v3027, 0
    %v3032 = vsel %vm522, %v3019, 0
    %3034 = vmatpush.bf16.xpose.msra.mxu0 0
    %3035 = vmatpush.bf16.xpose.msra.mxu0 0
    %3036 = vmatpush.bf16.xpose.msra.mxu0 0
    %3037 = vmatpush.bf16.xpose.msra.mxu0 0
    %3038 = vmatpush.bf16.xpose.msra.mxu0 0
    %3039 = vmatpush.bf16.xpose.msra.mxu0 0
    %3040 = vmatpush.bf16.xpose.msra.mxu0 0
    %3041 = vmatpush.bf16.xpose.msra.mxu0 %v3032
    %3042 = vmatmul.bf16.gmra.mxu0 %v3029
    %v3043 = vpop.f32.mrf.mxu0
    %v3044 = vadd.f32 0.0, %v3043
    %v3045 = vpop.f32.mrf.mxu0
    %v3046 = vadd.f32 0.0, %v3045
    %3047 = vdwg.mxu0
    %v3050 = vunpack.c.l.b16 %v3013
    %v3051 = vunpack.c.l.b16 %v3014
    %v3052 = vpack.c.b16 %v3051, %v3050
    %v3054 = vsel %vm522, %v3052, 0
    %v3057 = vsel %vm522, %v3020, 0
    %3059 = vmatpush.bf16.xpose.msra.mxu0 0
    %3060 = vmatpush.bf16.xpose.msra.mxu0 0
    %3061 = vmatpush.bf16.xpose.msra.mxu0 0
    %3062 = vmatpush.bf16.xpose.msra.mxu0 0
    %3063 = vmatpush.bf16.xpose.msra.mxu0 0
    %3064 = vmatpush.bf16.xpose.msra.mxu0 0
    %3065 = vmatpush.bf16.xpose.msra.mxu0 0
    %3066 = vmatpush.bf16.xpose.msra.mxu0 %v3057
    %3067 = vmatmul.bf16.gmra.mxu0 %v3054
    %v3068 = vpop.f32.mrf.mxu0
    %v3069 = vadd.f32 0.0, %v3068
    %v3070 = vpop.f32.mrf.mxu0
    %v3071 = vadd.f32 0.0, %v3070
    %3072 = vdwg.mxu0
    %v3075 = vunpack.c.l.b16 %v3015
    %v3076 = vunpack.c.l.b16 %v3016
    %v3077 = vpack.c.b16 %v3076, %v3075
    %v3079 = vsel %vm522, %v3077, 0
    %v3082 = vsel %vm522, %v3021, 0
    %3084 = vmatpush.bf16.xpose.msra.mxu0 0
    %3085 = vmatpush.bf16.xpose.msra.mxu0 0
    %3086 = vmatpush.bf16.xpose.msra.mxu0 0
    %3087 = vmatpush.bf16.xpose.msra.mxu0 0
    %3088 = vmatpush.bf16.xpose.msra.mxu0 0
    %3089 = vmatpush.bf16.xpose.msra.mxu0 0
    %3090 = vmatpush.bf16.xpose.msra.mxu0 0
    %3091 = vmatpush.bf16.xpose.msra.mxu0 %v3082
    %3092 = vmatmul.bf16.gmra.mxu0 %v3079
    %v3093 = vpop.f32.mrf.mxu0
    %v3094 = vadd.f32 0.0, %v3093
    %v3095 = vpop.f32.mrf.mxu0
    %v3096 = vadd.f32 0.0, %v3095
    %3097 = vdwg.mxu0
    %v3100 = vunpack.c.l.b16 %v3017
    %v3101 = vunpack.c.l.b16 %v3018
    %v3102 = vpack.c.b16 %v3101, %v3100
    %v3104 = vsel %vm522, %v3102, 0
    %v3107 = vsel %vm522, %v3022, 0
    %3109 = vmatpush.bf16.xpose.msra.mxu0 0
    %3110 = vmatpush.bf16.xpose.msra.mxu0 0
    %3111 = vmatpush.bf16.xpose.msra.mxu0 0
    %3112 = vmatpush.bf16.xpose.msra.mxu0 0
    %3113 = vmatpush.bf16.xpose.msra.mxu0 0
    %3114 = vmatpush.bf16.xpose.msra.mxu0 0
    %3115 = vmatpush.bf16.xpose.msra.mxu0 0
    %3116 = vmatpush.bf16.xpose.msra.mxu0 %v3107
    %3117 = vmatmul.bf16.gmra.mxu0 %v3104
    %v3118 = vpop.f32.mrf.mxu0
    %v3119 = vadd.f32 0.0, %v3118
    %v3120 = vpop.f32.mrf.mxu0
    %v3121 = vadd.f32 0.0, %v3120
    %3122 = vdwg.mxu0
    %v3123 = vsel %vm522, %v3044, -inf
    %3124 = vmax.xlane.f32.xlu0 %v3123
    %v3125 = vpop.xlane.xlu0 %3124
    %v3126 = vsel %vm522, %v3046, -inf
    %3127 = vmax.xlane.f32.xlu0 %v3126
    %v3128 = vpop.xlane.xlu0 %3127
    %v3129 = vsel %vm522, %v3069, -inf
    %3130 = vmax.xlane.f32.xlu0 %v3129
    %v3131 = vpop.xlane.xlu0 %3130
    %v3132 = vsel %vm522, %v3071, -inf
    %3133 = vmax.xlane.f32.xlu0 %v3132
    %v3134 = vpop.xlane.xlu0 %3133
    %v3135 = vsel %vm522, %v3094, -inf
    %3136 = vmax.xlane.f32.xlu0 %v3135
    %v3137 = vpop.xlane.xlu0 %3136
    %v3138 = vsel %vm522, %v3096, -inf
    %3139 = vmax.xlane.f32.xlu0 %v3138
    %v3140 = vpop.xlane.xlu0 %3139
    %v3141 = vsel %vm522, %v3119, -inf
    %3142 = vmax.xlane.f32.xlu0 %v3141
    %v3143 = vpop.xlane.xlu0 %3142
    %v3144 = vsel %vm522, %v3121, -inf
    %3145 = vmax.xlane.f32.xlu0 %v3144
    %v3146 = vpop.xlane.xlu0 %3145
    %v3147 = vsub.f32 %v3044, %v3125
    %v3148 = vsub.f32 %v3046, %v3128
    %v3149 = vsub.f32 %v3069, %v3131
    %v3150 = vsub.f32 %v3071, %v3134
    %v3151 = vsub.f32 %v3094, %v3137
    %v3152 = vsub.f32 %v3096, %v3140
    %v3153 = vsub.f32 %v3119, %v3143
    %v3154 = vsub.f32 %v3121, %v3146
    %v3155 = vmul.f32 %v3147, 1.442695
    %v3156 = vpow.pop %v3155
    %v3157 = vmul.f32 %v3148, 1.442695
    %v3158 = vpow.pop %v3157
    %v3159 = vmul.f32 %v3149, 1.442695
    %v3160 = vpow.pop %v3159
    %v3161 = vmul.f32 %v3150, 1.442695
    %v3162 = vpow.pop %v3161
    %v3163 = vmul.f32 %v3151, 1.442695
    %v3164 = vpow.pop %v3163
    %v3165 = vmul.f32 %v3152, 1.442695
    %v3166 = vpow.pop %v3165
    %v3167 = vmul.f32 %v3153, 1.442695
    %v3168 = vpow.pop %v3167
    %v3169 = vmul.f32 %v3154, 1.442695
    %v3170 = vpow.pop %v3169
    %v3171 = vsel %vm522, %v3156, 0.0
    %3172 = vadd.xlane.f32.xlu0 %v3171
    %v3173 = vpop.xlane.xlu0 %3172
    %v3174 = vsel %vm522, %v3158, 0.0
    %3175 = vadd.xlane.f32.xlu0 %v3174
    %v3176 = vpop.xlane.xlu0 %3175
    %v3177 = vsel %vm522, %v3160, 0.0
    %3178 = vadd.xlane.f32.xlu0 %v3177
    %v3179 = vpop.xlane.xlu0 %3178
    %v3180 = vsel %vm522, %v3162, 0.0
    %3181 = vadd.xlane.f32.xlu0 %v3180
    %v3182 = vpop.xlane.xlu0 %3181
    %v3183 = vsel %vm522, %v3164, 0.0
    %3184 = vadd.xlane.f32.xlu0 %v3183
    %v3185 = vpop.xlane.xlu0 %3184
    %v3186 = vsel %vm522, %v3166, 0.0
    %3187 = vadd.xlane.f32.xlu0 %v3186
    %v3188 = vpop.xlane.xlu0 %3187
    %v3189 = vsel %vm522, %v3168, 0.0
    %3190 = vadd.xlane.f32.xlu0 %v3189
    %v3191 = vpop.xlane.xlu0 %3190
    %v3192 = vsel %vm522, %v3170, 0.0
    %3193 = vadd.xlane.f32.xlu0 %v3192
    %v3194 = vpop.xlane.xlu0 %3193
    %v3195 = vpack.c.bf16 %v3156, %v3156
    %v3196 = vpack.c.bf16 %v3158, %v3158
    %v3197 = vpack.c.bf16 %v3160, %v3160
    %v3198 = vpack.c.bf16 %v3162, %v3162
    %v3199 = vpack.c.bf16 %v3164, %v3164
    %v3200 = vpack.c.bf16 %v3166, %v3166
    %v3201 = vpack.c.bf16 %v3168, %v3168
    %v3202 = vpack.c.bf16 %v3170, %v3170
    %v3203 = vpack.c.bf16 %v2966, %v2966
    %v3204 = vpack.c.bf16 %v3003, %v3003
    %v3205 = vpack.c.bf16 %v3006, %v3006
    %v3206 = vpack.c.bf16 %v3009, %v3009
    %v3209 = vunpack.c.l.b16 %v3195
    %v3210 = vunpack.c.l.b16 %v3196
    %v3211 = vpack.c.b16 %v3210, %v3209
    %v3213 = vsel %vm522, %v3211, 0
    %v3216 = vsel %vm763, %v3203, 0
    %3218 = vmatpush.bf16.msra.mxu0 0
    %3219 = vmatpush.bf16.msra.mxu0 0
    %3220 = vmatpush.bf16.msra.mxu0 0
    %3221 = vmatpush.bf16.msra.mxu0 0
    %3222 = vmatpush.bf16.msra.mxu0 0
    %3223 = vmatpush.bf16.msra.mxu0 0
    %3224 = vmatpush.bf16.msra.mxu0 0
    %3225 = vmatpush.bf16.msra.mxu0 %v3216
    %3226 = vmatmul.bf16.gmra.mxu0 %v3213
    %v3227 = vpop.f32.mrf.mxu0
    %v3228 = vadd.f32 0.0, %v3227
    %v3229 = vpop.f32.mrf.mxu0
    %v3230 = vadd.f32 0.0, %v3229
    %3231 = vdwg.mxu0
    %v3234 = vunpack.c.l.b16 %v3197
    %v3235 = vunpack.c.l.b16 %v3198
    %v3236 = vpack.c.b16 %v3235, %v3234
    %v3238 = vsel %vm522, %v3236, 0
    %v3241 = vsel %vm763, %v3204, 0
    %3243 = vmatpush.bf16.msra.mxu0 0
    %3244 = vmatpush.bf16.msra.mxu0 0
    %3245 = vmatpush.bf16.msra.mxu0 0
    %3246 = vmatpush.bf16.msra.mxu0 0
    %3247 = vmatpush.bf16.msra.mxu0 0
    %3248 = vmatpush.bf16.msra.mxu0 0
    %3249 = vmatpush.bf16.msra.mxu0 0
    %3250 = vmatpush.bf16.msra.mxu0 %v3241
    %3251 = vmatmul.bf16.gmra.mxu0 %v3238
    %v3252 = vpop.f32.mrf.mxu0
    %v3253 = vadd.f32 0.0, %v3252
    %v3254 = vpop.f32.mrf.mxu0
    %v3255 = vadd.f32 0.0, %v3254
    %3256 = vdwg.mxu0
    %v3259 = vunpack.c.l.b16 %v3199
    %v3260 = vunpack.c.l.b16 %v3200
    %v3261 = vpack.c.b16 %v3260, %v3259
    %v3263 = vsel %vm522, %v3261, 0
    %v3266 = vsel %vm763, %v3205, 0
    %3268 = vmatpush.bf16.msra.mxu0 0
    %3269 = vmatpush.bf16.msra.mxu0 0
    %3270 = vmatpush.bf16.msra.mxu0 0
    %3271 = vmatpush.bf16.msra.mxu0 0
    %3272 = vmatpush.bf16.msra.mxu0 0
    %3273 = vmatpush.bf16.msra.mxu0 0
    %3274 = vmatpush.bf16.msra.mxu0 0
    %3275 = vmatpush.bf16.msra.mxu0 %v3266
    %3276 = vmatmul.bf16.gmra.mxu0 %v3263
    %v3277 = vpop.f32.mrf.mxu0
    %v3278 = vadd.f32 0.0, %v3277
    %v3279 = vpop.f32.mrf.mxu0
    %v3280 = vadd.f32 0.0, %v3279
    %3281 = vdwg.mxu0
    %v3284 = vunpack.c.l.b16 %v3201
    %v3285 = vunpack.c.l.b16 %v3202
    %v3286 = vpack.c.b16 %v3285, %v3284
    %v3288 = vsel %vm522, %v3286, 0
    %v3291 = vsel %vm763, %v3206, 0
    %3293 = vmatpush.bf16.msra.mxu0 0
    %3294 = vmatpush.bf16.msra.mxu0 0
    %3295 = vmatpush.bf16.msra.mxu0 0
    %3296 = vmatpush.bf16.msra.mxu0 0
    %3297 = vmatpush.bf16.msra.mxu0 0
    %3298 = vmatpush.bf16.msra.mxu0 0
    %3299 = vmatpush.bf16.msra.mxu0 0
    %3300 = vmatpush.bf16.msra.mxu0 %v3291
    %3301 = vmatmul.bf16.gmra.mxu0 %v3288
    %v3302 = vpop.f32.mrf.mxu0
    %v3303 = vadd.f32 0.0, %v3302
    %v3304 = vpop.f32.mrf.mxu0
    %v3305 = vadd.f32 0.0, %v3304
    %3306 = vdwg.mxu0
    %v3307 = vrcp.pop %v3173
    %v3308 = vrcp.pop %v3176
    %v3309 = vrcp.pop %v3179
    %v3310 = vrcp.pop %v3182
    %v3311 = vrcp.pop %v3185
    %v3312 = vrcp.pop %v3188
    %v3313 = vrcp.pop %v3191
    %v3314 = vrcp.pop %v3194
    %v3315 = vmul.f32 %v3228, %v3307
    %v3316 = vmul.f32 %v3230, %v3308
    %v3317 = vmul.f32 %v3253, %v3309
    %v3318 = vmul.f32 %v3255, %v3310
    %v3319 = vmul.f32 %v3278, %v3311
    %v3320 = vmul.f32 %v3280, %v3312
    %v3321 = vmul.f32 %v3303, %v3313
    %v3322 = vmul.f32 %v3305, %v3314
    %v3323 = vpack.c.bf16 %v3316, %v3315
    %v3325 = vsel %vm522, %v3323, 0
    %v3328 = vsel %vm763, %v2847, 0
    %3330 = vmatpush.bf16.msra.mxu0 0
    %3331 = vmatpush.bf16.msra.mxu0 0
    %3332 = vmatpush.bf16.msra.mxu0 0
    %3333 = vmatpush.bf16.msra.mxu0 0
    %3334 = vmatpush.bf16.msra.mxu0 0
    %3335 = vmatpush.bf16.msra.mxu0 0
    %3336 = vmatpush.bf16.msra.mxu0 0
    %3337 = vmatpush.bf16.msra.mxu0 %v3328
    %3338 = vmatmul.bf16.gmra.mxu0 %v3325
    %v3339 = vpop.f32.mrf.mxu0
    %v3340 = vadd.f32 0.0, %v3339
    %v3341 = vpop.f32.mrf.mxu0
    %v3342 = vadd.f32 0.0, %v3341
    %3343 = vdwg.mxu0
    %v3344 = vadd.f32 %v1531, %v3340
    %v3345 = vadd.f32 %v1531, %v3342
    %v3346 = vpack.c.bf16 %v3318, %v3317
    %v3348 = vsel %vm522, %v3346, 0
    %v3351 = vsel %vm763, %v2848, 0
    %3353 = vmatpush.bf16.msra.mxu0 0
    %3354 = vmatpush.bf16.msra.mxu0 0
    %3355 = vmatpush.bf16.msra.mxu0 0
    %3356 = vmatpush.bf16.msra.mxu0 0
    %3357 = vmatpush.bf16.msra.mxu0 0
    %3358 = vmatpush.bf16.msra.mxu0 0
    %3359 = vmatpush.bf16.msra.mxu0 0
    %3360 = vmatpush.bf16.msra.mxu0 %v3351
    %3361 = vmatmul.bf16.gmra.mxu0 %v3348
    %v3362 = vpop.f32.mrf.mxu0
    %v3363 = vadd.f32 0.0, %v3362
    %v3364 = vpop.f32.mrf.mxu0
    %v3365 = vadd.f32 0.0, %v3364
    %3366 = vdwg.mxu0
    %v3367 = vadd.f32 %v3344, %v3363
    %v3368 = vadd.f32 %v3345, %v3365
    %v3369 = vpack.c.bf16 %v3320, %v3319
    %v3371 = vsel %vm522, %v3369, 0
    %v3374 = vsel %vm763, %v2849, 0
    %3376 = vmatpush.bf16.msra.mxu0 0
    %3377 = vmatpush.bf16.msra.mxu0 0
    %3378 = vmatpush.bf16.msra.mxu0 0
    %3379 = vmatpush.bf16.msra.mxu0 0
    %3380 = vmatpush.bf16.msra.mxu0 0
    %3381 = vmatpush.bf16.msra.mxu0 0
    %3382 = vmatpush.bf16.msra.mxu0 0
    %3383 = vmatpush.bf16.msra.mxu0 %v3374
    %3384 = vmatmul.bf16.gmra.mxu0 %v3371
    %v3385 = vpop.f32.mrf.mxu0
    %v3386 = vadd.f32 0.0, %v3385
    %v3387 = vpop.f32.mrf.mxu0
    %v3388 = vadd.f32 0.0, %v3387
    %3389 = vdwg.mxu0
    %v3390 = vadd.f32 %v3367, %v3386
    %v3391 = vadd.f32 %v3368, %v3388
    %v3392 = vpack.c.bf16 %v3322, %v3321
    %v3394 = vsel %vm522, %v3392, 0
    %v3397 = vsel %vm763, %v2850, 0
    %3399 = vmatpush.bf16.msra.mxu0 0
    %3400 = vmatpush.bf16.msra.mxu0 0
    %3401 = vmatpush.bf16.msra.mxu0 0
    %3402 = vmatpush.bf16.msra.mxu0 0
    %3403 = vmatpush.bf16.msra.mxu0 0
    %3404 = vmatpush.bf16.msra.mxu0 0
    %3405 = vmatpush.bf16.msra.mxu0 0
    %3406 = vmatpush.bf16.msra.mxu0 %v3397
    %3407 = vmatmul.bf16.gmra.mxu0 %v3394
    %v3408 = vpop.f32.mrf.mxu0
    %v3409 = vadd.f32 0.0, %v3408
    %v3410 = vpop.f32.mrf.mxu0
    %v3411 = vadd.f32 0.0, %v3410
    %3412 = vdwg.mxu0
    %v3413 = vadd.f32 %v3390, %v3409
    %v3414 = vadd.f32 %v3391, %v3411
    %v3417 = vrot.slane %v3413, 1
    %v3418 = vrot.slane %v3413, 2
    %v3419 = vrot.slane %v3413, 3
    %v3420 = vrot.slane %v3413, 4
    %v3421 = vrot.slane %v3413, 5
    %v3422 = vrot.slane %v3413, 6
    %v3423 = vrot.slane %v3413, 7
    %v3424 = vrot.slane %v3414, 1
    %v3425 = vrot.slane %v3414, 2
    %v3426 = vrot.slane %v3414, 3
    %v3427 = vrot.slane %v3414, 4
    %v3428 = vrot.slane %v3414, 5
    %v3429 = vrot.slane %v3414, 6
    %v3430 = vrot.slane %v3414, 7
    %v3447 = vadd.f32 %v1960, %v3413
    %v3448 = vadd.f32 %v1961, %v3417
    %v3449 = vadd.f32 %v1962, %v3418
    %v3450 = vadd.f32 %v1963, %v3419
    %v3451 = vadd.f32 %v1964, %v3420
    %v3452 = vadd.f32 %v1965, %v3421
    %v3453 = vadd.f32 %v1966, %v3422
    %v3454 = vadd.f32 %v1967, %v3423
    %v3455 = vadd.f32 %v1968, %v3414
    %v3456 = vadd.f32 %v1969, %v3424
    %v3457 = vadd.f32 %v1970, %v3425
    %v3458 = vadd.f32 %v1971, %v3426
    %v3459 = vadd.f32 %v1972, %v3427
    %v3460 = vadd.f32 %v1973, %v3428
    %v3461 = vadd.f32 %v1974, %v3429
    %v3462 = vadd.f32 %v1975, %v3430
    %v3479 = vrot.slane %v3448, 7
    %v3480 = vsel %vm190, %v3479, %v3447
    %v3481 = vrot.slane %v3449, 6
    %v3482 = vsel %vm193, %v3481, %v3480
    %v3483 = vrot.slane %v3450, 5
    %v3484 = vsel %vm196, %v3483, %v3482
    %v3485 = vrot.slane %v3451, 4
    %v3486 = vsel %vm199, %v3485, %v3484
    %v3487 = vrot.slane %v3452, 3
    %v3488 = vsel %vm202, %v3487, %v3486
    %v3489 = vrot.slane %v3453, 2
    %v3490 = vsel %vm205, %v3489, %v3488
    %v3491 = vrot.slane %v3454, 1
    %v3492 = vsel %vm208, %v3491, %v3490
    %v3493 = vrot.slane %v3456, 7
    %v3494 = vsel %vm190, %v3493, %v3455
    %v3495 = vrot.slane %v3457, 6
    %v3496 = vsel %vm193, %v3495, %v3494
    %v3497 = vrot.slane %v3458, 5
    %v3498 = vsel %vm196, %v3497, %v3496
    %v3499 = vrot.slane %v3459, 4
    %v3500 = vsel %vm199, %v3499, %v3498
    %v3501 = vrot.slane %v3460, 3
    %v3502 = vsel %vm202, %v3501, %v3500
    %v3503 = vrot.slane %v3461, 2
    %v3504 = vsel %vm205, %v3503, %v3502
    %v3505 = vrot.slane %v3462, 1
    %v3506 = vsel %vm208, %v3505, %v3504
    %v3509 = vsel %vm223, %v3492, 0.0
    %3510 = vadd.xlane.f32.xlu0 %v3509
    %v3511 = vpop.xlane.xlu0 %3510
    %v3512 = vsel %vm223, %v3506, 0.0
    %3513 = vadd.xlane.f32.xlu0 %v3512
    %v3514 = vpop.xlane.xlu0 %3513
    %v3515 = vmul.f32 %v3511, %v901
    %v3516 = vmul.f32 %v3514, %v901
    %v3519 = vrot.slane %v3515, 1
    %v3520 = vrot.slane %v3515, 2
    %v3521 = vrot.slane %v3515, 3
    %v3522 = vrot.slane %v3515, 4
    %v3523 = vrot.slane %v3515, 5
    %v3524 = vrot.slane %v3515, 6
    %v3525 = vrot.slane %v3515, 7
    %v3526 = vrot.slane %v3516, 1
    %v3527 = vrot.slane %v3516, 2
    %v3528 = vrot.slane %v3516, 3
    %v3529 = vrot.slane %v3516, 4
    %v3530 = vrot.slane %v3516, 5
    %v3531 = vrot.slane %v3516, 6
    %v3532 = vrot.slane %v3516, 7
    %v3549 = vsub.f32 %v3447, %v3515
    %v3550 = vsub.f32 %v3448, %v3519
    %v3551 = vsub.f32 %v3449, %v3520
    %v3552 = vsub.f32 %v3450, %v3521
    %v3553 = vsub.f32 %v3451, %v3522
    %v3554 = vsub.f32 %v3452, %v3523
    %v3555 = vsub.f32 %v3453, %v3524
    %v3556 = vsub.f32 %v3454, %v3525
    %v3557 = vsub.f32 %v3455, %v3516
    %v3558 = vsub.f32 %v3456, %v3526
    %v3559 = vsub.f32 %v3457, %v3527
    %v3560 = vsub.f32 %v3458, %v3528
    %v3561 = vsub.f32 %v3459, %v3529
    %v3562 = vsub.f32 %v3460, %v3530
    %v3563 = vsub.f32 %v3461, %v3531
    %v3564 = vsub.f32 %v3462, %v3532
    %v3565 = vmul.f32 %v3549, %v3549
    %v3566 = vmul.f32 %v3550, %v3550
    %v3567 = vmul.f32 %v3551, %v3551
    %v3568 = vmul.f32 %v3552, %v3552
    %v3569 = vmul.f32 %v3553, %v3553
    %v3570 = vmul.f32 %v3554, %v3554
    %v3571 = vmul.f32 %v3555, %v3555
    %v3572 = vmul.f32 %v3556, %v3556
    %v3573 = vmul.f32 %v3557, %v3557
    %v3574 = vmul.f32 %v3558, %v3558
    %v3575 = vmul.f32 %v3559, %v3559
    %v3576 = vmul.f32 %v3560, %v3560
    %v3577 = vmul.f32 %v3561, %v3561
    %v3578 = vmul.f32 %v3562, %v3562
    %v3579 = vmul.f32 %v3563, %v3563
    %v3580 = vmul.f32 %v3564, %v3564
    %v3597 = vrot.slane %v3566, 7
    %v3598 = vsel %vm190, %v3597, %v3565
    %v3599 = vrot.slane %v3567, 6
    %v3600 = vsel %vm193, %v3599, %v3598
    %v3601 = vrot.slane %v3568, 5
    %v3602 = vsel %vm196, %v3601, %v3600
    %v3603 = vrot.slane %v3569, 4
    %v3604 = vsel %vm199, %v3603, %v3602
    %v3605 = vrot.slane %v3570, 3
    %v3606 = vsel %vm202, %v3605, %v3604
    %v3607 = vrot.slane %v3571, 2
    %v3608 = vsel %vm205, %v3607, %v3606
    %v3609 = vrot.slane %v3572, 1
    %v3610 = vsel %vm208, %v3609, %v3608
    %v3611 = vrot.slane %v3574, 7
    %v3612 = vsel %vm190, %v3611, %v3573
    %v3613 = vrot.slane %v3575, 6
    %v3614 = vsel %vm193, %v3613, %v3612
    %v3615 = vrot.slane %v3576, 5
    %v3616 = vsel %vm196, %v3615, %v3614
    %v3617 = vrot.slane %v3577, 4
    %v3618 = vsel %vm199, %v3617, %v3616
    %v3619 = vrot.slane %v3578, 3
    %v3620 = vsel %vm202, %v3619, %v3618
    %v3621 = vrot.slane %v3579, 2
    %v3622 = vsel %vm205, %v3621, %v3620
    %v3623 = vrot.slane %v3580, 1
    %v3624 = vsel %vm208, %v3623, %v3622
    %v3627 = vsel %vm223, %v3610, 0.0
    %3628 = vadd.xlane.f32.xlu0 %v3627
    %v3629 = vpop.xlane.xlu0 %3628
    %v3630 = vsel %vm223, %v3624, 0.0
    %3631 = vadd.xlane.f32.xlu0 %v3630
    %v3632 = vpop.xlane.xlu0 %3631
    %v3633 = vmul.f32 %v3629, %v901
    %v3634 = vmul.f32 %v3632, %v901
    %v3635 = vadd.f32 %v3633, 1e-05
    %v3636 = vadd.f32 %v3634, 1e-05
    %v3637 = vrsqrt.pop %v3635
    %v3638 = vmul.f32 %v3637, %v3635
    %v3639 = vmul.f32 %v3638, %v3637
    %v3640 = vmul.f32 0.5, %v3639
    %v3641 = vsub.f32 1.5, %v3640
    %v3642 = vmul.f32 %v3637, %v3641
    %vm3643 = vweird.f32 %v3635
    %vm3644 = vweird.f32 %v3637
    %vm3645 = vmor %vm3643, %vm3644
    %v3646 = vsel %vm3645, %v3637, %v3642
    %v3647 = vrsqrt.pop %v3636
    %v3648 = vmul.f32 %v3647, %v3636
    %v3649 = vmul.f32 %v3648, %v3647
    %v3650 = vmul.f32 0.5, %v3649
    %v3651 = vsub.f32 1.5, %v3650
    %v3652 = vmul.f32 %v3647, %v3651
    %vm3653 = vweird.f32 %v3636
    %vm3654 = vweird.f32 %v3647
    %vm3655 = vmor %vm3653, %vm3654
    %v3656 = vsel %vm3655, %v3647, %v3652
    %v3659 = vrot.slane %v3646, 1
    %v3660 = vrot.slane %v3646, 2
    %v3661 = vrot.slane %v3646, 3
    %v3662 = vrot.slane %v3646, 4
    %v3663 = vrot.slane %v3646, 5
    %v3664 = vrot.slane %v3646, 6
    %v3665 = vrot.slane %v3646, 7
    %v3666 = vrot.slane %v3656, 1
    %v3667 = vrot.slane %v3656, 2
    %v3668 = vrot.slane %v3656, 3
    %v3669 = vrot.slane %v3656, 4
    %v3670 = vrot.slane %v3656, 5
    %v3671 = vrot.slane %v3656, 6
    %v3672 = vrot.slane %v3656, 7
    %v3689 = vmul.f32 %v3549, %v3646
    %v3690 = vmul.f32 %v3550, %v3659
    %v3691 = vmul.f32 %v3551, %v3660
    %v3692 = vmul.f32 %v3552, %v3661
    %v3693 = vmul.f32 %v3553, %v3662
    %v3694 = vmul.f32 %v3554, %v3663
    %v3695 = vmul.f32 %v3555, %v3664
    %v3696 = vmul.f32 %v3556, %v3665
    %v3697 = vmul.f32 %v3557, %v3656
    %v3698 = vmul.f32 %v3558, %v3666
    %v3699 = vmul.f32 %v3559, %v3667
    %v3700 = vmul.f32 %v3560, %v3668
    %v3701 = vmul.f32 %v3561, %v3669
    %v3702 = vmul.f32 %v3562, %v3670
    %v3703 = vmul.f32 %v3563, %v3671
    %v3704 = vmul.f32 %v3564, %v3672
    %v3705 = vmul.f32 %v3689, %v1893
    %v3706 = vmul.f32 %v3690, %v1893
    %v3707 = vmul.f32 %v3691, %v1893
    %v3708 = vmul.f32 %v3692, %v1893
    %v3709 = vmul.f32 %v3693, %v1893
    %v3710 = vmul.f32 %v3694, %v1893
    %v3711 = vmul.f32 %v3695, %v1893
    %v3712 = vmul.f32 %v3696, %v1893
    %v3713 = vmul.f32 %v3697, %v1893
    %v3714 = vmul.f32 %v3698, %v1893
    %v3715 = vmul.f32 %v3699, %v1893
    %v3716 = vmul.f32 %v3700, %v1893
    %v3717 = vmul.f32 %v3701, %v1893
    %v3718 = vmul.f32 %v3702, %v1893
    %v3719 = vmul.f32 %v3703, %v1893
    %v3720 = vmul.f32 %v3704, %v1893
    %v3721 = vadd.f32 %v3705, %v1910
    %v3722 = vadd.f32 %v3706, %v1910
    %v3723 = vadd.f32 %v3707, %v1910
    %v3724 = vadd.f32 %v3708, %v1910
    %v3725 = vadd.f32 %v3709, %v1910
    %v3726 = vadd.f32 %v3710, %v1910
    %v3727 = vadd.f32 %v3711, %v1910
    %v3728 = vadd.f32 %v3712, %v1910
    %v3729 = vadd.f32 %v3713, %v1910
    %v3730 = vadd.f32 %v3714, %v1910
    %v3731 = vadd.f32 %v3715, %v1910
    %v3732 = vadd.f32 %v3716, %v1910
    %v3733 = vadd.f32 %v3717, %v1910
    %v3734 = vadd.f32 %v3718, %v1910
    %v3735 = vadd.f32 %v3719, %v1910
    %v3736 = vadd.f32 %v3720, %v1910
    %3737 = vst.msk [vmem:[#allocation11 + $0x1] sm:$0x1] %vm1927, %v2827
    %3738 = vst.msk [vmem:[#allocation11 + $0x3] sm:$0x1] %vm1927, %v2828
    %3739 = vst.msk [vmem:[#allocation11 + $0x5] sm:$0x1] %vm1927, %v2829
    %3740 = vst.msk [vmem:[#allocation11 + $0x7] sm:$0x1] %vm1927, %v2830
    %3741 = vst.msk [vmem:[#allocation11 + $0x9] sm:$0x1] %vm1927, %v2831
    %3742 = vst.msk [vmem:[#allocation11 + $0xb] sm:$0x1] %vm1927, %v2832
    %3743 = vst.msk [vmem:[#allocation11 + $0xd] sm:$0x1] %vm1927, %v2833
    %3744 = vst.msk [vmem:[#allocation11 + $0xf] sm:$0x1] %vm1927, %v2834
    %3745 = vst.msk [vmem:[#allocation12 + $0x1] sm:$0x1] %vm1927, %v3721
    %3746 = vst.msk [vmem:[#allocation12 + $0x3] sm:$0x1] %vm1927, %v3722
    %3747 = vst.msk [vmem:[#allocation12 + $0x5] sm:$0x1] %vm1927, %v3723
    %3748 = vst.msk [vmem:[#allocation12 + $0x7] sm:$0x1] %vm1927, %v3724
    %3749 = vst.msk [vmem:[#allocation12 + $0x9] sm:$0x1] %vm1927, %v3725
    %3750 = vst.msk [vmem:[#allocation12 + $0xb] sm:$0x1] %vm1927, %v3726
    %3751 = vst.msk [vmem:[#allocation12 + $0xd] sm:$0x1] %vm1927, %v3727
    %3752 = vst.msk [vmem:[#allocation12 + $0xf] sm:$0x1] %vm1927, %v3728
    %3753 = vst.msk [vmem:[#allocation12 + $0x11] sm:$0x1] %vm1927, %v3729
    %3754 = vst.msk [vmem:[#allocation12 + $0x13] sm:$0x1] %vm1927, %v3730
    %3755 = vst.msk [vmem:[#allocation12 + $0x15] sm:$0x1] %vm1927, %v3731
    %3756 = vst.msk [vmem:[#allocation12 + $0x17] sm:$0x1] %vm1927, %v3732
    %3757 = vst.msk [vmem:[#allocation12 + $0x19] sm:$0x1] %vm1927, %v3733
    %3758 = vst.msk [vmem:[#allocation12 + $0x1b] sm:$0x1] %vm1927, %v3734
    %3759 = vst.msk [vmem:[#allocation12 + $0x1d] sm:$0x1] %vm1927, %v3735
    %3760 = vst.msk [vmem:[#allocation12 + $0x1f] sm:$0x1] %vm1927, %v3736
    // Predicated region
    $region42: #{bidirectional_cross_attention_forward.1} parent=1 // pred_check
      _
    $region43: #{bidirectional_cross_attention_forward.1} parent=1 // pred_check_branch
      %3762 = sbr.rel (0) target = $region45
    $region44: #{bidirectional_cross_attention_forward.1} parent=1 // pred_region
      %3764 = vsyncadd [#allocation4], 0
      %s3765 = sshll.u32 [#allocation11], 4
      %s3766 = int_to_ptr.vmem [resolvable:$true] %s3765
      %s3767 = sshll.u32 %s5, 4
      %s3768 = int_to_ptr.hbm [resolvable:$true] %s3767
      %3773 = dma.vmem_to_hbm [thread:$0]  %s3766, 256, %s3768, [#allocation4], 32, 32, 2
    $region45: #{bidirectional_cross_attention_forward.1} parent=1 // pred_fallthru
      _
    // Predicated region
    $region46: #{bidirectional_cross_attention_forward.1} parent=1 // pred_check
      _
    $region47: #{bidirectional_cross_attention_forward.1} parent=1 // pred_check_branch
      %3775 = sbr.rel (0) target = $region49
    $region48: #{bidirectional_cross_attention_forward.1} parent=1 // pred_region
      %3777 = vsyncadd [#allocation13], 0
      %s3778 = sshll.u32 [#allocation12], 4
      %s3779 = int_to_ptr.vmem [resolvable:$true] %s3778
      %s3780 = sshll.u32 %s6, 4
      %s3781 = int_to_ptr.hbm [resolvable:$true] %s3780
      %3786 = dma.vmem_to_hbm [thread:$0]  %s3779, 512, %s3781, [#allocation13], 32, 32, 2
    $region49: #{bidirectional_cross_attention_forward.1} parent=1 // pred_fallthru
      _
    // Predicated region
    $region50: #{bidirectional_cross_attention_forward.1} parent=1 // pred_check
      _
    $region51: #{bidirectional_cross_attention_forward.1} parent=1 // pred_check_branch
      %3788 = sbr.rel (0) target = $region53
    $region52: #{bidirectional_cross_attention_forward.1} parent=1 // pred_region
      %3790 = dma.done [#allocation4], 256
    $region53: #{bidirectional_cross_attention_forward.1} parent=1 // pred_fallthru
      _
    // Predicated region
    $region54: #{bidirectional_cross_attention_forward.1} parent=1 // pred_check
      _
    $region55: #{bidirectional_cross_attention_forward.1} parent=1 // pred_check_branch
      %3792 = sbr.rel (0) target = $region57
    $region56: #{bidirectional_cross_attention_forward.1} parent=1 // pred_region
      %3794 = dma.done [#allocation13], 512
    $region57: #{bidirectional_cross_attention_forward.1} parent=1 // pred_fallthru
      _
    %3795 = vsyncpa [#allocation3], 1
    %3796 = vsyncpa [#allocation6], 1
    %3797 = vsyncpa [#allocation9], 1
    %3798 = vsyncpa [#allocation4], 1
    %3799 = vsyncpa [#allocation13], 1

</llo_original>
